<compile_context>
chip_gen: v7x
topology: tpu7x:2x2x1
jax: 0.10.0
libtpu: 0.0.40
codegen_flags: <defaults>
</compile_context>

<pallas_src>
from collections import namedtuple
import math

import jax
import jax.numpy as jnp
from jax.experimental import pallas as pl
from jax.experimental.pallas import tpu as pltpu


# ----------------------------------------------------------------------------
# Helpers
# ----------------------------------------------------------------------------
def _round_up(x, m):
    return ((x + m - 1) // m) * m


# ----------------------------------------------------------------------------
# Pallas kernels
# ----------------------------------------------------------------------------
def _make_gemm_kernel(apply_relu):
    """Tiled GEMM (bf16 in, f32 acc) with bias (+ ReLU) fused into the epilogue.

    grid = (M_tiles, N_tiles, K_tiles); K is the innermost reduction axis.
    """
    def kernel(a_ref, b_ref, bias_ref, o_ref, acc_ref):
        @pl.when(pl.program_id(2) == 0)
        def _():
            acc_ref[...] = jnp.zeros_like(acc_ref)

        acc_ref[...] += jnp.dot(a_ref[...], b_ref[...],
                                preferred_element_type=jnp.float32)

        @pl.when(pl.program_id(2) == pl.num_programs(2) - 1)
        def _():
            y = acc_ref[...] + bias_ref[...]
            if apply_relu:
                y = jnp.maximum(y, 0.0)
            o_ref[...] = y.astype(o_ref.dtype)

    return kernel


def _max3_kernel(x0_ref, x1_ref, x2_ref, o_ref):
    o_ref[...] = jnp.maximum(jnp.maximum(x0_ref[...], x1_ref[...]), x2_ref[...])


# ----------------------------------------------------------------------------
# GEMM wrapper (conv bias + ReLU fused)
# ----------------------------------------------------------------------------
def fused_gemm_bias_relu(a, w_padded, bias_padded, apply_relu=True):
    """a: (M, K) bf16/f32; w_padded: (Kp, Np) bf16; bias_padded: (1, Np) f32."""
    M, K = a.shape
    Kp, Np = w_padded.shape
    assert Kp % 128 == 0 and Np % 128 == 0 and Kp >= K

    # 256-wide N/K tiles when divisible (feeds the 256-lane MXU on v6e/v7x),
    # 128 otherwise (always divides the 128-padded dims; matches v5e MXU).
    tn = 256 if Np % 256 == 0 else 128
    tk = 256 if Kp % 256 == 0 else 128

    # Tile M so accumulator / output blocks stay small and fit v7x VMEM.
    m8 = _round_up(max(M, 8), 8)
    if m8 > 256:
        tm, Mp = 256, _round_up(M, 256)
    else:
        tm, Mp = m8, m8

    a_p = jnp.pad(a.astype(jnp.bfloat16), ((0, Mp - M), (0, Kp - K)))

    out = pl.pallas_call(
        _make_gemm_kernel(apply_relu),
        out_shape=jax.ShapeDtypeStruct((Mp, Np), jnp.float32),
        grid_spec=pltpu.PrefetchScalarGridSpec(
            num_scalar_prefetch=0,
            grid=(Mp // tm, Np // tn, Kp // tk),
            in_specs=[
                pl.BlockSpec((tm, tk), lambda m, n, k: (m, k)),
                pl.BlockSpec((tk, tn), lambda m, n, k: (k, n)),
                pl.BlockSpec((1, tn), lambda m, n, k: (0, n)),
            ],
            out_specs=pl.BlockSpec((tm, tn), lambda m, n, k: (m, n)),
            scratch_shapes=[pltpu.VMEM((tm, tn), jnp.float32)],
        ),
        compiler_params=pltpu.CompilerParams(
            dimension_semantics=("parallel", "parallel", "arbitrary")),
    )(a_p, w_padded, bias_padded)
    return out[:M, :]


# ----------------------------------------------------------------------------
# Elementwise 3-way max (used twice per pool: W pass then H pass)
# ----------------------------------------------------------------------------
def _elementwise_max3(v0, v1, v2):
    orig_shape = v0.shape
    total = v0.size
    # Lane-dense layout: fold everything into 128 lanes when possible.
    C = 128 if total % 128 == 0 else orig_shape[-1]
    rows = total // C
    a0 = v0.reshape(rows, C)
    a1 = v1.reshape(rows, C)
    a2 = v2.reshape(rows, C)

    br = min(1024, _round_up(rows, 8))
    rows_p = _round_up(rows, br)
    if rows_p != rows:
        padw = ((0, rows_p - rows), (0, 0))
        a0, a1, a2 = jnp.pad(a0, padw), jnp.pad(a1, padw), jnp.pad(a2, padw)

    out = pl.pallas_call(
        _max3_kernel,
        out_shape=jax.ShapeDtypeStruct((rows_p, C), v0.dtype),
        grid_spec=pltpu.PrefetchScalarGridSpec(
            num_scalar_prefetch=0,
            grid=(rows_p // br,),
            in_specs=[pl.BlockSpec((br, C), lambda r: (r, 0))] * 3,
            out_specs=pl.BlockSpec((br, C), lambda r: (r, 0)),
        ),
        compiler_params=pltpu.CompilerParams(dimension_semantics=("parallel",)),
    )(a0, a1, a2)
    return out[:rows].reshape(orig_shape)


def maxpool3x3s2(x):
    """MaxPool2d(kernel=3, stride=2, padding=0) — PyTorch/AlexNet semantics.

    Separable: 3-wide max along W (stride 2), then 3-wide max along H (stride 2).
    """
    N, H, W, C = x.shape
    Ho = (H - 3) // 2 + 1
    Wo = (W - 3) // 2 + 1
    cols = [x[:, :, j:j + 2 * Wo:2, :] for j in range(3)]     # each (N, H, Wo, C)
    m1 = _elementwise_max3(*cols)
    rows = [m1[:, i:i + 2 * Ho:2, :, :] for i in range(3)]    # each (N, Ho, Wo, C)
    return _elementwise_max3(*rows)


# ----------------------------------------------------------------------------
# Convolution (im2col + fused GEMM)
# ----------------------------------------------------------------------------
def conv_bias_relu(x, weights, cfg):
    """x: (N,H,W,Cin) f32; weights: pre-padded bf16 GEMM matrix + f32 bias."""
    N, H, W, Cin = x.shape
    assert Cin == cfg.cin, (Cin, cfg)
    k, s, pad = cfg.k, cfg.stride, cfg.pad

    xb = jnp.pad(x.astype(jnp.bfloat16),
                 ((0, 0), (pad, pad), (pad, pad), (0, 0)))
    Ho = (H + 2 * pad - k) // s + 1
    Wo = (W + 2 * pad - k) // s + 1
    # TODO(synk): an implicit-GEMM kernel (tap grid axis / halo tiles) would avoid
    #             materializing this k*k-expanded patch buffer at large resolutions.
    patches = [xb[:, i:i + s * Ho:s, j:j + s * Wo:s, :]
               for i in range(k) for j in range(k)]
    a = jnp.concatenate(patches, axis=-1).reshape(N * Ho * Wo, k * k * Cin)

    y = fused_gemm_bias_relu(a, weights['w'], weights['bias'], apply_relu=True)
    return y[:, :cfg.cout].reshape(N, Ho, Wo, cfg.cout)


# ----------------------------------------------------------------------------
# Parameters (deterministic synthetic values; AlexNet-features shapes)
# ----------------------------------------------------------------------------
ConvCfg = namedtuple('ConvCfg', ['name', 'cin', 'cout', 'k', 'stride', 'pad'])
ALEXNET_CONVS = (
    ConvCfg('conv1',   3,  64, 11, 4, 2),
    ConvCfg('conv2',  64, 192,  5, 1, 2),
    ConvCfg('conv3', 192, 384,  3, 1, 1),
    ConvCfg('conv4', 384, 256,  3, 1, 1),
    ConvCfg('conv5', 256, 256,  3, 1, 1),
)


def _init_conv(key, cfg):
    kw_key, kb_key = jax.random.split(key)
    fan_in = cfg.cin * cfg.k * cfg.k
    w = (jax.random.normal(kw_key, (cfg.cout, cfg.cin, cfg.k, cfg.k), jnp.float32)
         * (1.0 / math.sqrt(fan_in)))                       # PyTorch OIHW layout
    b = 0.05 * jax.random.normal(kb_key, (cfg.cout,), jnp.float32)

    # Fold into GEMM layout once at init: (K, Cout), zero-padded to 128-multiples,
    # bf16 weights + f32 bias row (lane-dense, unmasked stores).
    K = fan_in
    Kp = _round_up(K, 128)
    Np = _round_up(cfg.cout, 128)
    wm = jnp.transpose(w, (2, 3, 1, 0)).reshape(K, cfg.cout)
    wm = jnp.pad(wm, ((0, Kp - K), (0, Np - cfg.cout))).astype(jnp.bfloat16)
    bias = jnp.pad(b, (0, Np - cfg.cout)).reshape(1, Np).astype(jnp.float32)
    return {'w': wm, 'bias': bias, 'w_ref': w, 'b_ref': b}


def init_alexnet_params(key):
    keys = jax.random.split(key, len(ALEXNET_CONVS))
    return {cfg.name: _init_conv(k, cfg) for k, cfg in zip(keys, ALEXNET_CONVS)}


# ----------------------------------------------------------------------------
# Forward pass (matches the PyTorch slice structure)
# ----------------------------------------------------------------------------
AlexnetOutputs = namedtuple('AlexnetOutputs',
                            ['relu1', 'relu2', 'relu3', 'relu4', 'relu5'])


def alexnet_forward(params, x_nchw):
    cfg = {c.name: c for c in ALEXNET_CONVS}
    x = jnp.transpose(x_nchw.astype(jnp.float32), (0, 2, 3, 1))   # NCHW -> NHWC

    h = conv_bias_relu(x, params['conv1'], cfg['conv1']); h_relu1 = h   # slice1
    h = maxpool3x3s2(h)
    h = conv_bias_relu(h, params['conv2'], cfg['conv2']); h_relu2 = h   # slice2
    h = maxpool3x3s2(h)
    h = conv_bias_relu(h, params['conv3'], cfg['conv3']); h_relu3 = h   # slice3
    h = conv_bias_relu(h, params['conv4'], cfg['conv4']); h_relu4 = h   # slice4
    h = conv_bias_relu(h, params['conv5'], cfg['conv5']); h_relu5 = h   # slice5

    to_nchw = lambda t: jnp.transpose(t, (0, 3, 1, 2))
    return AlexnetOutputs(to_nchw(h_relu1), to_nchw(h_relu2), to_nchw(h_relu3),
                          to_nchw(h_relu4), to_nchw(h_relu5))


# ----------------------------------------------------------------------------
# Pure-JAX reference (f32) for a loose numerical sanity check
# ----------------------------------------------------------------------------
def _reference_forward(params, x_nchw):
    cfg = {c.name: c for c in ALEXNET_CONVS}
    x = jnp.transpose(x_nchw.astype(jnp.float32), (0, 2, 3, 1))

    def conv(h, name):
        c = cfg[name]
        w = jnp.transpose(params[name]['w_ref'], (2, 3, 1, 0))    # OIHW -> HWIO
        y = jax.lax.conv_general_dilated(
            h, w, window_strides=(c.stride, c.stride),
            padding=[(c.pad, c.pad), (c.pad, c.pad)],
            dimension_numbers=('NHWC', 'HWIO', 'NHWC'))
        return jnp.maximum(y + params[name]['b_ref'].reshape(1, 1, 1, -1), 0.0)

    def pool(h):
        return jax.lax.reduce_window(h, -jnp.inf, jax.lax.max,
                                     (1, 3, 3, 1), (1, 2, 2, 1), 'VALID')

    h = conv(x, 'conv1'); r1 = h
    h = conv(pool(h), 'conv2'); r2 = h
    h = conv(pool(h), 'conv3'); r3 = h
    h = conv(h, 'conv4'); r4 = h
    h = conv(h, 'conv5'); r5 = h
    to_nchw = lambda t: jnp.transpose(t, (0, 3, 1, 2))
    return AlexnetOutputs(to_nchw(r1), to_nchw(r2), to_nchw(r3),
                          to_nchw(r4), to_nchw(r5))


# ----------------------------------------------------------------------------
if __name__ == "__main__":
    key = jax.random.PRNGKey(0)
    k_x, k_p = jax.random.split(key)
    x = jax.random.normal(k_x, (2, 3, 64, 64), jnp.float32)   # NCHW, like PyTorch
    params = init_alexnet_params(k_p)

    outs = jax.jit(alexnet_forward)(params, x)
    for o in outs:
        jax.block_until_ready(o)

    expected = {
        'relu1': (2, 64, 15, 15),
        'relu2': (2, 192, 7, 7),
        'relu3': (2, 384, 3, 3),
        'relu4': (2, 256, 3, 3),
        'relu5': (2, 256, 3, 3),
    }
    for name, shape in expected.items():
        got = getattr(outs, name).shape
        assert got == shape, (name, got, shape)

    # Loose numerical check vs f32 XLA reference (kernel path uses bf16 MXU inputs).
    ref = _reference_forward(params, x)
    for name in AlexnetOutputs._fields:
        a = getattr(outs, name)
        b = getattr(ref, name)
        err = float(jnp.max(jnp.abs(a - b)))
        scale = float(jnp.max(jnp.abs(b)))
        assert err <= 0.1 * scale + 0.1, (name, err, scale)

    print("KERNEL_OK")
</pallas_src>

<mosaic_0001>
module attributes {stable_mosaic.version = 11 : i64} {
  func.func @kernel(%arg0: i32, %arg1: i32, %arg2: i32, %arg3: memref<256x128xbf16, #tpu.memory_space<vmem>>, %arg4: memref<128x128xbf16, #tpu.memory_space<vmem>>, %arg5: memref<1x128xf32, #tpu.memory_space<vmem>>, %arg6: memref<256x128xf32, #tpu.memory_space<vmem>>, %arg7: memref<256x128xf32, #tpu.memory_space<vmem>>) attributes {dimension_semantics = [#tpu.dimension_semantics<parallel>, #tpu.dimension_semantics<parallel>, #tpu.dimension_semantics<arbitrary>], iteration_bounds = array<i64: 2, 1, 3>, scalar_prefetch = 0 : i64, scratch_operands = 1 : i64, tpu.core_type = #tpu.core_type<tc>, window_params = [{transform_indices = @transform_0, window_bounds = array<i64: 256, 128>}, {transform_indices = @transform_1, window_bounds = array<i64: 128, 128>}, {transform_indices = @transform_2, window_bounds = array<i64: 1, 128>}, {transform_indices = @transform_3, window_bounds = array<i64: 256, 128>}]} {
    %c0_i32 = arith.constant 0 : i32
    %0 = arith.cmpi eq, %arg2, %c0_i32 : i32
    %1 = arith.extui %0 : i1 to i32
    %c0_i32_0 = arith.constant 0 : i32
    %2 = arith.cmpi ne, %1, %c0_i32_0 : i32
    scf.if %2 {
      %cst_9 = arith.constant 0.000000e+00 : f32
      %12 = vector.broadcast %cst_9 : f32 to vector<256x128xf32>
      %c0_10 = arith.constant 0 : index
      %c0_11 = arith.constant 0 : index
      %13 = vector.load %arg7[%c0_10, %c0_11] : memref<256x128xf32, #tpu.memory_space<vmem>>, vector<256x128xf32>
      tpu.vector_store %arg7[%c0_10, %c0_11], %12 {strides = array<i32>} : memref<256x128xf32, #tpu.memory_space<vmem>>, vector<256x128xf32>,
    } else {
    }
    %c0 = arith.constant 0 : index
    %c0_1 = arith.constant 0 : index
    %3 = vector.load %arg7[%c0, %c0_1] : memref<256x128xf32, #tpu.memory_space<vmem>>, vector<256x128xf32>
    %c0_2 = arith.constant 0 : index
    %c0_3 = arith.constant 0 : index
    %4 = vector.load %arg3[%c0_2, %c0_3] : memref<256x128xbf16, #tpu.memory_space<vmem>>, vector<256x128xbf16>
    %c0_4 = arith.constant 0 : index
    %c0_5 = arith.constant 0 : index
    %5 = vector.load %arg4[%c0_4, %c0_5] : memref<128x128xbf16, #tpu.memory_space<vmem>>, vector<128x128xbf16>
    %cst = arith.constant dense<0.000000e+00> : vector<256x128xf32>
    %6 = tpu.matmul %4, %5, %cst {dimension_numbers = #tpu.dot_dimension_numbers<[1], [0], [0], [1], [0, 0, 1, 1], [], []>} : vector<256x128xbf16>, vector<128x128xbf16>, vector<256x128xf32> -> vector<256x128xf32>
    %7 = arith.addf %3, %6 : vector<256x128xf32>
    %c0_6 = arith.constant 0 : index
    %c0_7 = arith.constant 0 : index
    %8 = vector.load %arg7[%c0_6, %c0_7] : memref<256x128xf32, #tpu.memory_space<vmem>>, vector<256x128xf32>
    tpu.vector_store %arg7[%c0_6, %c0_7], %7 {strides = array<i32>} : memref<256x128xf32, #tpu.memory_space<vmem>>, vector<256x128xf32>,
    %c2_i32 = arith.constant 2 : i32
    %9 = arith.cmpi eq, %arg2, %c2_i32 : i32
    %10 = arith.extui %9 : i1 to i32
    %c0_i32_8 = arith.constant 0 : i32
    %11 = arith.cmpi ne, %10, %c0_i32_8 : i32
    scf.if %11 {
      %c0_9 = arith.constant 0 : index
      %c0_10 = arith.constant 0 : index
      %12 = vector.load %arg7[%c0_9, %c0_10] : memref<256x128xf32, #tpu.memory_space<vmem>>, vector<256x128xf32>
      %c0_11 = arith.constant 0 : index
      %c0_12 = arith.constant 0 : index
      %13 = vector.load %arg5[%c0_11, %c0_12] : memref<1x128xf32, #tpu.memory_space<vmem>>, vector<1x128xf32>
      %14 = vector.broadcast %13 : vector<1x128xf32> to vector<256x128xf32>
      %15 = arith.addf %12, %14 : vector<256x128xf32>
      %cst_13 = arith.constant 0.000000e+00 : f32
      %16 = vector.broadcast %cst_13 : f32 to vector<256x128xf32>
      %17 = arith.maximumf %15, %16 : vector<256x128xf32>
      %c0_14 = arith.constant 0 : index
      %c0_15 = arith.constant 0 : index
      %18 = vector.load %arg6[%c0_14, %c0_15] : memref<256x128xf32, #tpu.memory_space<vmem>>, vector<256x128xf32>
      tpu.vector_store %arg6[%c0_14, %c0_15], %17 {strides = array<i32>} : memref<256x128xf32, #tpu.memory_space<vmem>>, vector<256x128xf32>,
    } else {
    }
    return
  }
  func.func @transform_0(%arg0: i32, %arg1: i32, %arg2: i32) -> (i32, i32) {
    %c0_i32 = arith.constant 0 : i32
    return %arg0, %arg2 : i32, i32
  }
  func.func @transform_1(%arg0: i32, %arg1: i32, %arg2: i32) -> (i32, i32) {
    %c0_i32 = arith.constant 0 : i32
    return %arg2, %arg1 : i32, i32
  }
  func.func @transform_2(%arg0: i32, %arg1: i32, %arg2: i32) -> (i32, i32) {
    %c0_i32 = arith.constant 0 : i32
    %c0_i32_0 = arith.constant 0 : i32
    return %c0_i32, %arg1 : i32, i32
  }
  func.func @transform_3(%arg0: i32, %arg1: i32, %arg2: i32) -> (i32, i32) {
    %c0_i32 = arith.constant 0 : i32
    return %arg0, %arg1 : i32, i32
  }
}

module attributes {stable_mosaic.version = 11 : i64} {
  func.func @_max3_kernel(%arg0: i32, %arg1: memref<112x128xf32, #tpu.memory_space<vmem>>, %arg2: memref<112x128xf32, #tpu.memory_space<vmem>>, %arg3: memref<112x128xf32, #tpu.memory_space<vmem>>, %arg4: memref<112x128xf32, #tpu.memory_space<vmem>>) attributes {dimension_semantics = [#tpu.dimension_semantics<parallel>], iteration_bounds = array<i64: 1>, scalar_prefetch = 0 : i64, scratch_operands = 0 : i64, tpu.core_type = #tpu.core_type<tc>, window_params = [{transform_indices = @transform_0, window_bounds = array<i64: 112, 128>}, {transform_indices = @transform_1, window_bounds = array<i64: 112, 128>}, {transform_indices = @transform_2, window_bounds = array<i64: 112, 128>}, {transform_indices = @transform_3, window_bounds = array<i64: 112, 128>}]} {
    %c0 = arith.constant 0 : index
    %c0_0 = arith.constant 0 : index
    %0 = vector.load %arg1[%c0, %c0_0] : memref<112x128xf32, #tpu.memory_space<vmem>>, vector<112x128xf32>
    %c0_1 = arith.constant 0 : index
    %c0_2 = arith.constant 0 : index
    %1 = vector.load %arg2[%c0_1, %c0_2] : memref<112x128xf32, #tpu.memory_space<vmem>>, vector<112x128xf32>
    %2 = arith.maximumf %0, %1 : vector<112x128xf32>
    %c0_3 = arith.constant 0 : index
    %c0_4 = arith.constant 0 : index
    %3 = vector.load %arg3[%c0_3, %c0_4] : memref<112x128xf32, #tpu.memory_space<vmem>>, vector<112x128xf32>
    %4 = arith.maximumf %2, %3 : vector<112x128xf32>
    %c0_5 = arith.constant 0 : index
    %c0_6 = arith.constant 0 : index
    %5 = vector.load %arg4[%c0_5, %c0_6] : memref<112x128xf32, #tpu.memory_space<vmem>>, vector<112x128xf32>
    tpu.vector_store %arg4[%c0_5, %c0_6], %4 {strides = array<i32>} : memref<112x128xf32, #tpu.memory_space<vmem>>, vector<112x128xf32>,
    return
  }
  func.func @transform_0(%arg0: i32) -> (i32, i32) {
    %c0_i32 = arith.constant 0 : i32
    %c0_i32_0 = arith.constant 0 : i32
    return %arg0, %c0_i32 : i32, i32
  }
  func.func @transform_1(%arg0: i32) -> (i32, i32) {
    %c0_i32 = arith.constant 0 : i32
    %c0_i32_0 = arith.constant 0 : i32
    return %arg0, %c0_i32 : i32, i32
  }
  func.func @transform_2(%arg0: i32) -> (i32, i32) {
    %c0_i32 = arith.constant 0 : i32
    %c0_i32_0 = arith.constant 0 : i32
    return %arg0, %c0_i32 : i32, i32
  }
  func.func @transform_3(%arg0: i32) -> (i32, i32) {
    %c0_i32 = arith.constant 0 : i32
    %c0_i32_0 = arith.constant 0 : i32
    return %arg0, %c0_i32 : i32, i32
  }
}

module attributes {stable_mosaic.version = 11 : i64} {
  func.func @_max3_kernel(%arg0: i32, %arg1: memref<56x128xf32, #tpu.memory_space<vmem>>, %arg2: memref<56x128xf32, #tpu.memory_space<vmem>>, %arg3: memref<56x128xf32, #tpu.memory_space<vmem>>, %arg4: memref<56x128xf32, #tpu.memory_space<vmem>>) attributes {dimension_semantics = [#tpu.dimension_semantics<parallel>], iteration_bounds = array<i64: 1>, scalar_prefetch = 0 : i64, scratch_operands = 0 : i64, tpu.core_type = #tpu.core_type<tc>, window_params = [{transform_indices = @transform_0, window_bounds = array<i64: 56, 128>}, {transform_indices = @transform_1, window_bounds = array<i64: 56, 128>}, {transform_indices = @transform_2, window_bounds = array<i64: 56, 128>}, {transform_indices = @transform_3, window_bounds = array<i64: 56, 128>}]} {
    %c0 = arith.constant 0 : index
    %c0_0 = arith.constant 0 : index
    %0 = vector.load %arg1[%c0, %c0_0] : memref<56x128xf32, #tpu.memory_space<vmem>>, vector<56x128xf32>
    %c0_1 = arith.constant 0 : index
    %c0_2 = arith.constant 0 : index
    %1 = vector.load %arg2[%c0_1, %c0_2] : memref<56x128xf32, #tpu.memory_space<vmem>>, vector<56x128xf32>
    %2 = arith.maximumf %0, %1 : vector<56x128xf32>
    %c0_3 = arith.constant 0 : index
    %c0_4 = arith.constant 0 : index
    %3 = vector.load %arg3[%c0_3, %c0_4] : memref<56x128xf32, #tpu.memory_space<vmem>>, vector<56x128xf32>
    %4 = arith.maximumf %2, %3 : vector<56x128xf32>
    %c0_5 = arith.constant 0 : index
    %c0_6 = arith.constant 0 : index
    %5 = vector.load %arg4[%c0_5, %c0_6] : memref<56x128xf32, #tpu.memory_space<vmem>>, vector<56x128xf32>
    tpu.vector_store %arg4[%c0_5, %c0_6], %4 {strides = array<i32>} : memref<56x128xf32, #tpu.memory_space<vmem>>, vector<56x128xf32>,
    return
  }
  func.func @transform_0(%arg0: i32) -> (i32, i32) {
    %c0_i32 = arith.constant 0 : i32
    %c0_i32_0 = arith.constant 0 : i32
    return %arg0, %c0_i32 : i32, i32
  }
  func.func @transform_1(%arg0: i32) -> (i32, i32) {
    %c0_i32 = arith.constant 0 : i32
    %c0_i32_0 = arith.constant 0 : i32
    return %arg0, %c0_i32 : i32, i32
  }
  func.func @transform_2(%arg0: i32) -> (i32, i32) {
    %c0_i32 = arith.constant 0 : i32
    %c0_i32_0 = arith.constant 0 : i32
    return %arg0, %c0_i32 : i32, i32
  }
  func.func @transform_3(%arg0: i32) -> (i32, i32) {
    %c0_i32 = arith.constant 0 : i32
    %c0_i32_0 = arith.constant 0 : i32
    return %arg0, %c0_i32 : i32, i32
  }
}

module attributes {stable_mosaic.version = 11 : i64} {
  func.func @kernel(%arg0: i32, %arg1: i32, %arg2: i32, %arg3: memref<104x128xbf16, #tpu.memory_space<vmem>>, %arg4: memref<128x256xbf16, #tpu.memory_space<vmem>>, %arg5: memref<1x256xf32, #tpu.memory_space<vmem>>, %arg6: memref<104x256xf32, #tpu.memory_space<vmem>>, %arg7: memref<104x256xf32, #tpu.memory_space<vmem>>) attributes {dimension_semantics = [#tpu.dimension_semantics<parallel>, #tpu.dimension_semantics<parallel>, #tpu.dimension_semantics<arbitrary>], iteration_bounds = array<i64: 1, 1, 13>, scalar_prefetch = 0 : i64, scratch_operands = 1 : i64, tpu.core_type = #tpu.core_type<tc>, window_params = [{transform_indices = @transform_0, window_bounds = array<i64: 104, 128>}, {transform_indices = @transform_1, window_bounds = array<i64: 128, 256>}, {transform_indices = @transform_2, window_bounds = array<i64: 1, 256>}, {transform_indices = @transform_3, window_bounds = array<i64: 104, 256>}]} {
    %c0_i32 = arith.constant 0 : i32
    %0 = arith.cmpi eq, %arg2, %c0_i32 : i32
    %1 = arith.extui %0 : i1 to i32
    %c0_i32_0 = arith.constant 0 : i32
    %2 = arith.cmpi ne, %1, %c0_i32_0 : i32
    scf.if %2 {
      %cst_9 = arith.constant 0.000000e+00 : f32
      %12 = vector.broadcast %cst_9 : f32 to vector<104x256xf32>
      %c0_10 = arith.constant 0 : index
      %c0_11 = arith.constant 0 : index
      %13 = vector.load %arg7[%c0_10, %c0_11] : memref<104x256xf32, #tpu.memory_space<vmem>>, vector<104x256xf32>
      tpu.vector_store %arg7[%c0_10, %c0_11], %12 {strides = array<i32>} : memref<104x256xf32, #tpu.memory_space<vmem>>, vector<104x256xf32>,
    } else {
    }
    %c0 = arith.constant 0 : index
    %c0_1 = arith.constant 0 : index
    %3 = vector.load %arg7[%c0, %c0_1] : memref<104x256xf32, #tpu.memory_space<vmem>>, vector<104x256xf32>
    %c0_2 = arith.constant 0 : index
    %c0_3 = arith.constant 0 : index
    %4 = vector.load %arg3[%c0_2, %c0_3] : memref<104x128xbf16, #tpu.memory_space<vmem>>, vector<104x128xbf16>
    %c0_4 = arith.constant 0 : index
    %c0_5 = arith.constant 0 : index
    %5 = vector.load %arg4[%c0_4, %c0_5] : memref<128x256xbf16, #tpu.memory_space<vmem>>, vector<128x256xbf16>
    %cst = arith.constant dense<0.000000e+00> : vector<104x256xf32>
    %6 = tpu.matmul %4, %5, %cst {dimension_numbers = #tpu.dot_dimension_numbers<[1], [0], [0], [1], [0, 0, 1, 1], [], []>} : vector<104x128xbf16>, vector<128x256xbf16>, vector<104x256xf32> -> vector<104x256xf32>
    %7 = arith.addf %3, %6 : vector<104x256xf32>
    %c0_6 = arith.constant 0 : index
    %c0_7 = arith.constant 0 : index
    %8 = vector.load %arg7[%c0_6, %c0_7] : memref<104x256xf32, #tpu.memory_space<vmem>>, vector<104x256xf32>
    tpu.vector_store %arg7[%c0_6, %c0_7], %7 {strides = array<i32>} : memref<104x256xf32, #tpu.memory_space<vmem>>, vector<104x256xf32>,
    %c12_i32 = arith.constant 12 : i32
    %9 = arith.cmpi eq, %arg2, %c12_i32 : i32
    %10 = arith.extui %9 : i1 to i32
    %c0_i32_8 = arith.constant 0 : i32
    %11 = arith.cmpi ne, %10, %c0_i32_8 : i32
    scf.if %11 {
      %c0_9 = arith.constant 0 : index
      %c0_10 = arith.constant 0 : index
      %12 = vector.load %arg7[%c0_9, %c0_10] : memref<104x256xf32, #tpu.memory_space<vmem>>, vector<104x256xf32>
      %c0_11 = arith.constant 0 : index
      %c0_12 = arith.constant 0 : index
      %13 = vector.load %arg5[%c0_11, %c0_12] : memref<1x256xf32, #tpu.memory_space<vmem>>, vector<1x256xf32>
      %14 = vector.broadcast %13 : vector<1x256xf32> to vector<104x256xf32>
      %15 = arith.addf %12, %14 : vector<104x256xf32>
      %cst_13 = arith.constant 0.000000e+00 : f32
      %16 = vector.broadcast %cst_13 : f32 to vector<104x256xf32>
      %17 = arith.maximumf %15, %16 : vector<104x256xf32>
      %c0_14 = arith.constant 0 : index
      %c0_15 = arith.constant 0 : index
      %18 = vector.load %arg6[%c0_14, %c0_15] : memref<104x256xf32, #tpu.memory_space<vmem>>, vector<104x256xf32>
      tpu.vector_store %arg6[%c0_14, %c0_15], %17 {strides = array<i32>} : memref<104x256xf32, #tpu.memory_space<vmem>>, vector<104x256xf32>,
    } else {
    }
    return
  }
  func.func @transform_0(%arg0: i32, %arg1: i32, %arg2: i32) -> (i32, i32) {
    %c0_i32 = arith.constant 0 : i32
    return %arg0, %arg2 : i32, i32
  }
  func.func @transform_1(%arg0: i32, %arg1: i32, %arg2: i32) -> (i32, i32) {
    %c0_i32 = arith.constant 0 : i32
    return %arg2, %arg1 : i32, i32
  }
  func.func @transform_2(%arg0: i32, %arg1: i32, %arg2: i32) -> (i32, i32) {
    %c0_i32 = arith.constant 0 : i32
    %c0_i32_0 = arith.constant 0 : i32
    return %c0_i32, %arg1 : i32, i32
  }
  func.func @transform_3(%arg0: i32, %arg1: i32, %arg2: i32) -> (i32, i32) {
    %c0_i32 = arith.constant 0 : i32
    return %arg0, %arg1 : i32, i32
  }
}

module attributes {stable_mosaic.version = 11 : i64} {
  func.func @_max3_kernel(%arg0: i32, %arg1: memref<64x128xf32, #tpu.memory_space<vmem>>, %arg2: memref<64x128xf32, #tpu.memory_space<vmem>>, %arg3: memref<64x128xf32, #tpu.memory_space<vmem>>, %arg4: memref<64x128xf32, #tpu.memory_space<vmem>>) attributes {dimension_semantics = [#tpu.dimension_semantics<parallel>], iteration_bounds = array<i64: 1>, scalar_prefetch = 0 : i64, scratch_operands = 0 : i64, tpu.core_type = #tpu.core_type<tc>, window_params = [{transform_indices = @transform_0, window_bounds = array<i64: 64, 128>}, {transform_indices = @transform_1, window_bounds = array<i64: 64, 128>}, {transform_indices = @transform_2, window_bounds = array<i64: 64, 128>}, {transform_indices = @transform_3, window_bounds = array<i64: 64, 128>}]} {
    %c0 = arith.constant 0 : index
    %c0_0 = arith.constant 0 : index
    %0 = vector.load %arg1[%c0, %c0_0] : memref<64x128xf32, #tpu.memory_space<vmem>>, vector<64x128xf32>
    %c0_1 = arith.constant 0 : index
    %c0_2 = arith.constant 0 : index
    %1 = vector.load %arg2[%c0_1, %c0_2] : memref<64x128xf32, #tpu.memory_space<vmem>>, vector<64x128xf32>
    %2 = arith.maximumf %0, %1 : vector<64x128xf32>
    %c0_3 = arith.constant 0 : index
    %c0_4 = arith.constant 0 : index
    %3 = vector.load %arg3[%c0_3, %c0_4] : memref<64x128xf32, #tpu.memory_space<vmem>>, vector<64x128xf32>
    %4 = arith.maximumf %2, %3 : vector<64x128xf32>
    %c0_5 = arith.constant 0 : index
    %c0_6 = arith.constant 0 : index
    %5 = vector.load %arg4[%c0_5, %c0_6] : memref<64x128xf32, #tpu.memory_space<vmem>>, vector<64x128xf32>
    tpu.vector_store %arg4[%c0_5, %c0_6], %4 {strides = array<i32>} : memref<64x128xf32, #tpu.memory_space<vmem>>, vector<64x128xf32>,
    return
  }
  func.func @transform_0(%arg0: i32) -> (i32, i32) {
    %c0_i32 = arith.constant 0 : i32
    %c0_i32_0 = arith.constant 0 : i32
    return %arg0, %c0_i32 : i32, i32
  }
  func.func @transform_1(%arg0: i32) -> (i32, i32) {
    %c0_i32 = arith.constant 0 : i32
    %c0_i32_0 = arith.constant 0 : i32
    return %arg0, %c0_i32 : i32, i32
  }
  func.func @transform_2(%arg0: i32) -> (i32, i32) {
    %c0_i32 = arith.constant 0 : i32
    %c0_i32_0 = arith.constant 0 : i32
    return %arg0, %c0_i32 : i32, i32
  }
  func.func @transform_3(%arg0: i32) -> (i32, i32) {
    %c0_i32 = arith.constant 0 : i32
    %c0_i32_0 = arith.constant 0 : i32
    return %arg0, %c0_i32 : i32, i32
  }
}

module attributes {stable_mosaic.version = 11 : i64} {
  func.func @_max3_kernel(%arg0: i32, %arg1: memref<32x128xf32, #tpu.memory_space<vmem>>, %arg2: memref<32x128xf32, #tpu.memory_space<vmem>>, %arg3: memref<32x128xf32, #tpu.memory_space<vmem>>, %arg4: memref<32x128xf32, #tpu.memory_space<vmem>>) attributes {dimension_semantics = [#tpu.dimension_semantics<parallel>], iteration_bounds = array<i64: 1>, scalar_prefetch = 0 : i64, scratch_operands = 0 : i64, tpu.core_type = #tpu.core_type<tc>, window_params = [{transform_indices = @transform_0, window_bounds = array<i64: 32, 128>}, {transform_indices = @transform_1, window_bounds = array<i64: 32, 128>}, {transform_indices = @transform_2, window_bounds = array<i64: 32, 128>}, {transform_indices = @transform_3, window_bounds = array<i64: 32, 128>}]} {
    %c0 = arith.constant 0 : index
    %c0_0 = arith.constant 0 : index
    %0 = vector.load %arg1[%c0, %c0_0] : memref<32x128xf32, #tpu.memory_space<vmem>>, vector<32x128xf32>
    %c0_1 = arith.constant 0 : index
    %c0_2 = arith.constant 0 : index
    %1 = vector.load %arg2[%c0_1, %c0_2] : memref<32x128xf32, #tpu.memory_space<vmem>>, vector<32x128xf32>
    %2 = arith.maximumf %0, %1 : vector<32x128xf32>
    %c0_3 = arith.constant 0 : index
    %c0_4 = arith.constant 0 : index
    %3 = vector.load %arg3[%c0_3, %c0_4] : memref<32x128xf32, #tpu.memory_space<vmem>>, vector<32x128xf32>
    %4 = arith.maximumf %2, %3 : vector<32x128xf32>
    %c0_5 = arith.constant 0 : index
    %c0_6 = arith.constant 0 : index
    %5 = vector.load %arg4[%c0_5, %c0_6] : memref<32x128xf32, #tpu.memory_space<vmem>>, vector<32x128xf32>
    tpu.vector_store %arg4[%c0_5, %c0_6], %4 {strides = array<i32>} : memref<32x128xf32, #tpu.memory_space<vmem>>, vector<32x128xf32>,
    return
  }
  func.func @transform_0(%arg0: i32) -> (i32, i32) {
    %c0_i32 = arith.constant 0 : i32
    %c0_i32_0 = arith.constant 0 : i32
    return %arg0, %c0_i32 : i32, i32
  }
  func.func @transform_1(%arg0: i32) -> (i32, i32) {
    %c0_i32 = arith.constant 0 : i32
    %c0_i32_0 = arith.constant 0 : i32
    return %arg0, %c0_i32 : i32, i32
  }
  func.func @transform_2(%arg0: i32) -> (i32, i32) {
    %c0_i32 = arith.constant 0 : i32
    %c0_i32_0 = arith.constant 0 : i32
    return %arg0, %c0_i32 : i32, i32
  }
  func.func @transform_3(%arg0: i32) -> (i32, i32) {
    %c0_i32 = arith.constant 0 : i32
    %c0_i32_0 = arith.constant 0 : i32
    return %arg0, %c0_i32 : i32, i32
  }
}

module attributes {stable_mosaic.version = 11 : i64} {
  func.func @kernel(%arg0: i32, %arg1: i32, %arg2: i32, %arg3: memref<24x256xbf16, #tpu.memory_space<vmem>>, %arg4: memref<256x128xbf16, #tpu.memory_space<vmem>>, %arg5: memref<1x128xf32, #tpu.memory_space<vmem>>, %arg6: memref<24x128xf32, #tpu.memory_space<vmem>>, %arg7: memref<24x128xf32, #tpu.memory_space<vmem>>) attributes {dimension_semantics = [#tpu.dimension_semantics<parallel>, #tpu.dimension_semantics<parallel>, #tpu.dimension_semantics<arbitrary>], iteration_bounds = array<i64: 1, 3, 7>, scalar_prefetch = 0 : i64, scratch_operands = 1 : i64, tpu.core_type = #tpu.core_type<tc>, window_params = [{transform_indices = @transform_0, window_bounds = array<i64: 24, 256>}, {transform_indices = @transform_1, window_bounds = array<i64: 256, 128>}, {transform_indices = @transform_2, window_bounds = array<i64: 1, 128>}, {transform_indices = @transform_3, window_bounds = array<i64: 24, 128>}]} {
    %c0_i32 = arith.constant 0 : i32
    %0 = arith.cmpi eq, %arg2, %c0_i32 : i32
    %1 = arith.extui %0 : i1 to i32
    %c0_i32_0 = arith.constant 0 : i32
    %2 = arith.cmpi ne, %1, %c0_i32_0 : i32
    scf.if %2 {
      %cst_9 = arith.constant 0.000000e+00 : f32
      %12 = vector.broadcast %cst_9 : f32 to vector<24x128xf32>
      %c0_10 = arith.constant 0 : index
      %c0_11 = arith.constant 0 : index
      %13 = vector.load %arg7[%c0_10, %c0_11] : memref<24x128xf32, #tpu.memory_space<vmem>>, vector<24x128xf32>
      tpu.vector_store %arg7[%c0_10, %c0_11], %12 {strides = array<i32>} : memref<24x128xf32, #tpu.memory_space<vmem>>, vector<24x128xf32>,
    } else {
    }
    %c0 = arith.constant 0 : index
    %c0_1 = arith.constant 0 : index
    %3 = vector.load %arg7[%c0, %c0_1] : memref<24x128xf32, #tpu.memory_space<vmem>>, vector<24x128xf32>
    %c0_2 = arith.constant 0 : index
    %c0_3 = arith.constant 0 : index
    %4 = vector.load %arg3[%c0_2, %c0_3] : memref<24x256xbf16, #tpu.memory_space<vmem>>, vector<24x256xbf16>
    %c0_4 = arith.constant 0 : index
    %c0_5 = arith.constant 0 : index
    %5 = vector.load %arg4[%c0_4, %c0_5] : memref<256x128xbf16, #tpu.memory_space<vmem>>, vector<256x128xbf16>
    %cst = arith.constant dense<0.000000e+00> : vector<24x128xf32>
    %6 = tpu.matmul %4, %5, %cst {dimension_numbers = #tpu.dot_dimension_numbers<[1], [0], [0], [1], [0, 0, 1, 1], [], []>} : vector<24x256xbf16>, vector<256x128xbf16>, vector<24x128xf32> -> vector<24x128xf32>
    %7 = arith.addf %3, %6 : vector<24x128xf32>
    %c0_6 = arith.constant 0 : index
    %c0_7 = arith.constant 0 : index
    %8 = vector.load %arg7[%c0_6, %c0_7] : memref<24x128xf32, #tpu.memory_space<vmem>>, vector<24x128xf32>
    tpu.vector_store %arg7[%c0_6, %c0_7], %7 {strides = array<i32>} : memref<24x128xf32, #tpu.memory_space<vmem>>, vector<24x128xf32>,
    %c6_i32 = arith.constant 6 : i32
    %9 = arith.cmpi eq, %arg2, %c6_i32 : i32
    %10 = arith.extui %9 : i1 to i32
    %c0_i32_8 = arith.constant 0 : i32
    %11 = arith.cmpi ne, %10, %c0_i32_8 : i32
    scf.if %11 {
      %c0_9 = arith.constant 0 : index
      %c0_10 = arith.constant 0 : index
      %12 = vector.load %arg7[%c0_9, %c0_10] : memref<24x128xf32, #tpu.memory_space<vmem>>, vector<24x128xf32>
      %c0_11 = arith.constant 0 : index
      %c0_12 = arith.constant 0 : index
      %13 = vector.load %arg5[%c0_11, %c0_12] : memref<1x128xf32, #tpu.memory_space<vmem>>, vector<1x128xf32>
      %14 = vector.broadcast %13 : vector<1x128xf32> to vector<24x128xf32>
      %15 = arith.addf %12, %14 : vector<24x128xf32>
      %cst_13 = arith.constant 0.000000e+00 : f32
      %16 = vector.broadcast %cst_13 : f32 to vector<24x128xf32>
      %17 = arith.maximumf %15, %16 : vector<24x128xf32>
      %c0_14 = arith.constant 0 : index
      %c0_15 = arith.constant 0 : index
      %18 = vector.load %arg6[%c0_14, %c0_15] : memref<24x128xf32, #tpu.memory_space<vmem>>, vector<24x128xf32>
      tpu.vector_store %arg6[%c0_14, %c0_15], %17 {strides = array<i32>} : memref<24x128xf32, #tpu.memory_space<vmem>>, vector<24x128xf32>,
    } else {
    }
    return
  }
  func.func @transform_0(%arg0: i32, %arg1: i32, %arg2: i32) -> (i32, i32) {
    %c0_i32 = arith.constant 0 : i32
    return %arg0, %arg2 : i32, i32
  }
  func.func @transform_1(%arg0: i32, %arg1: i32, %arg2: i32) -> (i32, i32) {
    %c0_i32 = arith.constant 0 : i32
    return %arg2, %arg1 : i32, i32
  }
  func.func @transform_2(%arg0: i32, %arg1: i32, %arg2: i32) -> (i32, i32) {
    %c0_i32 = arith.constant 0 : i32
    %c0_i32_0 = arith.constant 0 : i32
    return %c0_i32, %arg1 : i32, i32
  }
  func.func @transform_3(%arg0: i32, %arg1: i32, %arg2: i32) -> (i32, i32) {
    %c0_i32 = arith.constant 0 : i32
    return %arg0, %arg1 : i32, i32
  }
}

module attributes {stable_mosaic.version = 11 : i64} {
  func.func @kernel(%arg0: i32, %arg1: i32, %arg2: i32, %arg3: memref<24x128xbf16, #tpu.memory_space<vmem>>, %arg4: memref<128x256xbf16, #tpu.memory_space<vmem>>, %arg5: memref<1x256xf32, #tpu.memory_space<vmem>>, %arg6: memref<24x256xf32, #tpu.memory_space<vmem>>, %arg7: memref<24x256xf32, #tpu.memory_space<vmem>>) attributes {dimension_semantics = [#tpu.dimension_semantics<parallel>, #tpu.dimension_semantics<parallel>, #tpu.dimension_semantics<arbitrary>], iteration_bounds = array<i64: 1, 1, 27>, scalar_prefetch = 0 : i64, scratch_operands = 1 : i64, tpu.core_type = #tpu.core_type<tc>, window_params = [{transform_indices = @transform_0, window_bounds = array<i64: 24, 128>}, {transform_indices = @transform_1, window_bounds = array<i64: 128, 256>}, {transform_indices = @transform_2, window_bounds = array<i64: 1, 256>}, {transform_indices = @transform_3, window_bounds = array<i64: 24, 256>}]} {
    %c0_i32 = arith.constant 0 : i32
    %0 = arith.cmpi eq, %arg2, %c0_i32 : i32
    %1 = arith.extui %0 : i1 to i32
    %c0_i32_0 = arith.constant 0 : i32
    %2 = arith.cmpi ne, %1, %c0_i32_0 : i32
    scf.if %2 {
      %cst_9 = arith.constant 0.000000e+00 : f32
      %12 = vector.broadcast %cst_9 : f32 to vector<24x256xf32>
      %c0_10 = arith.constant 0 : index
      %c0_11 = arith.constant 0 : index
      %13 = vector.load %arg7[%c0_10, %c0_11] : memref<24x256xf32, #tpu.memory_space<vmem>>, vector<24x256xf32>
      tpu.vector_store %arg7[%c0_10, %c0_11], %12 {strides = array<i32>} : memref<24x256xf32, #tpu.memory_space<vmem>>, vector<24x256xf32>,
    } else {
    }
    %c0 = arith.constant 0 : index
    %c0_1 = arith.constant 0 : index
    %3 = vector.load %arg7[%c0, %c0_1] : memref<24x256xf32, #tpu.memory_space<vmem>>, vector<24x256xf32>
    %c0_2 = arith.constant 0 : index
    %c0_3 = arith.constant 0 : index
    %4 = vector.load %arg3[%c0_2, %c0_3] : memref<24x128xbf16, #tpu.memory_space<vmem>>, vector<24x128xbf16>
    %c0_4 = arith.constant 0 : index
    %c0_5 = arith.constant 0 : index
    %5 = vector.load %arg4[%c0_4, %c0_5] : memref<128x256xbf16, #tpu.memory_space<vmem>>, vector<128x256xbf16>
    %cst = arith.constant dense<0.000000e+00> : vector<24x256xf32>
    %6 = tpu.matmul %4, %5, %cst {dimension_numbers = #tpu.dot_dimension_numbers<[1], [0], [0], [1], [0, 0, 1, 1], [], []>} : vector<24x128xbf16>, vector<128x256xbf16>, vector<24x256xf32> -> vector<24x256xf32>
    %7 = arith.addf %3, %6 : vector<24x256xf32>
    %c0_6 = arith.constant 0 : index
    %c0_7 = arith.constant 0 : index
    %8 = vector.load %arg7[%c0_6, %c0_7] : memref<24x256xf32, #tpu.memory_space<vmem>>, vector<24x256xf32>
    tpu.vector_store %arg7[%c0_6, %c0_7], %7 {strides = array<i32>} : memref<24x256xf32, #tpu.memory_space<vmem>>, vector<24x256xf32>,
    %c26_i32 = arith.constant 26 : i32
    %9 = arith.cmpi eq, %arg2, %c26_i32 : i32
    %10 = arith.extui %9 : i1 to i32
    %c0_i32_8 = arith.constant 0 : i32
    %11 = arith.cmpi ne, %10, %c0_i32_8 : i32
    scf.if %11 {
      %c0_9 = arith.constant 0 : index
      %c0_10 = arith.constant 0 : index
      %12 = vector.load %arg7[%c0_9, %c0_10] : memref<24x256xf32, #tpu.memory_space<vmem>>, vector<24x256xf32>
      %c0_11 = arith.constant 0 : index
      %c0_12 = arith.constant 0 : index
      %13 = vector.load %arg5[%c0_11, %c0_12] : memref<1x256xf32, #tpu.memory_space<vmem>>, vector<1x256xf32>
      %14 = vector.broadcast %13 : vector<1x256xf32> to vector<24x256xf32>
      %15 = arith.addf %12, %14 : vector<24x256xf32>
      %cst_13 = arith.constant 0.000000e+00 : f32
      %16 = vector.broadcast %cst_13 : f32 to vector<24x256xf32>
      %17 = arith.maximumf %15, %16 : vector<24x256xf32>
      %c0_14 = arith.constant 0 : index
      %c0_15 = arith.constant 0 : index
      %18 = vector.load %arg6[%c0_14, %c0_15] : memref<24x256xf32, #tpu.memory_space<vmem>>, vector<24x256xf32>
      tpu.vector_store %arg6[%c0_14, %c0_15], %17 {strides = array<i32>} : memref<24x256xf32, #tpu.memory_space<vmem>>, vector<24x256xf32>,
    } else {
    }
    return
  }
  func.func @transform_0(%arg0: i32, %arg1: i32, %arg2: i32) -> (i32, i32) {
    %c0_i32 = arith.constant 0 : i32
    return %arg0, %arg2 : i32, i32
  }
  func.func @transform_1(%arg0: i32, %arg1: i32, %arg2: i32) -> (i32, i32) {
    %c0_i32 = arith.constant 0 : i32
    return %arg2, %arg1 : i32, i32
  }
  func.func @transform_2(%arg0: i32, %arg1: i32, %arg2: i32) -> (i32, i32) {
    %c0_i32 = arith.constant 0 : i32
    %c0_i32_0 = arith.constant 0 : i32
    return %c0_i32, %arg1 : i32, i32
  }
  func.func @transform_3(%arg0: i32, %arg1: i32, %arg2: i32) -> (i32, i32) {
    %c0_i32 = arith.constant 0 : i32
    return %arg0, %arg1 : i32, i32
  }
}

module attributes {stable_mosaic.version = 11 : i64} {
  func.func @kernel(%arg0: i32, %arg1: i32, %arg2: i32, %arg3: memref<24x256xbf16, #tpu.memory_space<vmem>>, %arg4: memref<256x256xbf16, #tpu.memory_space<vmem>>, %arg5: memref<1x256xf32, #tpu.memory_space<vmem>>, %arg6: memref<24x256xf32, #tpu.memory_space<vmem>>, %arg7: memref<24x256xf32, #tpu.memory_space<vmem>>) attributes {dimension_semantics = [#tpu.dimension_semantics<parallel>, #tpu.dimension_semantics<parallel>, #tpu.dimension_semantics<arbitrary>], iteration_bounds = array<i64: 1, 1, 9>, scalar_prefetch = 0 : i64, scratch_operands = 1 : i64, tpu.core_type = #tpu.core_type<tc>, window_params = [{transform_indices = @transform_0, window_bounds = array<i64: 24, 256>}, {transform_indices = @transform_1, window_bounds = array<i64: 256, 256>}, {transform_indices = @transform_2, window_bounds = array<i64: 1, 256>}, {transform_indices = @transform_3, window_bounds = array<i64: 24, 256>}]} {
    %c0_i32 = arith.constant 0 : i32
    %0 = arith.cmpi eq, %arg2, %c0_i32 : i32
    %1 = arith.extui %0 : i1 to i32
    %c0_i32_0 = arith.constant 0 : i32
    %2 = arith.cmpi ne, %1, %c0_i32_0 : i32
    scf.if %2 {
      %cst_9 = arith.constant 0.000000e+00 : f32
      %12 = vector.broadcast %cst_9 : f32 to vector<24x256xf32>
      %c0_10 = arith.constant 0 : index
      %c0_11 = arith.constant 0 : index
      %13 = vector.load %arg7[%c0_10, %c0_11] : memref<24x256xf32, #tpu.memory_space<vmem>>, vector<24x256xf32>
      tpu.vector_store %arg7[%c0_10, %c0_11], %12 {strides = array<i32>} : memref<24x256xf32, #tpu.memory_space<vmem>>, vector<24x256xf32>,
    } else {
    }
    %c0 = arith.constant 0 : index
    %c0_1 = arith.constant 0 : index
    %3 = vector.load %arg7[%c0, %c0_1] : memref<24x256xf32, #tpu.memory_space<vmem>>, vector<24x256xf32>
    %c0_2 = arith.constant 0 : index
    %c0_3 = arith.constant 0 : index
    %4 = vector.load %arg3[%c0_2, %c0_3] : memref<24x256xbf16, #tpu.memory_space<vmem>>, vector<24x256xbf16>
    %c0_4 = arith.constant 0 : index
    %c0_5 = arith.constant 0 : index
    %5 = vector.load %arg4[%c0_4, %c0_5] : memref<256x256xbf16, #tpu.memory_space<vmem>>, vector<256x256xbf16>
    %cst = arith.constant dense<0.000000e+00> : vector<24x256xf32>
    %6 = tpu.matmul %4, %5, %cst {dimension_numbers = #tpu.dot_dimension_numbers<[1], [0], [0], [1], [0, 0, 1, 1], [], []>} : vector<24x256xbf16>, vector<256x256xbf16>, vector<24x256xf32> -> vector<24x256xf32>
    %7 = arith.addf %3, %6 : vector<24x256xf32>
    %c0_6 = arith.constant 0 : index
    %c0_7 = arith.constant 0 : index
    %8 = vector.load %arg7[%c0_6, %c0_7] : memref<24x256xf32, #tpu.memory_space<vmem>>, vector<24x256xf32>
    tpu.vector_store %arg7[%c0_6, %c0_7], %7 {strides = array<i32>} : memref<24x256xf32, #tpu.memory_space<vmem>>, vector<24x256xf32>,
    %c8_i32 = arith.constant 8 : i32
    %9 = arith.cmpi eq, %arg2, %c8_i32 : i32
    %10 = arith.extui %9 : i1 to i32
    %c0_i32_8 = arith.constant 0 : i32
    %11 = arith.cmpi ne, %10, %c0_i32_8 : i32
    scf.if %11 {
      %c0_9 = arith.constant 0 : index
      %c0_10 = arith.constant 0 : index
      %12 = vector.load %arg7[%c0_9, %c0_10] : memref<24x256xf32, #tpu.memory_space<vmem>>, vector<24x256xf32>
      %c0_11 = arith.constant 0 : index
      %c0_12 = arith.constant 0 : index
      %13 = vector.load %arg5[%c0_11, %c0_12] : memref<1x256xf32, #tpu.memory_space<vmem>>, vector<1x256xf32>
      %14 = vector.broadcast %13 : vector<1x256xf32> to vector<24x256xf32>
      %15 = arith.addf %12, %14 : vector<24x256xf32>
      %cst_13 = arith.constant 0.000000e+00 : f32
      %16 = vector.broadcast %cst_13 : f32 to vector<24x256xf32>
      %17 = arith.maximumf %15, %16 : vector<24x256xf32>
      %c0_14 = arith.constant 0 : index
      %c0_15 = arith.constant 0 : index
      %18 = vector.load %arg6[%c0_14, %c0_15] : memref<24x256xf32, #tpu.memory_space<vmem>>, vector<24x256xf32>
      tpu.vector_store %arg6[%c0_14, %c0_15], %17 {strides = array<i32>} : memref<24x256xf32, #tpu.memory_space<vmem>>, vector<24x256xf32>,
    } else {
    }
    return
  }
  func.func @transform_0(%arg0: i32, %arg1: i32, %arg2: i32) -> (i32, i32) {
    %c0_i32 = arith.constant 0 : i32
    return %arg0, %arg2 : i32, i32
  }
  func.func @transform_1(%arg0: i32, %arg1: i32, %arg2: i32) -> (i32, i32) {
    %c0_i32 = arith.constant 0 : i32
    return %arg2, %arg1 : i32, i32
  }
  func.func @transform_2(%arg0: i32, %arg1: i32, %arg2: i32) -> (i32, i32) {
    %c0_i32 = arith.constant 0 : i32
    %c0_i32_0 = arith.constant 0 : i32
    return %c0_i32, %arg1 : i32, i32
  }
  func.func @transform_3(%arg0: i32, %arg1: i32, %arg2: i32) -> (i32, i32) {
    %c0_i32 = arith.constant 0 : i32
    return %arg0, %arg1 : i32, i32
  }
}

</mosaic_0001>

<llo_original>
// kernel: alexnet_forward.9
$region0: #{alexnet_forward.9}
  #allocation0 [shape = 'u32[]', space=smem, size = 0x4, offset = 0x4, fixed_abs, tag = 'smem constant byte address 0x4 - core index']
  #allocation1 [shape = 'u32[144,128]{1,0:T(1,128)}', space=vmem, size = 0x12000, scoped, tag = 'internal scratch']
  #allocation2 [shape = 'f32[256,128]{1,0:T(8,128)}', space=vmem, size = 0x20000, scoped, tag = 'scratch operand']
  %s0 = inlined_call_operand.vmem [shape: bf16[512,384], index: 0, kind: input, shape index: {}]
  %s1 = inlined_call_operand.vmem [shape: bf16[384,128], index: 1, kind: input, shape index: {}]
  %s2 = inlined_call_operand.vmem [shape: f32[1,128], index: 2, kind: input, shape index: {}]
  %s3 = inlined_call_operand.vmem [shape: f32[512,128], index: 3, kind: output, shape index: {}]
  %s4 = sld [smem:[#allocation0]]
  $region94: #{alexnet_forward.9} parent=0
    _
  %s6 = ssub.s32 1, %s4
  %s7 = scalar_select 0, %s6, %s4
  $region1: #{alexnet_forward.9} parent=0
    #allocation3 [shape = 'u8[131072]{0}', space=vmem, size = 0x20000, scoped, tag = 'input window, operand 0']
    loop: start=0, step=1, limit=8
    $region2: #{alexnet_forward.9} parent=1 // loop_pre_header
      _
    $region3: #{alexnet_forward.9} parent=1 // loop_header
      %s9 = sphi 0, %s13
      %p10 = scmp.ge.s32.totalorder %s9, 8
      %s16 = sphi 0, %s35
      %s17 = sphi 0, %s31
      %s18 = sphi 0, %s27
      %s19 = sphi 0, %s16
      %s20 = sphi 0, %s17
      %s21 = sphi 0, %s18
      %s22 = sphi 0, %s19
      %s23 = sphi 0, %s20
      %s24 = sphi 0, %s21
      %s40 = sphi 0, %s42
      %s43 = sphi 0, %s40
      %s44 = sphi 0, %s43
      %s60 = sphi 0, %s44
      %s68 = sphi 0, %s70
      %s71 = sphi 0, %s68
      %s72 = sphi 0, %s71
      %s88 = sphi 0, %s72
      %s94 = sphi 0, %s96
      %s97 = sphi 0, %s94
      %s98 = sphi 0, %s97
      %s114 = sphi 0, %s98
      %s122 = sphi 0, %s124
      %s125 = sphi 0, %s122
      %s126 = sphi 0, %s125
      %s142 = sphi 0, %s126
    $region4: #{alexnet_forward.9} parent=1 // loop_header_branch
      %12 = sbr.rel (%p10) target = $region8
    $region5: #{alexnet_forward.9} parent=1 // loop_body
      %s14 = ssub.s32 %s9, 1
      %s15 = ssub.s32 %s9, 2
      %s25 = sadd.s32 1, %s18
      %p26 = scmp.ge.s32.totalorder %s25, 3
      %s27 = scalar_select %p26, 0, %s25
      %s28 = sadd.s32 1, %s17
      %s29 = scalar_select %p26, %s28, %s17
      %p30 = scmp.ge.s32.totalorder %s29, 1
      %s31 = scalar_select %p30, 0, %s29
      %s32 = sadd.s32 1, %s16
      %s33 = scalar_select %p30, %s32, %s16
      %p34 = scmp.ge.s32.totalorder %s33, 2
      %s35 = scalar_select %p34, 0, %s33
      %s36 = ssub.s32 %s16, %s35
      %s37 = ssub.s32 %s18, %s27
      %s38 = sor.u32 %s36, %s37
      %p39 = scmp.eq.s32.totalorder %s38, 0
      %s41 = sadd.s32 %s40, 1
      %s42 = scalar_select %p39, %s40, %s41
      %p45 = pneg %p39
      %p46 = scmp.eq.s32.totalorder %s9, 5
      %p47 = por %p45, %p46
      %p48 = scmp.ne.s32.totalorder %s40, %s43
      %p49 = scmp.eq.s32.totalorder %s9, 0
      %p50 = por %p48, %p49
      %p51 = scmp.ne.s32.totalorder %s40, %s43
      %p52 = scmp.eq.s32.totalorder %s14, 5
      %p53 = por %p51, %p52
      %p54 = scmp.ne.s32.totalorder %s43, %s44
      %p55 = scmp.eq.s32.totalorder %s14, 0
      %p56 = por %p54, %p55
      %p57 = scmp.ne.s32.totalorder %s43, %s44
      %p58 = scmp.eq.s32.totalorder %s15, 5
      %p59 = por %p57, %p58
      %p61 = scmp.ne.s32.totalorder %s44, %s60
      %p62 = scmp.eq.s32.totalorder %s15, 0
      %p63 = por %p61, %p62
      %s64 = ssub.s32 %s18, %s27
      %s65 = ssub.s32 %s17, %s31
      %s66 = sor.u32 %s64, %s65
      %p67 = scmp.eq.s32.totalorder %s66, 0
      %s69 = sadd.s32 %s68, 1
      %s70 = scalar_select %p67, %s68, %s69
      %p73 = pneg %p67
      %p74 = scmp.eq.s32.totalorder %s9, 5
      %p75 = por %p73, %p74
      %p76 = scmp.ne.s32.totalorder %s68, %s71
      %p77 = scmp.eq.s32.totalorder %s9, 0
      %p78 = por %p76, %p77
      %p79 = scmp.ne.s32.totalorder %s68, %s71
      %p80 = scmp.eq.s32.totalorder %s14, 5
      %p81 = por %p79, %p80
      %p82 = scmp.ne.s32.totalorder %s71, %s72
      %p83 = scmp.eq.s32.totalorder %s14, 0
      %p84 = por %p82, %p83
      %p85 = scmp.ne.s32.totalorder %s71, %s72
      %p86 = scmp.eq.s32.totalorder %s15, 5
      %p87 = por %p85, %p86
      %p89 = scmp.ne.s32.totalorder %s72, %s88
      %p90 = scmp.eq.s32.totalorder %s15, 0
      %p91 = por %p89, %p90
      %s92 = ssub.s32 %s17, %s31
      %p93 = scmp.eq.s32.totalorder %s92, 0
      %s95 = sadd.s32 %s94, 1
      %s96 = scalar_select %p93, %s94, %s95
      %p99 = pneg %p93
      %p100 = scmp.eq.s32.totalorder %s9, 5
      %p101 = por %p99, %p100
      %p102 = scmp.ne.s32.totalorder %s94, %s97
      %p103 = scmp.eq.s32.totalorder %s9, 0
      %p104 = por %p102, %p103
      %p105 = scmp.ne.s32.totalorder %s94, %s97
      %p106 = scmp.eq.s32.totalorder %s14, 5
      %p107 = por %p105, %p106
      %p108 = scmp.ne.s32.totalorder %s97, %s98
      %p109 = scmp.eq.s32.totalorder %s14, 0
      %p110 = por %p108, %p109
      %p111 = scmp.ne.s32.totalorder %s97, %s98
      %p112 = scmp.eq.s32.totalorder %s15, 5
      %p113 = por %p111, %p112
      %p115 = scmp.ne.s32.totalorder %s98, %s114
      %p116 = scmp.eq.s32.totalorder %s15, 0
      %p117 = por %p115, %p116
      %s118 = ssub.s32 %s16, %s35
      %s119 = ssub.s32 %s17, %s31
      %s120 = sor.u32 %s118, %s119
      %p121 = scmp.eq.s32.totalorder %s120, 0
      %s123 = sadd.s32 %s122, 1
      %s124 = scalar_select %p121, %s122, %s123
      %p127 = pneg %p121
      %p128 = scmp.eq.s32.totalorder %s9, 5
      %p129 = por %p127, %p128
      %p130 = scmp.ne.s32.totalorder %s122, %s125
      %p131 = scmp.eq.s32.totalorder %s9, 0
      %p132 = por %p130, %p131
      %p133 = scmp.ne.s32.totalorder %s122, %s125
      %p134 = scmp.eq.s32.totalorder %s14, 5
      %p135 = por %p133, %p134
      %p136 = scmp.ne.s32.totalorder %s125, %s126
      %p137 = scmp.eq.s32.totalorder %s14, 0
      %p138 = por %p136, %p137
      %p139 = scmp.ne.s32.totalorder %s125, %s126
      %p140 = scmp.eq.s32.totalorder %s15, 5
      %p141 = por %p139, %p140
      %p143 = scmp.ne.s32.totalorder %s126, %s142
      %p144 = scmp.eq.s32.totalorder %s15, 0
      %p145 = por %p143, %p144
      %p146 = scmp.le.s32.totalorder 1, %s9
      %p147 = scmp.lt.s32.totalorder %s9, 7
      %p148 = pnand %p146, %p147
      %p149 = pneg %p148
      // Predicated region
      $region9: #{alexnet_forward.9} parent=5 // pred_check
        _
      $region10: #{alexnet_forward.9} parent=5 // pred_check_branch
        %151 = sbr.rel (%p148) target = $region12
      $region11: #{alexnet_forward.9} parent=5 // pred_region
        %s152 = ssub.s32 %s9, 1
        // Predicated region
        $region13: #{alexnet_forward.9} parent=11 // pred_check
          %p153 = pneg %p110
        $region14: #{alexnet_forward.9} parent=11 // pred_check_branch
          %155 = sbr.rel (%p153) target = $region16
        $region15: #{alexnet_forward.9} parent=11 // pred_region
          %p156 = scmp.lt.s32.totalorder %s20, 0
          %s157 = scalar_select %p156, %s20, 0
          %s158 = scalar_lea.vmem %s2, %s157
        $region16: #{alexnet_forward.9} parent=11 // pred_fallthru
          _
      $region12: #{alexnet_forward.9} parent=5 // pred_fallthru
        _
      %p159 = scmp.lt.s32.totalorder %s9, 6
      // Predicated region
      $region17: #{alexnet_forward.9} parent=5 // pred_check
        %p160 = pneg %p159
      $region18: #{alexnet_forward.9} parent=5 // pred_check_branch
        %162 = sbr.rel (%p160) target = $region20
      $region19: #{alexnet_forward.9} parent=5 // pred_region
        // Predicated region
        $region21: #{alexnet_forward.9} parent=19 // pred_check
          %p163 = pneg %p50
        $region22: #{alexnet_forward.9} parent=19 // pred_check_branch
          %165 = sbr.rel (%p163) target = $region24
        $region23: #{alexnet_forward.9} parent=19 // pred_region
          %s166 = sand.u32 %s40, 1
          %s167 = sand.u32 %s40, 1
          %s168 = smul.addr %s167, 128
          %s169 = scalar_lea.vmem [#allocation3], %s168
          %s170 = smul.u32 32, %s16
          %s171 = smul.addr %s170, 3
          %s172 = sadd.s32 %s18, %s171
          %s173 = smul.addr %s172, 4
          %s174 = scalar_lea.vmem %s0, %s173
          // Predicated region
          $region25: #{alexnet_forward.9} parent=23 // pred_check
            _
          $region26: #{alexnet_forward.9} parent=23 // pred_check_branch
            %176 = sbr.rel (0) target = $region28
          $region27: #{alexnet_forward.9} parent=23 // pred_region
            // Predicated region
            $region29: #{alexnet_forward.9} parent=27 // pred_check
              _
            $region30: #{alexnet_forward.9} parent=27 // pred_check_branch
              %178 = sbr.rel target = $region32
            $region31: #{alexnet_forward.9} parent=27 // pred_region
              // Predicated region
              $region44: #{alexnet_forward.9} parent=31 // pred_check
                _
              $region45: #{alexnet_forward.9} parent=31 // pred_check_branch
                %255 = sbr.rel (0) target = $region47
              $region46: #{alexnet_forward.9} parent=31 // pred_region
                loop: start=0, step=1, limit=1
                $region48: #{alexnet_forward.9} parent=46 // loop_pre_header
                  _
                $region49: #{alexnet_forward.9} parent=46 // loop_header
                  %s257 = sphi 0, %s261
                  %p258 = scmp.ge.s32.totalorder %s257, 1
                  %s262 = sphi %s174, %s174
                  %s263 = sphi %s169, %s169
                $region50: #{alexnet_forward.9} parent=46 // loop_header_branch
                  %260 = sbr.rel (%p258) target = $region54
                $region51: #{alexnet_forward.9} parent=46 // loop_body
                  _
                $region52: #{alexnet_forward.9} parent=46 // loop_footer
                  %s261 = sadd.s32 1, %s257
                $region53: #{alexnet_forward.9} parent=46 // loop_footer_branch
                  %256 = sbr.rel target = $region49
                $region54: #{alexnet_forward.9} parent=46 // loop_exit
                  _
                loop: start=0, step=1, limit=1
                $region55: #{alexnet_forward.9} parent=46 // loop_pre_header
                  _
                $region56: #{alexnet_forward.9} parent=46 // loop_header
                  %s266 = sphi 0, %s270
                  %p267 = scmp.ge.s32.totalorder %s266, 1
                  %s271 = sphi %s174, %s174
                  %s272 = sphi %s169, %s169
                $region57: #{alexnet_forward.9} parent=46 // loop_header_branch
                  %269 = sbr.rel (%p267) target = $region61
                $region58: #{alexnet_forward.9} parent=46 // loop_body
                  %v273 = vld [vmem:[%s271] sm:$0xf]
                  %274 = vst [vmem:[%s272] sm:$0xf] %v273
                  %v275 = vld [vmem:[%s271 + $0xc] sm:$0xf]
                  %276 = vst [vmem:[%s272 + $0x4] sm:$0xf] %v275
                  %v277 = vld [vmem:[%s271 + $0x18] sm:$0xf]
                  %278 = vst [vmem:[%s272 + $0x8] sm:$0xf] %v277
                  %v279 = vld [vmem:[%s271 + $0x24] sm:$0xf]
                  %280 = vst [vmem:[%s272 + $0xc] sm:$0xf] %v279
                  %v281 = vld [vmem:[%s271 + $0x30] sm:$0xf]
                  %282 = vst [vmem:[%s272 + $0x10] sm:$0xf] %v281
                  %v283 = vld [vmem:[%s271 + $0x3c] sm:$0xf]
                  %284 = vst [vmem:[%s272 + $0x14] sm:$0xf] %v283
                  %v285 = vld [vmem:[%s271 + $0x48] sm:$0xf]
                  %286 = vst [vmem:[%s272 + $0x18] sm:$0xf] %v285
                  %v287 = vld [vmem:[%s271 + $0x54] sm:$0xf]
                  %288 = vst [vmem:[%s272 + $0x1c] sm:$0xf] %v287
                  %v289 = vld [vmem:[%s271 + $0x60] sm:$0xf]
                  %290 = vst [vmem:[%s272 + $0x20] sm:$0xf] %v289
                  %v291 = vld [vmem:[%s271 + $0x6c] sm:$0xf]
                  %292 = vst [vmem:[%s272 + $0x24] sm:$0xf] %v291
                  %v293 = vld [vmem:[%s271 + $0x78] sm:$0xf]
                  %294 = vst [vmem:[%s272 + $0x28] sm:$0xf] %v293
                  %v295 = vld [vmem:[%s271 + $0x84] sm:$0xf]
                  %296 = vst [vmem:[%s272 + $0x2c] sm:$0xf] %v295
                  %v297 = vld [vmem:[%s271 + $0x90] sm:$0xf]
                  %298 = vst [vmem:[%s272 + $0x30] sm:$0xf] %v297
                  %v299 = vld [vmem:[%s271 + $0x9c] sm:$0xf]
                  %300 = vst [vmem:[%s272 + $0x34] sm:$0xf] %v299
                  %v301 = vld [vmem:[%s271 + $0xa8] sm:$0xf]
                  %302 = vst [vmem:[%s272 + $0x38] sm:$0xf] %v301
                  %v303 = vld [vmem:[%s271 + $0xb4] sm:$0xf]
                  %304 = vst [vmem:[%s272 + $0x3c] sm:$0xf] %v303
                  %v305 = vld [vmem:[%s271 + $0xc0] sm:$0xf]
                  %306 = vst [vmem:[%s272 + $0x40] sm:$0xf] %v305
                  %v307 = vld [vmem:[%s271 + $0xcc] sm:$0xf]
                  %308 = vst [vmem:[%s272 + $0x44] sm:$0xf] %v307
                  %v309 = vld [vmem:[%s271 + $0xd8] sm:$0xf]
                  %310 = vst [vmem:[%s272 + $0x48] sm:$0xf] %v309
                  %v311 = vld [vmem:[%s271 + $0xe4] sm:$0xf]
                  %312 = vst [vmem:[%s272 + $0x4c] sm:$0xf] %v311
                  %v313 = vld [vmem:[%s271 + $0xf0] sm:$0xf]
                  %314 = vst [vmem:[%s272 + $0x50] sm:$0xf] %v313
                  %v315 = vld [vmem:[%s271 + $0xfc] sm:$0xf]
                  %316 = vst [vmem:[%s272 + $0x54] sm:$0xf] %v315
                  %v317 = vld [vmem:[%s271 + $0x108] sm:$0xf]
                  %318 = vst [vmem:[%s272 + $0x58] sm:$0xf] %v317
                  %v319 = vld [vmem:[%s271 + $0x114] sm:$0xf]
                  %320 = vst [vmem:[%s272 + $0x5c] sm:$0xf] %v319
                  %v321 = vld [vmem:[%s271 + $0x120] sm:$0xf]
                  %322 = vst [vmem:[%s272 + $0x60] sm:$0xf] %v321
                  %v323 = vld [vmem:[%s271 + $0x12c] sm:$0xf]
                  %324 = vst [vmem:[%s272 + $0x64] sm:$0xf] %v323
                  %v325 = vld [vmem:[%s271 + $0x138] sm:$0xf]
                  %326 = vst [vmem:[%s272 + $0x68] sm:$0xf] %v325
                  %v327 = vld [vmem:[%s271 + $0x144] sm:$0xf]
                  %328 = vst [vmem:[%s272 + $0x6c] sm:$0xf] %v327
                  %v329 = vld [vmem:[%s271 + $0x150] sm:$0xf]
                  %330 = vst [vmem:[%s272 + $0x70] sm:$0xf] %v329
                  %v331 = vld [vmem:[%s271 + $0x15c] sm:$0xf]
                  %332 = vst [vmem:[%s272 + $0x74] sm:$0xf] %v331
                  %v333 = vld [vmem:[%s271 + $0x168] sm:$0xf]
                  %334 = vst [vmem:[%s272 + $0x78] sm:$0xf] %v333
                  %v335 = vld [vmem:[%s271 + $0x174] sm:$0xf]
                  %336 = vst [vmem:[%s272 + $0x7c] sm:$0xf] %v335
                $region59: #{alexnet_forward.9} parent=46 // loop_footer
                  %s270 = sadd.s32 1, %s266
                $region60: #{alexnet_forward.9} parent=46 // loop_footer_branch
                  %265 = sbr.rel target = $region56
                $region61: #{alexnet_forward.9} parent=46 // loop_exit
                  _
              $region47: #{alexnet_forward.9} parent=31 // pred_fallthru
                _
            $region32: #{alexnet_forward.9} parent=27 // pred_fallthru
              _
            // Predicated region
            $region33: #{alexnet_forward.9} parent=27 // pred_check
              _
            $region34: #{alexnet_forward.9} parent=27 // pred_check_branch
              %180 = sbr.rel (0) target = $region36
            $region35: #{alexnet_forward.9} parent=27 // pred_region
              loop: start=0, step=1, limit=1
              $region37: #{alexnet_forward.9} parent=35 // loop_pre_header
                _
              $region38: #{alexnet_forward.9} parent=35 // loop_header
                %s183 = sphi 0, %s187
                %p184 = scmp.ge.s32.totalorder %s183, 1
                %s188 = sphi %s174, %s174
                %s189 = sphi %s169, %s169
              $region39: #{alexnet_forward.9} parent=35 // loop_header_branch
                %186 = sbr.rel (%p184) target = $region43
              $region40: #{alexnet_forward.9} parent=35 // loop_body
                %v190 = vld [vmem:[%s188] sm:$0xf]
                %191 = vst [vmem:[%s189] sm:$0xf] %v190
                %v192 = vld [vmem:[%s188 + $0xc] sm:$0xf]
                %193 = vst [vmem:[%s189 + $0x4] sm:$0xf] %v192
                %v194 = vld [vmem:[%s188 + $0x18] sm:$0xf]
                %195 = vst [vmem:[%s189 + $0x8] sm:$0xf] %v194
                %v196 = vld [vmem:[%s188 + $0x24] sm:$0xf]
                %197 = vst [vmem:[%s189 + $0xc] sm:$0xf] %v196
                %v198 = vld [vmem:[%s188 + $0x30] sm:$0xf]
                %199 = vst [vmem:[%s189 + $0x10] sm:$0xf] %v198
                %v200 = vld [vmem:[%s188 + $0x3c] sm:$0xf]
                %201 = vst [vmem:[%s189 + $0x14] sm:$0xf] %v200
                %v202 = vld [vmem:[%s188 + $0x48] sm:$0xf]
                %203 = vst [vmem:[%s189 + $0x18] sm:$0xf] %v202
                %v204 = vld [vmem:[%s188 + $0x54] sm:$0xf]
                %205 = vst [vmem:[%s189 + $0x1c] sm:$0xf] %v204
                %v206 = vld [vmem:[%s188 + $0x60] sm:$0xf]
                %207 = vst [vmem:[%s189 + $0x20] sm:$0xf] %v206
                %v208 = vld [vmem:[%s188 + $0x6c] sm:$0xf]
                %209 = vst [vmem:[%s189 + $0x24] sm:$0xf] %v208
                %v210 = vld [vmem:[%s188 + $0x78] sm:$0xf]
                %211 = vst [vmem:[%s189 + $0x28] sm:$0xf] %v210
                %v212 = vld [vmem:[%s188 + $0x84] sm:$0xf]
                %213 = vst [vmem:[%s189 + $0x2c] sm:$0xf] %v212
                %v214 = vld [vmem:[%s188 + $0x90] sm:$0xf]
                %215 = vst [vmem:[%s189 + $0x30] sm:$0xf] %v214
                %v216 = vld [vmem:[%s188 + $0x9c] sm:$0xf]
                %217 = vst [vmem:[%s189 + $0x34] sm:$0xf] %v216
                %v218 = vld [vmem:[%s188 + $0xa8] sm:$0xf]
                %219 = vst [vmem:[%s189 + $0x38] sm:$0xf] %v218
                %v220 = vld [vmem:[%s188 + $0xb4] sm:$0xf]
                %221 = vst [vmem:[%s189 + $0x3c] sm:$0xf] %v220
                %v222 = vld [vmem:[%s188 + $0xc0] sm:$0xf]
                %223 = vst [vmem:[%s189 + $0x40] sm:$0xf] %v222
                %v224 = vld [vmem:[%s188 + $0xcc] sm:$0xf]
                %225 = vst [vmem:[%s189 + $0x44] sm:$0xf] %v224
                %v226 = vld [vmem:[%s188 + $0xd8] sm:$0xf]
                %227 = vst [vmem:[%s189 + $0x48] sm:$0xf] %v226
                %v228 = vld [vmem:[%s188 + $0xe4] sm:$0xf]
                %229 = vst [vmem:[%s189 + $0x4c] sm:$0xf] %v228
                %v230 = vld [vmem:[%s188 + $0xf0] sm:$0xf]
                %231 = vst [vmem:[%s189 + $0x50] sm:$0xf] %v230
                %v232 = vld [vmem:[%s188 + $0xfc] sm:$0xf]
                %233 = vst [vmem:[%s189 + $0x54] sm:$0xf] %v232
                %v234 = vld [vmem:[%s188 + $0x108] sm:$0xf]
                %235 = vst [vmem:[%s189 + $0x58] sm:$0xf] %v234
                %v236 = vld [vmem:[%s188 + $0x114] sm:$0xf]
                %237 = vst [vmem:[%s189 + $0x5c] sm:$0xf] %v236
                %v238 = vld [vmem:[%s188 + $0x120] sm:$0xf]
                %239 = vst [vmem:[%s189 + $0x60] sm:$0xf] %v238
                %v240 = vld [vmem:[%s188 + $0x12c] sm:$0xf]
                %241 = vst [vmem:[%s189 + $0x64] sm:$0xf] %v240
                %v242 = vld [vmem:[%s188 + $0x138] sm:$0xf]
                %243 = vst [vmem:[%s189 + $0x68] sm:$0xf] %v242
                %v244 = vld [vmem:[%s188 + $0x144] sm:$0xf]
                %245 = vst [vmem:[%s189 + $0x6c] sm:$0xf] %v244
                %v246 = vld [vmem:[%s188 + $0x150] sm:$0xf]
                %247 = vst [vmem:[%s189 + $0x70] sm:$0xf] %v246
                %v248 = vld [vmem:[%s188 + $0x15c] sm:$0xf]
                %249 = vst [vmem:[%s189 + $0x74] sm:$0xf] %v248
                %v250 = vld [vmem:[%s188 + $0x168] sm:$0xf]
                %251 = vst [vmem:[%s189 + $0x78] sm:$0xf] %v250
                %v252 = vld [vmem:[%s188 + $0x174] sm:$0xf]
                %253 = vst [vmem:[%s189 + $0x7c] sm:$0xf] %v252
              $region41: #{alexnet_forward.9} parent=35 // loop_footer
                %s187 = sadd.s32 1, %s183
              $region42: #{alexnet_forward.9} parent=35 // loop_footer_branch
                %182 = sbr.rel target = $region38
              $region43: #{alexnet_forward.9} parent=35 // loop_exit
                _
            $region36: #{alexnet_forward.9} parent=27 // pred_fallthru
              _
          $region28: #{alexnet_forward.9} parent=23 // pred_fallthru
            _
          %337 = vnop
        $region24: #{alexnet_forward.9} parent=19 // pred_fallthru
          _
        // Predicated region
        $region62: #{alexnet_forward.9} parent=19 // pred_check
          %p338 = pneg %p78
        $region63: #{alexnet_forward.9} parent=19 // pred_check_branch
          %340 = sbr.rel (%p338) target = $region65
        $region64: #{alexnet_forward.9} parent=19 // pred_region
          %s341 = smul.u32 16, %s18
          %p342 = scmp.lt.s32.totalorder %s341, 47
          %s343 = scalar_select %p342, %s341, 47
          %p344 = scmp.lt.s32.totalorder %s17, 0
          %s345 = scalar_select %p344, %s17, 0
          %s346 = sadd.s32 %s345, %s343
          %s347 = smul.addr %s346, 4
          %s348 = scalar_lea.vmem %s1, %s347
          %s349 = smul.u32 16, %s18
        $region65: #{alexnet_forward.9} parent=19 // pred_fallthru
          _
      $region20: #{alexnet_forward.9} parent=5 // pred_fallthru
        _
      %p350 = scmp.le.s32.totalorder 1, %s9
      %p351 = scmp.lt.s32.totalorder %s9, 7
      %p352 = pnand %p350, %p351
      %p353 = pneg %p352
      // Predicated region
      $region66: #{alexnet_forward.9} parent=5 // pred_check
        _
      $region67: #{alexnet_forward.9} parent=5 // pred_check_branch
        %355 = sbr.rel (%p352) target = $region69
      $region68: #{alexnet_forward.9} parent=5 // pred_region
        %s356 = ssub.s32 %s9, 1
        %s357 = sand.u32 %s43, 1
        %s358 = sand.u32 %s43, 1
        %s359 = smul.addr %s358, 128
        %s360 = scalar_lea.vmem [#allocation3], %s359
        // Predicated region
        $region70: #{alexnet_forward.9} parent=68 // pred_check
          %p361 = pneg %p56
        $region71: #{alexnet_forward.9} parent=68 // pred_check_branch
          %363 = sbr.rel (%p361) target = $region73
        $region72: #{alexnet_forward.9} parent=68 // pred_region
          _
        $region73: #{alexnet_forward.9} parent=68 // pred_fallthru
          _
        %s364 = sand.u32 %s43, 1
        %s365 = sand.u32 %s43, 1
        %s366 = smul.addr %s365, 128
        %s367 = scalar_lea.vmem [#allocation3], %s366
        %p368 = pneg %p56
        %p369 = pneg %p53
        %s370 = smul.u32 16, %s21
        %p371 = scmp.lt.s32.totalorder %s370, 47
        %s372 = scalar_select %p371, %s370, 47
        %p373 = scmp.lt.s32.totalorder %s20, 0
        %s374 = scalar_select %p373, %s20, 0
        %s375 = sadd.s32 %s374, %s372
        %s376 = smul.addr %s375, 4
        %s377 = scalar_lea.vmem %s1, %s376
        %p378 = pneg %p84
        %p379 = pneg %p81
        %p380 = scmp.lt.s32.totalorder %s20, 0
        %s381 = scalar_select %p380, %s20, 0
        %s382 = scalar_lea.vmem %s2, %s381
        %p383 = pneg %p110
        %p384 = pneg %p107
        %p385 = pneg %p138
        %p386 = pneg %p135
        %s387 = smul.u32 32, %s19
        %p388 = scmp.lt.s32.totalorder %s387, 63
        %s389 = scalar_select %p388, %s387, 63
        %p390 = scmp.lt.s32.totalorder %s20, 0
        %s391 = scalar_select %p390, %s20, 0
        %s392 = sadd.s32 %s391, %s389
        %s393 = smul.addr %s392, 8
        %s394 = scalar_lea.vmem %s3, %s393
        %s395 = smul.u32 32, %s19
        %s396 = smul.u32 16, %s21
        %p397 = scmp.lt.s32.totalorder %s396, 47
        %s398 = scalar_select %p397, %s396, 47
        %p399 = scmp.lt.s32.totalorder %s20, 0
        %s400 = scalar_select %p399, %s20, 0
        %s401 = sadd.s32 %s400, %s398
        %s402 = smul.addr %s401, 4
        %s403 = scalar_lea.vmem %s1, %s402
        %s404 = smul.u32 16, %s21
        %p405 = scmp.lt.s32.totalorder %s20, 0
        %s406 = scalar_select %p405, %s20, 0
        %s407 = scalar_lea.vmem %s2, %s406
        %s408 = smul.u32 32, %s19
        %p409 = scmp.lt.s32.totalorder %s408, 63
        %s410 = scalar_select %p409, %s408, 63
        %p411 = scmp.lt.s32.totalorder %s20, 0
        %s412 = scalar_select %p411, %s20, 0
        %s413 = sadd.s32 %s412, %s410
        %s414 = smul.addr %s413, 8
        %s415 = scalar_lea.vmem %s3, %s414
        %s416 = smul.u32 32, %s19
        %p418 = scmp.eq.s32.totalorder %s21, 0
        // Predicated region
        $region74: #{alexnet_forward.9} parent=68 // pred_check
          %p419 = pneg %p418
        $region75: #{alexnet_forward.9} parent=68 // pred_check_branch
          %421 = sbr.rel (%p419) target = $region77
        $region76: #{alexnet_forward.9} parent=68 // pred_region
          %422 = vst [vmem:[#allocation2] sm:$0xff] 0.0
          %423 = vst [vmem:[#allocation2 + $0x8] sm:$0xff] 0.0
          %424 = vst [vmem:[#allocation2 + $0x10] sm:$0xff] 0.0
          %425 = vst [vmem:[#allocation2 + $0x18] sm:$0xff] 0.0
          %426 = vst [vmem:[#allocation2 + $0x20] sm:$0xff] 0.0
          %427 = vst [vmem:[#allocation2 + $0x28] sm:$0xff] 0.0
          %428 = vst [vmem:[#allocation2 + $0x30] sm:$0xff] 0.0
          %429 = vst [vmem:[#allocation2 + $0x38] sm:$0xff] 0.0
          %430 = vst [vmem:[#allocation2 + $0x40] sm:$0xff] 0.0
          %431 = vst [vmem:[#allocation2 + $0x48] sm:$0xff] 0.0
          %432 = vst [vmem:[#allocation2 + $0x50] sm:$0xff] 0.0
          %433 = vst [vmem:[#allocation2 + $0x58] sm:$0xff] 0.0
          %434 = vst [vmem:[#allocation2 + $0x60] sm:$0xff] 0.0
          %435 = vst [vmem:[#allocation2 + $0x68] sm:$0xff] 0.0
          %436 = vst [vmem:[#allocation2 + $0x70] sm:$0xff] 0.0
          %437 = vst [vmem:[#allocation2 + $0x78] sm:$0xff] 0.0
          %438 = vst [vmem:[#allocation2 + $0x80] sm:$0xff] 0.0
          %439 = vst [vmem:[#allocation2 + $0x88] sm:$0xff] 0.0
          %440 = vst [vmem:[#allocation2 + $0x90] sm:$0xff] 0.0
          %441 = vst [vmem:[#allocation2 + $0x98] sm:$0xff] 0.0
          %442 = vst [vmem:[#allocation2 + $0xa0] sm:$0xff] 0.0
          %443 = vst [vmem:[#allocation2 + $0xa8] sm:$0xff] 0.0
          %444 = vst [vmem:[#allocation2 + $0xb0] sm:$0xff] 0.0
          %445 = vst [vmem:[#allocation2 + $0xb8] sm:$0xff] 0.0
          %446 = vst [vmem:[#allocation2 + $0xc0] sm:$0xff] 0.0
          %447 = vst [vmem:[#allocation2 + $0xc8] sm:$0xff] 0.0
          %448 = vst [vmem:[#allocation2 + $0xd0] sm:$0xff] 0.0
          %449 = vst [vmem:[#allocation2 + $0xd8] sm:$0xff] 0.0
          %450 = vst [vmem:[#allocation2 + $0xe0] sm:$0xff] 0.0
          %451 = vst [vmem:[#allocation2 + $0xe8] sm:$0xff] 0.0
          %452 = vst [vmem:[#allocation2 + $0xf0] sm:$0xff] 0.0
          %453 = vst [vmem:[#allocation2 + $0xf8] sm:$0xff] 0.0
        $region77: #{alexnet_forward.9} parent=68 // pred_fallthru
          _
        %v454 = vld [vmem:[#allocation2] sm:$0xff]
        %v455 = vld [vmem:[#allocation2 + $0x8] sm:$0xff]
        %v456 = vld [vmem:[#allocation2 + $0x10] sm:$0xff]
        %v457 = vld [vmem:[#allocation2 + $0x18] sm:$0xff]
        %v458 = vld [vmem:[#allocation2 + $0x20] sm:$0xff]
        %v459 = vld [vmem:[#allocation2 + $0x28] sm:$0xff]
        %v460 = vld [vmem:[#allocation2 + $0x30] sm:$0xff]
        %v461 = vld [vmem:[#allocation2 + $0x38] sm:$0xff]
        %v462 = vld [vmem:[#allocation2 + $0x40] sm:$0xff]
        %v463 = vld [vmem:[#allocation2 + $0x48] sm:$0xff]
        %v464 = vld [vmem:[#allocation2 + $0x50] sm:$0xff]
        %v465 = vld [vmem:[#allocation2 + $0x58] sm:$0xff]
        %v466 = vld [vmem:[#allocation2 + $0x60] sm:$0xff]
        %v467 = vld [vmem:[#allocation2 + $0x68] sm:$0xff]
        %v468 = vld [vmem:[#allocation2 + $0x70] sm:$0xff]
        %v469 = vld [vmem:[#allocation2 + $0x78] sm:$0xff]
        %v470 = vld [vmem:[#allocation2 + $0x80] sm:$0xff]
        %v471 = vld [vmem:[#allocation2 + $0x88] sm:$0xff]
        %v472 = vld [vmem:[#allocation2 + $0x90] sm:$0xff]
        %v473 = vld [vmem:[#allocation2 + $0x98] sm:$0xff]
        %v474 = vld [vmem:[#allocation2 + $0xa0] sm:$0xff]
        %v475 = vld [vmem:[#allocation2 + $0xa8] sm:$0xff]
        %v476 = vld [vmem:[#allocation2 + $0xb0] sm:$0xff]
        %v477 = vld [vmem:[#allocation2 + $0xb8] sm:$0xff]
        %v478 = vld [vmem:[#allocation2 + $0xc0] sm:$0xff]
        %v479 = vld [vmem:[#allocation2 + $0xc8] sm:$0xff]
        %v480 = vld [vmem:[#allocation2 + $0xd0] sm:$0xff]
        %v481 = vld [vmem:[#allocation2 + $0xd8] sm:$0xff]
        %v482 = vld [vmem:[#allocation2 + $0xe0] sm:$0xff]
        %v483 = vld [vmem:[#allocation2 + $0xe8] sm:$0xff]
        %v484 = vld [vmem:[#allocation2 + $0xf0] sm:$0xff]
        %v485 = vld [vmem:[#allocation2 + $0xf8] sm:$0xff]
        %v486 = vld [vmem:[%s360] sm:$0xf]
        %v487 = vld [vmem:[%s360 + $0x4] sm:$0xf]
        %v488 = vld [vmem:[%s360 + $0x8] sm:$0xf]
        %v489 = vld [vmem:[%s360 + $0xc] sm:$0xf]
        %v490 = vld [vmem:[%s360 + $0x10] sm:$0xf]
        %v491 = vld [vmem:[%s360 + $0x14] sm:$0xf]
        %v492 = vld [vmem:[%s360 + $0x18] sm:$0xf]
        %v493 = vld [vmem:[%s360 + $0x1c] sm:$0xf]
        %v494 = vld [vmem:[%s360 + $0x20] sm:$0xf]
        %v495 = vld [vmem:[%s360 + $0x24] sm:$0xf]
        %v496 = vld [vmem:[%s360 + $0x28] sm:$0xf]
        %v497 = vld [vmem:[%s360 + $0x2c] sm:$0xf]
        %v498 = vld [vmem:[%s360 + $0x30] sm:$0xf]
        %v499 = vld [vmem:[%s360 + $0x34] sm:$0xf]
        %v500 = vld [vmem:[%s360 + $0x38] sm:$0xf]
        %v501 = vld [vmem:[%s360 + $0x3c] sm:$0xf]
        %v502 = vld [vmem:[%s360 + $0x40] sm:$0xf]
        %v503 = vld [vmem:[%s360 + $0x44] sm:$0xf]
        %v504 = vld [vmem:[%s360 + $0x48] sm:$0xf]
        %v505 = vld [vmem:[%s360 + $0x4c] sm:$0xf]
        %v506 = vld [vmem:[%s360 + $0x50] sm:$0xf]
        %v507 = vld [vmem:[%s360 + $0x54] sm:$0xf]
        %v508 = vld [vmem:[%s360 + $0x58] sm:$0xf]
        %v509 = vld [vmem:[%s360 + $0x5c] sm:$0xf]
        %v510 = vld [vmem:[%s360 + $0x60] sm:$0xf]
        %v511 = vld [vmem:[%s360 + $0x64] sm:$0xf]
        %v512 = vld [vmem:[%s360 + $0x68] sm:$0xf]
        %v513 = vld [vmem:[%s360 + $0x6c] sm:$0xf]
        %v514 = vld [vmem:[%s360 + $0x70] sm:$0xf]
        %v515 = vld [vmem:[%s360 + $0x74] sm:$0xf]
        %v516 = vld [vmem:[%s360 + $0x78] sm:$0xf]
        %v517 = vld [vmem:[%s360 + $0x7c] sm:$0xf]
        %v518 = vld [vmem:[%s403] sm:$0xf]
        %v519 = vld [vmem:[%s403 + $0x4] sm:$0xf]
        %v520 = vld [vmem:[%s403 + $0x8] sm:$0xf]
        %v521 = vld [vmem:[%s403 + $0xc] sm:$0xf]
        %v522 = vld [vmem:[%s403 + $0x10] sm:$0xf]
        %v523 = vld [vmem:[%s403 + $0x14] sm:$0xf]
        %v524 = vld [vmem:[%s403 + $0x18] sm:$0xf]
        %v525 = vld [vmem:[%s403 + $0x1c] sm:$0xf]
        %v526 = vld [vmem:[%s403 + $0x20] sm:$0xf]
        %v527 = vld [vmem:[%s403 + $0x24] sm:$0xf]
        %v528 = vld [vmem:[%s403 + $0x28] sm:$0xf]
        %v529 = vld [vmem:[%s403 + $0x2c] sm:$0xf]
        %v530 = vld [vmem:[%s403 + $0x30] sm:$0xf]
        %v531 = vld [vmem:[%s403 + $0x34] sm:$0xf]
        %v532 = vld [vmem:[%s403 + $0x38] sm:$0xf]
        %v533 = vld [vmem:[%s403 + $0x3c] sm:$0xf]
        %v566 = vunpack.c.l.b16 %v486
        %v567 = vunpack.c.l.b16 %v487
        %v568 = vunpack.c.l.b16 %v488
        %v569 = vunpack.c.l.b16 %v489
        %v570 = vunpack.c.l.b16 %v490
        %v571 = vunpack.c.l.b16 %v491
        %v572 = vunpack.c.l.b16 %v492
        %v573 = vunpack.c.l.b16 %v493
        %v574 = vunpack.c.l.b16 %v494
        %v575 = vunpack.c.l.b16 %v495
        %v576 = vunpack.c.l.b16 %v496
        %v577 = vunpack.c.l.b16 %v497
        %v578 = vunpack.c.l.b16 %v498
        %v579 = vunpack.c.l.b16 %v499
        %v580 = vunpack.c.l.b16 %v500
        %v581 = vunpack.c.l.b16 %v501
        %v582 = vunpack.c.l.b16 %v502
        %v583 = vunpack.c.l.b16 %v503
        %v584 = vunpack.c.l.b16 %v504
        %v585 = vunpack.c.l.b16 %v505
        %v586 = vunpack.c.l.b16 %v506
        %v587 = vunpack.c.l.b16 %v507
        %v588 = vunpack.c.l.b16 %v508
        %v589 = vunpack.c.l.b16 %v509
        %v590 = vunpack.c.l.b16 %v510
        %v591 = vunpack.c.l.b16 %v511
        %v592 = vunpack.c.l.b16 %v512
        %v593 = vunpack.c.l.b16 %v513
        %v594 = vunpack.c.l.b16 %v514
        %v595 = vunpack.c.l.b16 %v515
        %v596 = vunpack.c.l.b16 %v516
        %v597 = vunpack.c.l.b16 %v517
        %v598 = vpack.c.b16 %v567, %v566
        %v599 = vpack.c.b16 %v569, %v568
        %v600 = vpack.c.b16 %v571, %v570
        %v601 = vpack.c.b16 %v573, %v572
        %v602 = vpack.c.b16 %v575, %v574
        %v603 = vpack.c.b16 %v577, %v576
        %v604 = vpack.c.b16 %v579, %v578
        %v605 = vpack.c.b16 %v581, %v580
        %v606 = vpack.c.b16 %v583, %v582
        %v607 = vpack.c.b16 %v585, %v584
        %v608 = vpack.c.b16 %v587, %v586
        %v609 = vpack.c.b16 %v589, %v588
        %v610 = vpack.c.b16 %v591, %v590
        %v611 = vpack.c.b16 %v593, %v592
        %v612 = vpack.c.b16 %v595, %v594
        %v613 = vpack.c.b16 %v597, %v596
        %v646 = vunpack.c.l.b16 %v518
        %v647 = vunpack.c.l.b16 %v519
        %v648 = vunpack.c.l.b16 %v520
        %v649 = vunpack.c.l.b16 %v521
        %v650 = vunpack.c.l.b16 %v522
        %v651 = vunpack.c.l.b16 %v523
        %v652 = vunpack.c.l.b16 %v524
        %v653 = vunpack.c.l.b16 %v525
        %v654 = vunpack.c.l.b16 %v526
        %v655 = vunpack.c.l.b16 %v527
        %v656 = vunpack.c.l.b16 %v528
        %v657 = vunpack.c.l.b16 %v529
        %v658 = vunpack.c.l.b16 %v530
        %v659 = vunpack.c.l.b16 %v531
        %v660 = vunpack.c.l.b16 %v532
        %v661 = vunpack.c.l.b16 %v533
        %v662 = vpack.c.b16 %v647, %v646
        %v663 = vpack.c.b16 %v649, %v648
        %v664 = vpack.c.b16 %v651, %v650
        %v665 = vpack.c.b16 %v653, %v652
        %v666 = vpack.c.b16 %v655, %v654
        %v667 = vpack.c.b16 %v657, %v656
        %v668 = vpack.c.b16 %v659, %v658
        %v669 = vpack.c.b16 %v661, %v660
        %678 = vmatprep.subr.bf16.mxu0 0
        %679 = vmatpush1.bf16.msra.mxu0 %v662
        %680 = vmatprep.subr.bf16.mxu0 0
        %681 = vmatpush1.bf16.msra.mxu0 %v663
        %682 = vmatprep.subr.bf16.mxu0 0
        %683 = vmatpush1.bf16.msra.mxu0 %v664
        %684 = vmatprep.subr.bf16.mxu0 0
        %685 = vmatpush1.bf16.msra.mxu0 %v665
        %686 = vmatprep.subr.bf16.mxu0 0
        %687 = vmatpush1.bf16.msra.mxu0 %v666
        %688 = vmatprep.subr.bf16.mxu0 0
        %689 = vmatpush1.bf16.msra.mxu0 %v667
        %690 = vmatprep.subr.bf16.mxu0 0
        %691 = vmatpush1.bf16.msra.mxu0 %v668
        %692 = vmatprep.subr.bf16.mxu0 0
        %693 = vmatpush1.bf16.msra.mxu0 %v669
        %694 = vmatprep.subr.bf16.mxu0 0
        %695 = vmatpush1.bf16.msra.mxu0 0
        %696 = vmatprep.subr.bf16.mxu0 0
        %697 = vmatpush1.bf16.msra.mxu0 0
        %698 = vmatprep.subr.bf16.mxu0 0
        %699 = vmatpush1.bf16.msra.mxu0 0
        %700 = vmatprep.subr.bf16.mxu0 0
        %701 = vmatpush1.bf16.msra.mxu0 0
        %702 = vmatprep.subr.bf16.mxu0 0
        %703 = vmatpush1.bf16.msra.mxu0 0
        %704 = vmatprep.subr.bf16.mxu0 0
        %705 = vmatpush1.bf16.msra.mxu0 0
        %706 = vmatprep.subr.bf16.mxu0 0
        %707 = vmatpush1.bf16.msra.mxu0 0
        %708 = vmatprep.subr.bf16.mxu0 0
        %709 = vmatpush1.bf16.msra.mxu0 0
        %710 = vmatprep.mubr.bf16.mxu0 0
        %711 = vmatmul.mubr.bf16.gmra.mrb[0].mxu0 %v598
        %v712 = vpop.f32.mrb[0].mxu0
        %v713 = vadd.f32 0.0, %v712
        %v714 = vpop.f32.mrb[0].mxu0
        %v715 = vpop.f32.mrb[0].mxu0
        %v716 = vadd.f32 0.0, %v715
        %v717 = vpop.f32.mrb[0].mxu0
        %718 = vmatprep.mubr.bf16.mxu0 0
        %719 = vmatmul.mubr.bf16.gmra.mrb[0].mxu0 %v599
        %v720 = vpop.f32.mrb[0].mxu0
        %v721 = vadd.f32 0.0, %v720
        %v722 = vpop.f32.mrb[0].mxu0
        %v723 = vpop.f32.mrb[0].mxu0
        %v724 = vadd.f32 0.0, %v723
        %v725 = vpop.f32.mrb[0].mxu0
        %726 = vmatprep.mubr.bf16.mxu0 0
        %727 = vmatmul.mubr.bf16.gmra.mrb[0].mxu0 %v600
        %v728 = vpop.f32.mrb[0].mxu0
        %v729 = vadd.f32 0.0, %v728
        %v730 = vpop.f32.mrb[0].mxu0
        %v731 = vpop.f32.mrb[0].mxu0
        %v732 = vadd.f32 0.0, %v731
        %v733 = vpop.f32.mrb[0].mxu0
        %734 = vmatprep.mubr.bf16.mxu0 0
        %735 = vmatmul.mubr.bf16.gmra.mrb[0].mxu0 %v601
        %v736 = vpop.f32.mrb[0].mxu0
        %v737 = vadd.f32 0.0, %v736
        %v738 = vpop.f32.mrb[0].mxu0
        %v739 = vpop.f32.mrb[0].mxu0
        %v740 = vadd.f32 0.0, %v739
        %v741 = vpop.f32.mrb[0].mxu0
        %742 = vmatprep.mubr.bf16.mxu0 0
        %743 = vmatmul.mubr.bf16.gmra.mrb[0].mxu0 %v602
        %v744 = vpop.f32.mrb[0].mxu0
        %v745 = vadd.f32 0.0, %v744
        %v746 = vpop.f32.mrb[0].mxu0
        %v747 = vpop.f32.mrb[0].mxu0
        %v748 = vadd.f32 0.0, %v747
        %v749 = vpop.f32.mrb[0].mxu0
        %750 = vmatprep.mubr.bf16.mxu0 0
        %751 = vmatmul.mubr.bf16.gmra.mrb[0].mxu0 %v603
        %v752 = vpop.f32.mrb[0].mxu0
        %v753 = vadd.f32 0.0, %v752
        %v754 = vpop.f32.mrb[0].mxu0
        %v755 = vpop.f32.mrb[0].mxu0
        %v756 = vadd.f32 0.0, %v755
        %v757 = vpop.f32.mrb[0].mxu0
        %758 = vmatprep.mubr.bf16.mxu0 0
        %759 = vmatmul.mubr.bf16.gmra.mrb[0].mxu0 %v604
        %v760 = vpop.f32.mrb[0].mxu0
        %v761 = vadd.f32 0.0, %v760
        %v762 = vpop.f32.mrb[0].mxu0
        %v763 = vpop.f32.mrb[0].mxu0
        %v764 = vadd.f32 0.0, %v763
        %v765 = vpop.f32.mrb[0].mxu0
        %766 = vmatprep.mubr.bf16.mxu0 0
        %767 = vmatmul.mubr.bf16.gmra.mrb[0].mxu0 %v605
        %v768 = vpop.f32.mrb[0].mxu0
        %v769 = vadd.f32 0.0, %v768
        %v770 = vpop.f32.mrb[0].mxu0
        %v771 = vpop.f32.mrb[0].mxu0
        %v772 = vadd.f32 0.0, %v771
        %v773 = vpop.f32.mrb[0].mxu0
        %774 = vmatprep.mubr.bf16.mxu0 0
        %775 = vmatmul.mubr.bf16.gmra.mrb[0].mxu0 %v606
        %v776 = vpop.f32.mrb[0].mxu0
        %v777 = vadd.f32 0.0, %v776
        %v778 = vpop.f32.mrb[0].mxu0
        %v779 = vpop.f32.mrb[0].mxu0
        %v780 = vadd.f32 0.0, %v779
        %v781 = vpop.f32.mrb[0].mxu0
        %782 = vmatprep.mubr.bf16.mxu0 0
        %783 = vmatmul.mubr.bf16.gmra.mrb[0].mxu0 %v607
        %v784 = vpop.f32.mrb[0].mxu0
        %v785 = vadd.f32 0.0, %v784
        %v786 = vpop.f32.mrb[0].mxu0
        %v787 = vpop.f32.mrb[0].mxu0
        %v788 = vadd.f32 0.0, %v787
        %v789 = vpop.f32.mrb[0].mxu0
        %790 = vmatprep.mubr.bf16.mxu0 0
        %791 = vmatmul.mubr.bf16.gmra.mrb[0].mxu0 %v608
        %v792 = vpop.f32.mrb[0].mxu0
        %v793 = vadd.f32 0.0, %v792
        %v794 = vpop.f32.mrb[0].mxu0
        %v795 = vpop.f32.mrb[0].mxu0
        %v796 = vadd.f32 0.0, %v795
        %v797 = vpop.f32.mrb[0].mxu0
        %798 = vmatprep.mubr.bf16.mxu0 0
        %799 = vmatmul.mubr.bf16.gmra.mrb[0].mxu0 %v609
        %v800 = vpop.f32.mrb[0].mxu0
        %v801 = vadd.f32 0.0, %v800
        %v802 = vpop.f32.mrb[0].mxu0
        %v803 = vpop.f32.mrb[0].mxu0
        %v804 = vadd.f32 0.0, %v803
        %v805 = vpop.f32.mrb[0].mxu0
        %806 = vmatprep.mubr.bf16.mxu0 0
        %807 = vmatmul.mubr.bf16.gmra.mrb[0].mxu0 %v610
        %v808 = vpop.f32.mrb[0].mxu0
        %v809 = vadd.f32 0.0, %v808
        %v810 = vpop.f32.mrb[0].mxu0
        %v811 = vpop.f32.mrb[0].mxu0
        %v812 = vadd.f32 0.0, %v811
        %v813 = vpop.f32.mrb[0].mxu0
        %814 = vmatprep.mubr.bf16.mxu0 0
        %815 = vmatmul.mubr.bf16.gmra.mrb[0].mxu0 %v611
        %v816 = vpop.f32.mrb[0].mxu0
        %v817 = vadd.f32 0.0, %v816
        %v818 = vpop.f32.mrb[0].mxu0
        %v819 = vpop.f32.mrb[0].mxu0
        %v820 = vadd.f32 0.0, %v819
        %v821 = vpop.f32.mrb[0].mxu0
        %822 = vmatprep.mubr.bf16.mxu0 0
        %823 = vmatmul.mubr.bf16.gmra.mrb[0].mxu0 %v612
        %v824 = vpop.f32.mrb[0].mxu0
        %v825 = vadd.f32 0.0, %v824
        %v826 = vpop.f32.mrb[0].mxu0
        %v827 = vpop.f32.mrb[0].mxu0
        %v828 = vadd.f32 0.0, %v827
        %v829 = vpop.f32.mrb[0].mxu0
        %830 = vmatprep.mubr.bf16.mxu0 0
        %831 = vmatmul.mubr.bf16.gmra.mrb[0].mxu0 %v613
        %v832 = vpop.f32.mrb[0].mxu0
        %v833 = vadd.f32 0.0, %v832
        %v834 = vpop.f32.mrb[0].mxu0
        %v835 = vpop.f32.mrb[0].mxu0
        %v836 = vadd.f32 0.0, %v835
        %v837 = vpop.f32.mrb[0].mxu0
        %838 = vdwg.mxu0
        %v839 = vadd.f32 %v454, %v713
        %v840 = vadd.f32 %v455, %v716
        %v841 = vadd.f32 %v456, %v721
        %v842 = vadd.f32 %v457, %v724
        %v843 = vadd.f32 %v458, %v729
        %v844 = vadd.f32 %v459, %v732
        %v845 = vadd.f32 %v460, %v737
        %v846 = vadd.f32 %v461, %v740
        %v847 = vadd.f32 %v462, %v745
        %v848 = vadd.f32 %v463, %v748
        %v849 = vadd.f32 %v464, %v753
        %v850 = vadd.f32 %v465, %v756
        %v851 = vadd.f32 %v466, %v761
        %v852 = vadd.f32 %v467, %v764
        %v853 = vadd.f32 %v468, %v769
        %v854 = vadd.f32 %v469, %v772
        %v855 = vadd.f32 %v470, %v777
        %v856 = vadd.f32 %v471, %v780
        %v857 = vadd.f32 %v472, %v785
        %v858 = vadd.f32 %v473, %v788
        %v859 = vadd.f32 %v474, %v793
        %v860 = vadd.f32 %v475, %v796
        %v861 = vadd.f32 %v476, %v801
        %v862 = vadd.f32 %v477, %v804
        %v863 = vadd.f32 %v478, %v809
        %v864 = vadd.f32 %v479, %v812
        %v865 = vadd.f32 %v480, %v817
        %v866 = vadd.f32 %v481, %v820
        %v867 = vadd.f32 %v482, %v825
        %v868 = vadd.f32 %v483, %v828
        %v869 = vadd.f32 %v484, %v833
        %v870 = vadd.f32 %v485, %v836
        %871 = vst [vmem:[#allocation2] sm:$0xff] %v839
        %872 = vst [vmem:[#allocation2 + $0x8] sm:$0xff] %v840
        %873 = vst [vmem:[#allocation2 + $0x10] sm:$0xff] %v841
        %874 = vst [vmem:[#allocation2 + $0x18] sm:$0xff] %v842
        %875 = vst [vmem:[#allocation2 + $0x20] sm:$0xff] %v843
        %876 = vst [vmem:[#allocation2 + $0x28] sm:$0xff] %v844
        %877 = vst [vmem:[#allocation2 + $0x30] sm:$0xff] %v845
        %878 = vst [vmem:[#allocation2 + $0x38] sm:$0xff] %v846
        %879 = vst [vmem:[#allocation2 + $0x40] sm:$0xff] %v847
        %880 = vst [vmem:[#allocation2 + $0x48] sm:$0xff] %v848
        %881 = vst [vmem:[#allocation2 + $0x50] sm:$0xff] %v849
        %882 = vst [vmem:[#allocation2 + $0x58] sm:$0xff] %v850
        %883 = vst [vmem:[#allocation2 + $0x60] sm:$0xff] %v851
        %884 = vst [vmem:[#allocation2 + $0x68] sm:$0xff] %v852
        %885 = vst [vmem:[#allocation2 + $0x70] sm:$0xff] %v853
        %886 = vst [vmem:[#allocation2 + $0x78] sm:$0xff] %v854
        %887 = vst [vmem:[#allocation2 + $0x80] sm:$0xff] %v855
        %888 = vst [vmem:[#allocation2 + $0x88] sm:$0xff] %v856
        %889 = vst [vmem:[#allocation2 + $0x90] sm:$0xff] %v857
        %890 = vst [vmem:[#allocation2 + $0x98] sm:$0xff] %v858
        %891 = vst [vmem:[#allocation2 + $0xa0] sm:$0xff] %v859
        %892 = vst [vmem:[#allocation2 + $0xa8] sm:$0xff] %v860
        %893 = vst [vmem:[#allocation2 + $0xb0] sm:$0xff] %v861
        %894 = vst [vmem:[#allocation2 + $0xb8] sm:$0xff] %v862
        %895 = vst [vmem:[#allocation2 + $0xc0] sm:$0xff] %v863
        %896 = vst [vmem:[#allocation2 + $0xc8] sm:$0xff] %v864
        %897 = vst [vmem:[#allocation2 + $0xd0] sm:$0xff] %v865
        %898 = vst [vmem:[#allocation2 + $0xd8] sm:$0xff] %v866
        %899 = vst [vmem:[#allocation2 + $0xe0] sm:$0xff] %v867
        %900 = vst [vmem:[#allocation2 + $0xe8] sm:$0xff] %v868
        %901 = vst [vmem:[#allocation2 + $0xf0] sm:$0xff] %v869
        %902 = vst [vmem:[#allocation2 + $0xf8] sm:$0xff] %v870
        %p903 = scmp.eq.s32.totalorder %s21, 2
        // Predicated region
        $region78: #{alexnet_forward.9} parent=68 // pred_check
          %p904 = pneg %p903
        $region79: #{alexnet_forward.9} parent=68 // pred_check_branch
          %906 = sbr.rel (%p904) target = $region81
        $region80: #{alexnet_forward.9} parent=68 // pred_region
          %v907 = vld [vmem:[#allocation2] sm:$0xff]
          %v908 = vld [vmem:[#allocation2 + $0x8] sm:$0xff]
          %v909 = vld [vmem:[#allocation2 + $0x10] sm:$0xff]
          %v910 = vld [vmem:[#allocation2 + $0x18] sm:$0xff]
          %v911 = vld [vmem:[#allocation2 + $0x20] sm:$0xff]
          %v912 = vld [vmem:[#allocation2 + $0x28] sm:$0xff]
          %v913 = vld [vmem:[#allocation2 + $0x30] sm:$0xff]
          %v914 = vld [vmem:[#allocation2 + $0x38] sm:$0xff]
          %v915 = vld [vmem:[#allocation2 + $0x40] sm:$0xff]
          %v916 = vld [vmem:[#allocation2 + $0x48] sm:$0xff]
          %v917 = vld [vmem:[#allocation2 + $0x50] sm:$0xff]
          %v918 = vld [vmem:[#allocation2 + $0x58] sm:$0xff]
          %v919 = vld [vmem:[#allocation2 + $0x60] sm:$0xff]
          %v920 = vld [vmem:[#allocation2 + $0x68] sm:$0xff]
          %v921 = vld [vmem:[#allocation2 + $0x70] sm:$0xff]
          %v922 = vld [vmem:[#allocation2 + $0x78] sm:$0xff]
          %v923 = vld [vmem:[#allocation2 + $0x80] sm:$0xff]
          %v924 = vld [vmem:[#allocation2 + $0x88] sm:$0xff]
          %v925 = vld [vmem:[#allocation2 + $0x90] sm:$0xff]
          %v926 = vld [vmem:[#allocation2 + $0x98] sm:$0xff]
          %v927 = vld [vmem:[#allocation2 + $0xa0] sm:$0xff]
          %v928 = vld [vmem:[#allocation2 + $0xa8] sm:$0xff]
          %v929 = vld [vmem:[#allocation2 + $0xb0] sm:$0xff]
          %v930 = vld [vmem:[#allocation2 + $0xb8] sm:$0xff]
          %v931 = vld [vmem:[#allocation2 + $0xc0] sm:$0xff]
          %v932 = vld [vmem:[#allocation2 + $0xc8] sm:$0xff]
          %v933 = vld [vmem:[#allocation2 + $0xd0] sm:$0xff]
          %v934 = vld [vmem:[#allocation2 + $0xd8] sm:$0xff]
          %v935 = vld [vmem:[#allocation2 + $0xe0] sm:$0xff]
          %v936 = vld [vmem:[#allocation2 + $0xe8] sm:$0xff]
          %v937 = vld [vmem:[#allocation2 + $0xf0] sm:$0xff]
          %v938 = vld [vmem:[#allocation2 + $0xf8] sm:$0xff]
          %v939 = vld [vmem:[%s407] sm:$0x1]
          %v941 = vlaneseq
          %v942 = vshrl.u32 %v941, 7
          %v943 = vsub.s32 0, %v942
          %v944 = vrot.slane %v939, %v943
          %v946 = vadd.f32 %v907, %v944
          %v947 = vadd.f32 %v908, %v944
          %v948 = vadd.f32 %v909, %v944
          %v949 = vadd.f32 %v910, %v944
          %v950 = vadd.f32 %v911, %v944
          %v951 = vadd.f32 %v912, %v944
          %v952 = vadd.f32 %v913, %v944
          %v953 = vadd.f32 %v914, %v944
          %v954 = vadd.f32 %v915, %v944
          %v955 = vadd.f32 %v916, %v944
          %v956 = vadd.f32 %v917, %v944
          %v957 = vadd.f32 %v918, %v944
          %v958 = vadd.f32 %v919, %v944
          %v959 = vadd.f32 %v920, %v944
          %v960 = vadd.f32 %v921, %v944
          %v961 = vadd.f32 %v922, %v944
          %v962 = vadd.f32 %v923, %v944
          %v963 = vadd.f32 %v924, %v944
          %v964 = vadd.f32 %v925, %v944
          %v965 = vadd.f32 %v926, %v944
          %v966 = vadd.f32 %v927, %v944
          %v967 = vadd.f32 %v928, %v944
          %v968 = vadd.f32 %v929, %v944
          %v969 = vadd.f32 %v930, %v944
          %v970 = vadd.f32 %v931, %v944
          %v971 = vadd.f32 %v932, %v944
          %v972 = vadd.f32 %v933, %v944
          %v973 = vadd.f32 %v934, %v944
          %v974 = vadd.f32 %v935, %v944
          %v975 = vadd.f32 %v936, %v944
          %v976 = vadd.f32 %v937, %v944
          %v977 = vadd.f32 %v938, %v944
          %v978 = vmax.f32 %v946, 0.0
          %v979 = vmax.f32 %v947, 0.0
          %v980 = vmax.f32 %v948, 0.0
          %v981 = vmax.f32 %v949, 0.0
          %v982 = vmax.f32 %v950, 0.0
          %v983 = vmax.f32 %v951, 0.0
          %v984 = vmax.f32 %v952, 0.0
          %v985 = vmax.f32 %v953, 0.0
          %v986 = vmax.f32 %v954, 0.0
          %v987 = vmax.f32 %v955, 0.0
          %v988 = vmax.f32 %v956, 0.0
          %v989 = vmax.f32 %v957, 0.0
          %v990 = vmax.f32 %v958, 0.0
          %v991 = vmax.f32 %v959, 0.0
          %v992 = vmax.f32 %v960, 0.0
          %v993 = vmax.f32 %v961, 0.0
          %v994 = vmax.f32 %v962, 0.0
          %v995 = vmax.f32 %v963, 0.0
          %v996 = vmax.f32 %v964, 0.0
          %v997 = vmax.f32 %v965, 0.0
          %v998 = vmax.f32 %v966, 0.0
          %v999 = vmax.f32 %v967, 0.0
          %v1000 = vmax.f32 %v968, 0.0
          %v1001 = vmax.f32 %v969, 0.0
          %v1002 = vmax.f32 %v970, 0.0
          %v1003 = vmax.f32 %v971, 0.0
          %v1004 = vmax.f32 %v972, 0.0
          %v1005 = vmax.f32 %v973, 0.0
          %v1006 = vmax.f32 %v974, 0.0
          %v1007 = vmax.f32 %v975, 0.0
          %v1008 = vmax.f32 %v976, 0.0
          %v1009 = vmax.f32 %v977, 0.0
          %1010 = vst [vmem:[%s415] sm:$0xff] %v978
          %1011 = vst [vmem:[%s415 + $0x8] sm:$0xff] %v979
          %1012 = vst [vmem:[%s415 + $0x10] sm:$0xff] %v980
          %1013 = vst [vmem:[%s415 + $0x18] sm:$0xff] %v981
          %1014 = vst [vmem:[%s415 + $0x20] sm:$0xff] %v982
          %1015 = vst [vmem:[%s415 + $0x28] sm:$0xff] %v983
          %1016 = vst [vmem:[%s415 + $0x30] sm:$0xff] %v984
          %1017 = vst [vmem:[%s415 + $0x38] sm:$0xff] %v985
          %1018 = vst [vmem:[%s415 + $0x40] sm:$0xff] %v986
          %1019 = vst [vmem:[%s415 + $0x48] sm:$0xff] %v987
          %1020 = vst [vmem:[%s415 + $0x50] sm:$0xff] %v988
          %1021 = vst [vmem:[%s415 + $0x58] sm:$0xff] %v989
          %1022 = vst [vmem:[%s415 + $0x60] sm:$0xff] %v990
          %1023 = vst [vmem:[%s415 + $0x68] sm:$0xff] %v991
          %1024 = vst [vmem:[%s415 + $0x70] sm:$0xff] %v992
          %1025 = vst [vmem:[%s415 + $0x78] sm:$0xff] %v993
          %1026 = vst [vmem:[%s415 + $0x80] sm:$0xff] %v994
          %1027 = vst [vmem:[%s415 + $0x88] sm:$0xff] %v995
          %1028 = vst [vmem:[%s415 + $0x90] sm:$0xff] %v996
          %1029 = vst [vmem:[%s415 + $0x98] sm:$0xff] %v997
          %1030 = vst [vmem:[%s415 + $0xa0] sm:$0xff] %v998
          %1031 = vst [vmem:[%s415 + $0xa8] sm:$0xff] %v999
          %1032 = vst [vmem:[%s415 + $0xb0] sm:$0xff] %v1000
          %1033 = vst [vmem:[%s415 + $0xb8] sm:$0xff] %v1001
          %1034 = vst [vmem:[%s415 + $0xc0] sm:$0xff] %v1002
          %1035 = vst [vmem:[%s415 + $0xc8] sm:$0xff] %v1003
          %1036 = vst [vmem:[%s415 + $0xd0] sm:$0xff] %v1004
          %1037 = vst [vmem:[%s415 + $0xd8] sm:$0xff] %v1005
          %1038 = vst [vmem:[%s415 + $0xe0] sm:$0xff] %v1006
          %1039 = vst [vmem:[%s415 + $0xe8] sm:$0xff] %v1007
          %1040 = vst [vmem:[%s415 + $0xf0] sm:$0xff] %v1008
          %1041 = vst [vmem:[%s415 + $0xf8] sm:$0xff] %v1009
        $region81: #{alexnet_forward.9} parent=68 // pred_fallthru
          _
        %s1042 = smul.u32 32, %s19
        %p1043 = scmp.lt.s32.totalorder %s1042, 63
        %s1044 = scalar_select %p1043, %s1042, 63
        %p1045 = scmp.lt.s32.totalorder %s20, 0
        %s1046 = scalar_select %p1045, %s20, 0
        %s1047 = sadd.s32 %s1046, %s1044
        %s1048 = smul.addr %s1047, 8
        %s1049 = scalar_lea.vmem %s3, %s1048
        // Predicated region
        $region82: #{alexnet_forward.9} parent=68 // pred_check
          %p1050 = pneg %p135
        $region83: #{alexnet_forward.9} parent=68 // pred_check_branch
          %1052 = sbr.rel (%p1050) target = $region85
        $region84: #{alexnet_forward.9} parent=68 // pred_region
          %s1053 = smul.u32 32, %s19
        $region85: #{alexnet_forward.9} parent=68 // pred_fallthru
          _
      $region69: #{alexnet_forward.9} parent=5 // pred_fallthru
        _
      %p1054 = scmp.le.s32.totalorder 2, %s9
      // Predicated region
      $region86: #{alexnet_forward.9} parent=5 // pred_check
        %p1055 = pneg %p1054
      $region87: #{alexnet_forward.9} parent=5 // pred_check_branch
        %1057 = sbr.rel (%p1055) target = $region89
      $region88: #{alexnet_forward.9} parent=5 // pred_region
        %s1058 = ssub.s32 %s9, 2
        // Predicated region
        $region90: #{alexnet_forward.9} parent=88 // pred_check
          %p1059 = pneg %p141
        $region91: #{alexnet_forward.9} parent=88 // pred_check_branch
          %1061 = sbr.rel (%p1059) target = $region93
        $region92: #{alexnet_forward.9} parent=88 // pred_region
          %s1062 = smul.u32 32, %s22
          %p1063 = scmp.lt.s32.totalorder %s1062, 63
          %s1064 = scalar_select %p1063, %s1062, 63
          %p1065 = scmp.lt.s32.totalorder %s23, 0
          %s1066 = scalar_select %p1065, %s23, 0
          %s1067 = sadd.s32 %s1066, %s1064
          %s1068 = smul.addr %s1067, 8
          %s1069 = scalar_lea.vmem %s3, %s1068
        $region93: #{alexnet_forward.9} parent=88 // pred_fallthru
          _
      $region89: #{alexnet_forward.9} parent=5 // pred_fallthru
        _
    $region6: #{alexnet_forward.9} parent=1 // loop_footer
      %s13 = sadd.s32 1, %s9
    $region7: #{alexnet_forward.9} parent=1 // loop_footer_branch
      %8 = sbr.rel target = $region3
    $region8: #{alexnet_forward.9} parent=1 // loop_exit
      _

// kernel: alexnet_forward.10
$region0: #{alexnet_forward.10}
  #allocation0 [shape = 'u32[]', space=smem, size = 0x4, offset = 0x4, fixed_abs, tag = 'smem constant byte address 0x4 - core index']
  #allocation1 [shape = 'u32[144,128]{1,0:T(1,128)}', space=vmem, size = 0x12000, scoped, tag = 'internal scratch']
  %s0 = inlined_call_operand.vmem [shape: f32[112,128], index: 0, kind: input, shape index: {}]
  %s1 = inlined_call_operand.vmem [shape: f32[112,128], index: 1, kind: input, shape index: {}]
  %s2 = inlined_call_operand.vmem [shape: f32[112,128], index: 2, kind: input, shape index: {}]
  %s3 = inlined_call_operand.vmem [shape: f32[112,128], index: 3, kind: output, shape index: {}]
  %s4 = sld [smem:[#allocation0]]
  $region22: #{alexnet_forward.10} parent=0
    _
  %s6 = ssub.s32 1, %s4
  %s7 = scalar_select 0, %s6, %s4
  // Predicated region
  $region2: #{alexnet_forward.10} parent=0 // pred_check
    _
  $region3: #{alexnet_forward.10} parent=0 // pred_check_branch
    %9 = sbr.rel (0) target = $region5
  $region4: #{alexnet_forward.10} parent=0 // pred_region
    _
  $region5: #{alexnet_forward.10} parent=0 // pred_fallthru
    _
  // Predicated region
  $region6: #{alexnet_forward.10} parent=0 // pred_check
    _
  $region7: #{alexnet_forward.10} parent=0 // pred_check_branch
    %11 = sbr.rel (0) target = $region9
  $region8: #{alexnet_forward.10} parent=0 // pred_region
    _
  $region9: #{alexnet_forward.10} parent=0 // pred_fallthru
    _
  // Predicated region
  $region10: #{alexnet_forward.10} parent=0 // pred_check
    _
  $region11: #{alexnet_forward.10} parent=0 // pred_check_branch
    %13 = sbr.rel (0) target = $region13
  $region12: #{alexnet_forward.10} parent=0 // pred_region
    _
  $region13: #{alexnet_forward.10} parent=0 // pred_fallthru
    _
  %v14 = vld [vmem:[%s0] sm:$0xff]
  %v15 = vld [vmem:[%s0 + $0x8] sm:$0xff]
  %v16 = vld [vmem:[%s0 + $0x10] sm:$0xff]
  %v17 = vld [vmem:[%s0 + $0x18] sm:$0xff]
  %v18 = vld [vmem:[%s0 + $0x20] sm:$0xff]
  %v19 = vld [vmem:[%s0 + $0x28] sm:$0xff]
  %v20 = vld [vmem:[%s0 + $0x30] sm:$0xff]
  %v21 = vld [vmem:[%s0 + $0x38] sm:$0xff]
  %v22 = vld [vmem:[%s0 + $0x40] sm:$0xff]
  %v23 = vld [vmem:[%s0 + $0x48] sm:$0xff]
  %v24 = vld [vmem:[%s0 + $0x50] sm:$0xff]
  %v25 = vld [vmem:[%s0 + $0x58] sm:$0xff]
  %v26 = vld [vmem:[%s0 + $0x60] sm:$0xff]
  %v27 = vld [vmem:[%s0 + $0x68] sm:$0xff]
  %v28 = vld [vmem:[%s1] sm:$0xff]
  %v29 = vld [vmem:[%s1 + $0x8] sm:$0xff]
  %v30 = vld [vmem:[%s1 + $0x10] sm:$0xff]
  %v31 = vld [vmem:[%s1 + $0x18] sm:$0xff]
  %v32 = vld [vmem:[%s1 + $0x20] sm:$0xff]
  %v33 = vld [vmem:[%s1 + $0x28] sm:$0xff]
  %v34 = vld [vmem:[%s1 + $0x30] sm:$0xff]
  %v35 = vld [vmem:[%s1 + $0x38] sm:$0xff]
  %v36 = vld [vmem:[%s1 + $0x40] sm:$0xff]
  %v37 = vld [vmem:[%s1 + $0x48] sm:$0xff]
  %v38 = vld [vmem:[%s1 + $0x50] sm:$0xff]
  %v39 = vld [vmem:[%s1 + $0x58] sm:$0xff]
  %v40 = vld [vmem:[%s1 + $0x60] sm:$0xff]
  %v41 = vld [vmem:[%s1 + $0x68] sm:$0xff]
  %v42 = vmax.f32 %v14, %v28
  %v43 = vmax.f32 %v15, %v29
  %v44 = vmax.f32 %v16, %v30
  %v45 = vmax.f32 %v17, %v31
  %v46 = vmax.f32 %v18, %v32
  %v47 = vmax.f32 %v19, %v33
  %v48 = vmax.f32 %v20, %v34
  %v49 = vmax.f32 %v21, %v35
  %v50 = vmax.f32 %v22, %v36
  %v51 = vmax.f32 %v23, %v37
  %v52 = vmax.f32 %v24, %v38
  %v53 = vmax.f32 %v25, %v39
  %v54 = vmax.f32 %v26, %v40
  %v55 = vmax.f32 %v27, %v41
  %v56 = vld [vmem:[%s2] sm:$0xff]
  %v57 = vld [vmem:[%s2 + $0x8] sm:$0xff]
  %v58 = vld [vmem:[%s2 + $0x10] sm:$0xff]
  %v59 = vld [vmem:[%s2 + $0x18] sm:$0xff]
  %v60 = vld [vmem:[%s2 + $0x20] sm:$0xff]
  %v61 = vld [vmem:[%s2 + $0x28] sm:$0xff]
  %v62 = vld [vmem:[%s2 + $0x30] sm:$0xff]
  %v63 = vld [vmem:[%s2 + $0x38] sm:$0xff]
  %v64 = vld [vmem:[%s2 + $0x40] sm:$0xff]
  %v65 = vld [vmem:[%s2 + $0x48] sm:$0xff]
  %v66 = vld [vmem:[%s2 + $0x50] sm:$0xff]
  %v67 = vld [vmem:[%s2 + $0x58] sm:$0xff]
  %v68 = vld [vmem:[%s2 + $0x60] sm:$0xff]
  %v69 = vld [vmem:[%s2 + $0x68] sm:$0xff]
  %v70 = vmax.f32 %v42, %v56
  %v71 = vmax.f32 %v43, %v57
  %v72 = vmax.f32 %v44, %v58
  %v73 = vmax.f32 %v45, %v59
  %v74 = vmax.f32 %v46, %v60
  %v75 = vmax.f32 %v47, %v61
  %v76 = vmax.f32 %v48, %v62
  %v77 = vmax.f32 %v49, %v63
  %v78 = vmax.f32 %v50, %v64
  %v79 = vmax.f32 %v51, %v65
  %v80 = vmax.f32 %v52, %v66
  %v81 = vmax.f32 %v53, %v67
  %v82 = vmax.f32 %v54, %v68
  %v83 = vmax.f32 %v55, %v69
  %84 = vst [vmem:[%s3] sm:$0xff] %v70
  %85 = vst [vmem:[%s3 + $0x8] sm:$0xff] %v71
  %86 = vst [vmem:[%s3 + $0x10] sm:$0xff] %v72
  %87 = vst [vmem:[%s3 + $0x18] sm:$0xff] %v73
  %88 = vst [vmem:[%s3 + $0x20] sm:$0xff] %v74
  %89 = vst [vmem:[%s3 + $0x28] sm:$0xff] %v75
  %90 = vst [vmem:[%s3 + $0x30] sm:$0xff] %v76
  %91 = vst [vmem:[%s3 + $0x38] sm:$0xff] %v77
  %92 = vst [vmem:[%s3 + $0x40] sm:$0xff] %v78
  %93 = vst [vmem:[%s3 + $0x48] sm:$0xff] %v79
  %94 = vst [vmem:[%s3 + $0x50] sm:$0xff] %v80
  %95 = vst [vmem:[%s3 + $0x58] sm:$0xff] %v81
  %96 = vst [vmem:[%s3 + $0x60] sm:$0xff] %v82
  %97 = vst [vmem:[%s3 + $0x68] sm:$0xff] %v83
  // Predicated region
  $region14: #{alexnet_forward.10} parent=0 // pred_check
    _
  $region15: #{alexnet_forward.10} parent=0 // pred_check_branch
    %99 = sbr.rel (0) target = $region17
  $region16: #{alexnet_forward.10} parent=0 // pred_region
    _
  $region17: #{alexnet_forward.10} parent=0 // pred_fallthru
    _
  // Predicated region
  $region18: #{alexnet_forward.10} parent=0 // pred_check
    _
  $region19: #{alexnet_forward.10} parent=0 // pred_check_branch
    %101 = sbr.rel (0) target = $region21
  $region20: #{alexnet_forward.10} parent=0 // pred_region
    _
  $region21: #{alexnet_forward.10} parent=0 // pred_fallthru
    _

// kernel: alexnet_forward.11
$region0: #{alexnet_forward.11}
  #allocation0 [shape = 'u32[]', space=smem, size = 0x4, offset = 0x4, fixed_abs, tag = 'smem constant byte address 0x4 - core index']
  #allocation1 [shape = 'u32[144,128]{1,0:T(1,128)}', space=vmem, size = 0x12000, scoped, tag = 'internal scratch']
  %s0 = inlined_call_operand.vmem [shape: f32[56,128], index: 0, kind: input, shape index: {}]
  %s1 = inlined_call_operand.vmem [shape: f32[56,128], index: 1, kind: input, shape index: {}]
  %s2 = inlined_call_operand.vmem [shape: f32[56,128], index: 2, kind: input, shape index: {}]
  %s3 = inlined_call_operand.vmem [shape: f32[56,128], index: 3, kind: output, shape index: {}]
  %s4 = sld [smem:[#allocation0]]
  $region22: #{alexnet_forward.11} parent=0
    _
  %s6 = ssub.s32 1, %s4
  %s7 = scalar_select 0, %s6, %s4
  // Predicated region
  $region2: #{alexnet_forward.11} parent=0 // pred_check
    _
  $region3: #{alexnet_forward.11} parent=0 // pred_check_branch
    %9 = sbr.rel (0) target = $region5
  $region4: #{alexnet_forward.11} parent=0 // pred_region
    _
  $region5: #{alexnet_forward.11} parent=0 // pred_fallthru
    _
  // Predicated region
  $region6: #{alexnet_forward.11} parent=0 // pred_check
    _
  $region7: #{alexnet_forward.11} parent=0 // pred_check_branch
    %11 = sbr.rel (0) target = $region9
  $region8: #{alexnet_forward.11} parent=0 // pred_region
    _
  $region9: #{alexnet_forward.11} parent=0 // pred_fallthru
    _
  // Predicated region
  $region10: #{alexnet_forward.11} parent=0 // pred_check
    _
  $region11: #{alexnet_forward.11} parent=0 // pred_check_branch
    %13 = sbr.rel (0) target = $region13
  $region12: #{alexnet_forward.11} parent=0 // pred_region
    _
  $region13: #{alexnet_forward.11} parent=0 // pred_fallthru
    _
  %v14 = vld [vmem:[%s0] sm:$0xff]
  %v15 = vld [vmem:[%s0 + $0x8] sm:$0xff]
  %v16 = vld [vmem:[%s0 + $0x10] sm:$0xff]
  %v17 = vld [vmem:[%s0 + $0x18] sm:$0xff]
  %v18 = vld [vmem:[%s0 + $0x20] sm:$0xff]
  %v19 = vld [vmem:[%s0 + $0x28] sm:$0xff]
  %v20 = vld [vmem:[%s0 + $0x30] sm:$0xff]
  %v21 = vld [vmem:[%s1] sm:$0xff]
  %v22 = vld [vmem:[%s1 + $0x8] sm:$0xff]
  %v23 = vld [vmem:[%s1 + $0x10] sm:$0xff]
  %v24 = vld [vmem:[%s1 + $0x18] sm:$0xff]
  %v25 = vld [vmem:[%s1 + $0x20] sm:$0xff]
  %v26 = vld [vmem:[%s1 + $0x28] sm:$0xff]
  %v27 = vld [vmem:[%s1 + $0x30] sm:$0xff]
  %v28 = vmax.f32 %v14, %v21
  %v29 = vmax.f32 %v15, %v22
  %v30 = vmax.f32 %v16, %v23
  %v31 = vmax.f32 %v17, %v24
  %v32 = vmax.f32 %v18, %v25
  %v33 = vmax.f32 %v19, %v26
  %v34 = vmax.f32 %v20, %v27
  %v35 = vld [vmem:[%s2] sm:$0xff]
  %v36 = vld [vmem:[%s2 + $0x8] sm:$0xff]
  %v37 = vld [vmem:[%s2 + $0x10] sm:$0xff]
  %v38 = vld [vmem:[%s2 + $0x18] sm:$0xff]
  %v39 = vld [vmem:[%s2 + $0x20] sm:$0xff]
  %v40 = vld [vmem:[%s2 + $0x28] sm:$0xff]
  %v41 = vld [vmem:[%s2 + $0x30] sm:$0xff]
  %v42 = vmax.f32 %v28, %v35
  %v43 = vmax.f32 %v29, %v36
  %v44 = vmax.f32 %v30, %v37
  %v45 = vmax.f32 %v31, %v38
  %v46 = vmax.f32 %v32, %v39
  %v47 = vmax.f32 %v33, %v40
  %v48 = vmax.f32 %v34, %v41
  %49 = vst [vmem:[%s3] sm:$0xff] %v42
  %50 = vst [vmem:[%s3 + $0x8] sm:$0xff] %v43
  %51 = vst [vmem:[%s3 + $0x10] sm:$0xff] %v44
  %52 = vst [vmem:[%s3 + $0x18] sm:$0xff] %v45
  %53 = vst [vmem:[%s3 + $0x20] sm:$0xff] %v46
  %54 = vst [vmem:[%s3 + $0x28] sm:$0xff] %v47
  %55 = vst [vmem:[%s3 + $0x30] sm:$0xff] %v48
  // Predicated region
  $region14: #{alexnet_forward.11} parent=0 // pred_check
    _
  $region15: #{alexnet_forward.11} parent=0 // pred_check_branch
    %57 = sbr.rel (0) target = $region17
  $region16: #{alexnet_forward.11} parent=0 // pred_region
    _
  $region17: #{alexnet_forward.11} parent=0 // pred_fallthru
    _
  // Predicated region
  $region18: #{alexnet_forward.11} parent=0 // pred_check
    _
  $region19: #{alexnet_forward.11} parent=0 // pred_check_branch
    %59 = sbr.rel (0) target = $region21
  $region20: #{alexnet_forward.11} parent=0 // pred_region
    _
  $region21: #{alexnet_forward.11} parent=0 // pred_fallthru
    _

// kernel: alexnet_forward.12
$region0: #{alexnet_forward.12}
  #allocation0 [shape = 'u32[]', space=smem, size = 0x4, offset = 0x4, fixed_abs, tag = 'smem constant byte address 0x4 - core index']
  #allocation1 [shape = 'u32[144,128]{1,0:T(1,128)}', space=vmem, size = 0x12000, scoped, tag = 'internal scratch']
  #allocation2 [shape = 'f32[104,256]{1,0:T(8,128)}', space=vmem, size = 0x1a000, scoped, tag = 'scratch operand']
  %s0 = inlined_call_operand.vmem [shape: bf16[104,1664], index: 0, kind: input, shape index: {}]
  %s1 = inlined_call_operand.vmem [shape: bf16[1664,256], index: 1, kind: input, shape index: {}]
  %s2 = inlined_call_operand.vmem [shape: f32[1,256], index: 2, kind: input, shape index: {}]
  %s3 = inlined_call_operand.vmem [shape: f32[104,256], index: 3, kind: output, shape index: {}]
  %s4 = sld [smem:[#allocation0]]
  $region94: #{alexnet_forward.12} parent=0
    _
  %s6 = ssub.s32 1, %s4
  %s7 = scalar_select 0, %s6, %s4
  $region1: #{alexnet_forward.12} parent=0
    #allocation3 [shape = 'u8[53248]{0}', space=vmem, size = 0xd000, scoped, tag = 'input window, operand 0']
    loop: start=0, step=1, limit=15
    $region2: #{alexnet_forward.12} parent=1 // loop_pre_header
      _
    $region3: #{alexnet_forward.12} parent=1 // loop_header
      %s9 = sphi 0, %s13
      %p10 = scmp.ge.s32.totalorder %s9, 15
      %s16 = sphi 0, %s35
      %s17 = sphi 0, %s31
      %s18 = sphi 0, %s27
      %s19 = sphi 0, %s16
      %s20 = sphi 0, %s17
      %s21 = sphi 0, %s18
      %s22 = sphi 0, %s19
      %s23 = sphi 0, %s20
      %s24 = sphi 0, %s21
      %s40 = sphi 0, %s42
      %s43 = sphi 0, %s40
      %s44 = sphi 0, %s43
      %s60 = sphi 0, %s44
      %s68 = sphi 0, %s70
      %s71 = sphi 0, %s68
      %s72 = sphi 0, %s71
      %s88 = sphi 0, %s72
      %s94 = sphi 0, %s96
      %s97 = sphi 0, %s94
      %s98 = sphi 0, %s97
      %s114 = sphi 0, %s98
      %s122 = sphi 0, %s124
      %s125 = sphi 0, %s122
      %s126 = sphi 0, %s125
      %s142 = sphi 0, %s126
    $region4: #{alexnet_forward.12} parent=1 // loop_header_branch
      %12 = sbr.rel (%p10) target = $region8
    $region5: #{alexnet_forward.12} parent=1 // loop_body
      %s14 = ssub.s32 %s9, 1
      %s15 = ssub.s32 %s9, 2
      %s25 = sadd.s32 1, %s18
      %p26 = scmp.ge.s32.totalorder %s25, 13
      %s27 = scalar_select %p26, 0, %s25
      %s28 = sadd.s32 1, %s17
      %s29 = scalar_select %p26, %s28, %s17
      %p30 = scmp.ge.s32.totalorder %s29, 1
      %s31 = scalar_select %p30, 0, %s29
      %s32 = sadd.s32 1, %s16
      %s33 = scalar_select %p30, %s32, %s16
      %p34 = scmp.ge.s32.totalorder %s33, 1
      %s35 = scalar_select %p34, 0, %s33
      %s36 = ssub.s32 %s16, %s35
      %s37 = ssub.s32 %s18, %s27
      %s38 = sor.u32 %s36, %s37
      %p39 = scmp.eq.s32.totalorder %s38, 0
      %s41 = sadd.s32 %s40, 1
      %s42 = scalar_select %p39, %s40, %s41
      %p45 = pneg %p39
      %p46 = scmp.eq.s32.totalorder %s9, 12
      %p47 = por %p45, %p46
      %p48 = scmp.ne.s32.totalorder %s40, %s43
      %p49 = scmp.eq.s32.totalorder %s9, 0
      %p50 = por %p48, %p49
      %p51 = scmp.ne.s32.totalorder %s40, %s43
      %p52 = scmp.eq.s32.totalorder %s14, 12
      %p53 = por %p51, %p52
      %p54 = scmp.ne.s32.totalorder %s43, %s44
      %p55 = scmp.eq.s32.totalorder %s14, 0
      %p56 = por %p54, %p55
      %p57 = scmp.ne.s32.totalorder %s43, %s44
      %p58 = scmp.eq.s32.totalorder %s15, 12
      %p59 = por %p57, %p58
      %p61 = scmp.ne.s32.totalorder %s44, %s60
      %p62 = scmp.eq.s32.totalorder %s15, 0
      %p63 = por %p61, %p62
      %s64 = ssub.s32 %s18, %s27
      %s65 = ssub.s32 %s17, %s31
      %s66 = sor.u32 %s64, %s65
      %p67 = scmp.eq.s32.totalorder %s66, 0
      %s69 = sadd.s32 %s68, 1
      %s70 = scalar_select %p67, %s68, %s69
      %p73 = pneg %p67
      %p74 = scmp.eq.s32.totalorder %s9, 12
      %p75 = por %p73, %p74
      %p76 = scmp.ne.s32.totalorder %s68, %s71
      %p77 = scmp.eq.s32.totalorder %s9, 0
      %p78 = por %p76, %p77
      %p79 = scmp.ne.s32.totalorder %s68, %s71
      %p80 = scmp.eq.s32.totalorder %s14, 12
      %p81 = por %p79, %p80
      %p82 = scmp.ne.s32.totalorder %s71, %s72
      %p83 = scmp.eq.s32.totalorder %s14, 0
      %p84 = por %p82, %p83
      %p85 = scmp.ne.s32.totalorder %s71, %s72
      %p86 = scmp.eq.s32.totalorder %s15, 12
      %p87 = por %p85, %p86
      %p89 = scmp.ne.s32.totalorder %s72, %s88
      %p90 = scmp.eq.s32.totalorder %s15, 0
      %p91 = por %p89, %p90
      %s92 = ssub.s32 %s17, %s31
      %p93 = scmp.eq.s32.totalorder %s92, 0
      %s95 = sadd.s32 %s94, 1
      %s96 = scalar_select %p93, %s94, %s95
      %p99 = pneg %p93
      %p100 = scmp.eq.s32.totalorder %s9, 12
      %p101 = por %p99, %p100
      %p102 = scmp.ne.s32.totalorder %s94, %s97
      %p103 = scmp.eq.s32.totalorder %s9, 0
      %p104 = por %p102, %p103
      %p105 = scmp.ne.s32.totalorder %s94, %s97
      %p106 = scmp.eq.s32.totalorder %s14, 12
      %p107 = por %p105, %p106
      %p108 = scmp.ne.s32.totalorder %s97, %s98
      %p109 = scmp.eq.s32.totalorder %s14, 0
      %p110 = por %p108, %p109
      %p111 = scmp.ne.s32.totalorder %s97, %s98
      %p112 = scmp.eq.s32.totalorder %s15, 12
      %p113 = por %p111, %p112
      %p115 = scmp.ne.s32.totalorder %s98, %s114
      %p116 = scmp.eq.s32.totalorder %s15, 0
      %p117 = por %p115, %p116
      %s118 = ssub.s32 %s16, %s35
      %s119 = ssub.s32 %s17, %s31
      %s120 = sor.u32 %s118, %s119
      %p121 = scmp.eq.s32.totalorder %s120, 0
      %s123 = sadd.s32 %s122, 1
      %s124 = scalar_select %p121, %s122, %s123
      %p127 = pneg %p121
      %p128 = scmp.eq.s32.totalorder %s9, 12
      %p129 = por %p127, %p128
      %p130 = scmp.ne.s32.totalorder %s122, %s125
      %p131 = scmp.eq.s32.totalorder %s9, 0
      %p132 = por %p130, %p131
      %p133 = scmp.ne.s32.totalorder %s122, %s125
      %p134 = scmp.eq.s32.totalorder %s14, 12
      %p135 = por %p133, %p134
      %p136 = scmp.ne.s32.totalorder %s125, %s126
      %p137 = scmp.eq.s32.totalorder %s14, 0
      %p138 = por %p136, %p137
      %p139 = scmp.ne.s32.totalorder %s125, %s126
      %p140 = scmp.eq.s32.totalorder %s15, 12
      %p141 = por %p139, %p140
      %p143 = scmp.ne.s32.totalorder %s126, %s142
      %p144 = scmp.eq.s32.totalorder %s15, 0
      %p145 = por %p143, %p144
      %p146 = scmp.le.s32.totalorder 1, %s9
      %p147 = scmp.lt.s32.totalorder %s9, 14
      %p148 = pnand %p146, %p147
      %p149 = pneg %p148
      // Predicated region
      $region9: #{alexnet_forward.12} parent=5 // pred_check
        _
      $region10: #{alexnet_forward.12} parent=5 // pred_check_branch
        %151 = sbr.rel (%p148) target = $region12
      $region11: #{alexnet_forward.12} parent=5 // pred_region
        %s152 = ssub.s32 %s9, 1
        // Predicated region
        $region13: #{alexnet_forward.12} parent=11 // pred_check
          %p153 = pneg %p110
        $region14: #{alexnet_forward.12} parent=11 // pred_check_branch
          %155 = sbr.rel (%p153) target = $region16
        $region15: #{alexnet_forward.12} parent=11 // pred_region
          %s156 = smul.u32 2, %s20
          %p157 = scmp.lt.s32.totalorder %s156, 1
          %s158 = scalar_select %p157, %s156, 1
          %s159 = scalar_lea.vmem %s2, %s158
          %s160 = smul.u32 2, %s20
        $region16: #{alexnet_forward.12} parent=11 // pred_fallthru
          _
      $region12: #{alexnet_forward.12} parent=5 // pred_fallthru
        _
      %p161 = scmp.lt.s32.totalorder %s9, 13
      // Predicated region
      $region17: #{alexnet_forward.12} parent=5 // pred_check
        %p162 = pneg %p161
      $region18: #{alexnet_forward.12} parent=5 // pred_check_branch
        %164 = sbr.rel (%p162) target = $region20
      $region19: #{alexnet_forward.12} parent=5 // pred_region
        // Predicated region
        $region21: #{alexnet_forward.12} parent=19 // pred_check
          %p165 = pneg %p50
        $region22: #{alexnet_forward.12} parent=19 // pred_check_branch
          %167 = sbr.rel (%p165) target = $region24
        $region23: #{alexnet_forward.12} parent=19 // pred_region
          %s168 = sand.u32 %s40, 1
          %s169 = sand.u32 %s40, 1
          %s170 = smul.addr %s169, 52
          %s171 = scalar_lea.vmem [#allocation3], %s170
          %s172 = smul.u32 13, %s16
          %s173 = smul.addr %s172, 13
          %s174 = sadd.s32 %s18, %s173
          %s175 = smul.addr %s174, 4
          %s176 = scalar_lea.vmem %s0, %s175
          // Predicated region
          $region25: #{alexnet_forward.12} parent=23 // pred_check
            _
          $region26: #{alexnet_forward.12} parent=23 // pred_check_branch
            %178 = sbr.rel (0) target = $region28
          $region27: #{alexnet_forward.12} parent=23 // pred_region
            // Predicated region
            $region29: #{alexnet_forward.12} parent=27 // pred_check
              _
            $region30: #{alexnet_forward.12} parent=27 // pred_check_branch
              %180 = sbr.rel target = $region32
            $region31: #{alexnet_forward.12} parent=27 // pred_region
              // Predicated region
              $region44: #{alexnet_forward.12} parent=31 // pred_check
                _
              $region45: #{alexnet_forward.12} parent=31 // pred_check_branch
                %219 = sbr.rel (0) target = $region47
              $region46: #{alexnet_forward.12} parent=31 // pred_region
                loop: start=0, step=1, limit=1
                $region48: #{alexnet_forward.12} parent=46 // loop_pre_header
                  _
                $region49: #{alexnet_forward.12} parent=46 // loop_header
                  %s221 = sphi 0, %s225
                  %p222 = scmp.ge.s32.totalorder %s221, 1
                  %s226 = sphi %s176, %s176
                  %s227 = sphi %s171, %s171
                $region50: #{alexnet_forward.12} parent=46 // loop_header_branch
                  %224 = sbr.rel (%p222) target = $region54
                $region51: #{alexnet_forward.12} parent=46 // loop_body
                  _
                $region52: #{alexnet_forward.12} parent=46 // loop_footer
                  %s225 = sadd.s32 1, %s221
                $region53: #{alexnet_forward.12} parent=46 // loop_footer_branch
                  %220 = sbr.rel target = $region49
                $region54: #{alexnet_forward.12} parent=46 // loop_exit
                  _
                loop: start=0, step=1, limit=1
                $region55: #{alexnet_forward.12} parent=46 // loop_pre_header
                  _
                $region56: #{alexnet_forward.12} parent=46 // loop_header
                  %s230 = sphi 0, %s234
                  %p231 = scmp.ge.s32.totalorder %s230, 1
                  %s235 = sphi %s176, %s176
                  %s236 = sphi %s171, %s171
                $region57: #{alexnet_forward.12} parent=46 // loop_header_branch
                  %233 = sbr.rel (%p231) target = $region61
                $region58: #{alexnet_forward.12} parent=46 // loop_body
                  %v237 = vld [vmem:[%s235] sm:$0xf]
                  %238 = vst [vmem:[%s236] sm:$0xf] %v237
                  %v239 = vld [vmem:[%s235 + $0x34] sm:$0xf]
                  %240 = vst [vmem:[%s236 + $0x4] sm:$0xf] %v239
                  %v241 = vld [vmem:[%s235 + $0x68] sm:$0xf]
                  %242 = vst [vmem:[%s236 + $0x8] sm:$0xf] %v241
                  %v243 = vld [vmem:[%s235 + $0x9c] sm:$0xf]
                  %244 = vst [vmem:[%s236 + $0xc] sm:$0xf] %v243
                  %v245 = vld [vmem:[%s235 + $0xd0] sm:$0xf]
                  %246 = vst [vmem:[%s236 + $0x10] sm:$0xf] %v245
                  %v247 = vld [vmem:[%s235 + $0x104] sm:$0xf]
                  %248 = vst [vmem:[%s236 + $0x14] sm:$0xf] %v247
                  %v249 = vld [vmem:[%s235 + $0x138] sm:$0xf]
                  %250 = vst [vmem:[%s236 + $0x18] sm:$0xf] %v249
                  %v251 = vld [vmem:[%s235 + $0x16c] sm:$0xf]
                  %252 = vst [vmem:[%s236 + $0x1c] sm:$0xf] %v251
                  %v253 = vld [vmem:[%s235 + $0x1a0] sm:$0xf]
                  %254 = vst [vmem:[%s236 + $0x20] sm:$0xf] %v253
                  %v255 = vld [vmem:[%s235 + $0x1d4] sm:$0xf]
                  %256 = vst [vmem:[%s236 + $0x24] sm:$0xf] %v255
                  %v257 = vld [vmem:[%s235 + $0x208] sm:$0xf]
                  %258 = vst [vmem:[%s236 + $0x28] sm:$0xf] %v257
                  %v259 = vld [vmem:[%s235 + $0x23c] sm:$0xf]
                  %260 = vst [vmem:[%s236 + $0x2c] sm:$0xf] %v259
                  %v261 = vld [vmem:[%s235 + $0x270] sm:$0xf]
                  %262 = vst [vmem:[%s236 + $0x30] sm:$0xf] %v261
                $region59: #{alexnet_forward.12} parent=46 // loop_footer
                  %s234 = sadd.s32 1, %s230
                $region60: #{alexnet_forward.12} parent=46 // loop_footer_branch
                  %229 = sbr.rel target = $region56
                $region61: #{alexnet_forward.12} parent=46 // loop_exit
                  _
              $region47: #{alexnet_forward.12} parent=31 // pred_fallthru
                _
            $region32: #{alexnet_forward.12} parent=27 // pred_fallthru
              _
            // Predicated region
            $region33: #{alexnet_forward.12} parent=27 // pred_check
              _
            $region34: #{alexnet_forward.12} parent=27 // pred_check_branch
              %182 = sbr.rel (0) target = $region36
            $region35: #{alexnet_forward.12} parent=27 // pred_region
              loop: start=0, step=1, limit=1
              $region37: #{alexnet_forward.12} parent=35 // loop_pre_header
                _
              $region38: #{alexnet_forward.12} parent=35 // loop_header
                %s185 = sphi 0, %s189
                %p186 = scmp.ge.s32.totalorder %s185, 1
                %s190 = sphi %s176, %s176
                %s191 = sphi %s171, %s171
              $region39: #{alexnet_forward.12} parent=35 // loop_header_branch
                %188 = sbr.rel (%p186) target = $region43
              $region40: #{alexnet_forward.12} parent=35 // loop_body
                %v192 = vld [vmem:[%s190] sm:$0xf]
                %193 = vst [vmem:[%s191] sm:$0xf] %v192
                %v194 = vld [vmem:[%s190 + $0x34] sm:$0xf]
                %195 = vst [vmem:[%s191 + $0x4] sm:$0xf] %v194
                %v196 = vld [vmem:[%s190 + $0x68] sm:$0xf]
                %197 = vst [vmem:[%s191 + $0x8] sm:$0xf] %v196
                %v198 = vld [vmem:[%s190 + $0x9c] sm:$0xf]
                %199 = vst [vmem:[%s191 + $0xc] sm:$0xf] %v198
                %v200 = vld [vmem:[%s190 + $0xd0] sm:$0xf]
                %201 = vst [vmem:[%s191 + $0x10] sm:$0xf] %v200
                %v202 = vld [vmem:[%s190 + $0x104] sm:$0xf]
                %203 = vst [vmem:[%s191 + $0x14] sm:$0xf] %v202
                %v204 = vld [vmem:[%s190 + $0x138] sm:$0xf]
                %205 = vst [vmem:[%s191 + $0x18] sm:$0xf] %v204
                %v206 = vld [vmem:[%s190 + $0x16c] sm:$0xf]
                %207 = vst [vmem:[%s191 + $0x1c] sm:$0xf] %v206
                %v208 = vld [vmem:[%s190 + $0x1a0] sm:$0xf]
                %209 = vst [vmem:[%s191 + $0x20] sm:$0xf] %v208
                %v210 = vld [vmem:[%s190 + $0x1d4] sm:$0xf]
                %211 = vst [vmem:[%s191 + $0x24] sm:$0xf] %v210
                %v212 = vld [vmem:[%s190 + $0x208] sm:$0xf]
                %213 = vst [vmem:[%s191 + $0x28] sm:$0xf] %v212
                %v214 = vld [vmem:[%s190 + $0x23c] sm:$0xf]
                %215 = vst [vmem:[%s191 + $0x2c] sm:$0xf] %v214
                %v216 = vld [vmem:[%s190 + $0x270] sm:$0xf]
                %217 = vst [vmem:[%s191 + $0x30] sm:$0xf] %v216
              $region41: #{alexnet_forward.12} parent=35 // loop_footer
                %s189 = sadd.s32 1, %s185
              $region42: #{alexnet_forward.12} parent=35 // loop_footer_branch
                %184 = sbr.rel target = $region38
              $region43: #{alexnet_forward.12} parent=35 // loop_exit
                _
            $region36: #{alexnet_forward.12} parent=27 // pred_fallthru
              _
          $region28: #{alexnet_forward.12} parent=23 // pred_fallthru
            _
          %263 = vnop
        $region24: #{alexnet_forward.12} parent=19 // pred_fallthru
          _
        // Predicated region
        $region62: #{alexnet_forward.12} parent=19 // pred_check
          %p264 = pneg %p78
        $region63: #{alexnet_forward.12} parent=19 // pred_check_branch
          %266 = sbr.rel (%p264) target = $region65
        $region64: #{alexnet_forward.12} parent=19 // pred_region
          %s267 = smul.u32 16, %s18
          %s268 = smul.u32 2, %s17
          %p269 = scmp.lt.s32.totalorder %s267, 207
          %s270 = scalar_select %p269, %s267, 207
          %p271 = scmp.lt.s32.totalorder %s268, 1
          %s272 = scalar_select %p271, %s268, 1
          %s273 = smul.addr %s270, 2
          %s274 = sadd.s32 %s272, %s273
          %s275 = smul.addr %s274, 4
          %s276 = scalar_lea.vmem %s1, %s275
          %s277 = smul.u32 16, %s18
          %s278 = smul.u32 2, %s17
        $region65: #{alexnet_forward.12} parent=19 // pred_fallthru
          _
      $region20: #{alexnet_forward.12} parent=5 // pred_fallthru
        _
      %p279 = scmp.le.s32.totalorder 1, %s9
      %p280 = scmp.lt.s32.totalorder %s9, 14
      %p281 = pnand %p279, %p280
      %p282 = pneg %p281
      // Predicated region
      $region66: #{alexnet_forward.12} parent=5 // pred_check
        _
      $region67: #{alexnet_forward.12} parent=5 // pred_check_branch
        %284 = sbr.rel (%p281) target = $region69
      $region68: #{alexnet_forward.12} parent=5 // pred_region
        %s285 = ssub.s32 %s9, 1
        %s286 = sand.u32 %s43, 1
        %s287 = sand.u32 %s43, 1
        %s288 = smul.addr %s287, 52
        %s289 = scalar_lea.vmem [#allocation3], %s288
        // Predicated region
        $region70: #{alexnet_forward.12} parent=68 // pred_check
          %p290 = pneg %p56
        $region71: #{alexnet_forward.12} parent=68 // pred_check_branch
          %292 = sbr.rel (%p290) target = $region73
        $region72: #{alexnet_forward.12} parent=68 // pred_region
          _
        $region73: #{alexnet_forward.12} parent=68 // pred_fallthru
          _
        %s293 = sand.u32 %s43, 1
        %s294 = sand.u32 %s43, 1
        %s295 = smul.addr %s294, 52
        %s296 = scalar_lea.vmem [#allocation3], %s295
        %p297 = pneg %p56
        %p298 = pneg %p53
        %s299 = smul.u32 16, %s21
        %s300 = smul.u32 2, %s20
        %p301 = scmp.lt.s32.totalorder %s299, 207
        %s302 = scalar_select %p301, %s299, 207
        %p303 = scmp.lt.s32.totalorder %s300, 1
        %s304 = scalar_select %p303, %s300, 1
        %s305 = smul.addr %s302, 2
        %s306 = sadd.s32 %s304, %s305
        %s307 = smul.addr %s306, 4
        %s308 = scalar_lea.vmem %s1, %s307
        %p309 = pneg %p84
        %p310 = pneg %p81
        %s311 = smul.u32 2, %s20
        %p312 = scmp.lt.s32.totalorder %s311, 1
        %s313 = scalar_select %p312, %s311, 1
        %s314 = scalar_lea.vmem %s2, %s313
        %p315 = pneg %p110
        %p316 = pneg %p107
        %p317 = pneg %p138
        %p318 = pneg %p135
        %s319 = smul.u32 13, %s19
        %s320 = smul.u32 2, %s20
        %p321 = scmp.lt.s32.totalorder %s319, 12
        %s322 = scalar_select %p321, %s319, 12
        %p323 = scmp.lt.s32.totalorder %s320, 1
        %s324 = scalar_select %p323, %s320, 1
        %s325 = smul.addr %s322, 2
        %s326 = sadd.s32 %s324, %s325
        %s327 = smul.addr %s326, 8
        %s328 = scalar_lea.vmem %s3, %s327
        %s329 = smul.u32 13, %s19
        %s330 = smul.u32 16, %s21
        %s331 = smul.u32 2, %s20
        %p332 = scmp.lt.s32.totalorder %s330, 207
        %s333 = scalar_select %p332, %s330, 207
        %p334 = scmp.lt.s32.totalorder %s331, 1
        %s335 = scalar_select %p334, %s331, 1
        %s336 = smul.addr %s333, 2
        %s337 = sadd.s32 %s335, %s336
        %s338 = smul.addr %s337, 4
        %s339 = scalar_lea.vmem %s1, %s338
        %s340 = smul.u32 16, %s21
        %s341 = smul.u32 2, %s20
        %s342 = smul.u32 2, %s20
        %p343 = scmp.lt.s32.totalorder %s342, 1
        %s344 = scalar_select %p343, %s342, 1
        %s345 = scalar_lea.vmem %s2, %s344
        %s346 = smul.u32 2, %s20
        %s347 = smul.u32 13, %s19
        %s348 = smul.u32 2, %s20
        %p349 = scmp.lt.s32.totalorder %s347, 12
        %s350 = scalar_select %p349, %s347, 12
        %p351 = scmp.lt.s32.totalorder %s348, 1
        %s352 = scalar_select %p351, %s348, 1
        %s353 = smul.addr %s350, 2
        %s354 = sadd.s32 %s352, %s353
        %s355 = smul.addr %s354, 8
        %s356 = scalar_lea.vmem %s3, %s355
        %s357 = smul.u32 13, %s19
        %s358 = smul.u32 2, %s20
        %p360 = scmp.eq.s32.totalorder %s21, 0
        // Predicated region
        $region74: #{alexnet_forward.12} parent=68 // pred_check
          %p361 = pneg %p360
        $region75: #{alexnet_forward.12} parent=68 // pred_check_branch
          %363 = sbr.rel (%p361) target = $region77
        $region76: #{alexnet_forward.12} parent=68 // pred_region
          %364 = vst [vmem:[#allocation2] sm:$0xff] 0.0
          %365 = vst [vmem:[#allocation2 + $0x8] sm:$0xff] 0.0
          %366 = vst [vmem:[#allocation2 + $0x10] sm:$0xff] 0.0
          %367 = vst [vmem:[#allocation2 + $0x18] sm:$0xff] 0.0
          %368 = vst [vmem:[#allocation2 + $0x20] sm:$0xff] 0.0
          %369 = vst [vmem:[#allocation2 + $0x28] sm:$0xff] 0.0
          %370 = vst [vmem:[#allocation2 + $0x30] sm:$0xff] 0.0
          %371 = vst [vmem:[#allocation2 + $0x38] sm:$0xff] 0.0
          %372 = vst [vmem:[#allocation2 + $0x40] sm:$0xff] 0.0
          %373 = vst [vmem:[#allocation2 + $0x48] sm:$0xff] 0.0
          %374 = vst [vmem:[#allocation2 + $0x50] sm:$0xff] 0.0
          %375 = vst [vmem:[#allocation2 + $0x58] sm:$0xff] 0.0
          %376 = vst [vmem:[#allocation2 + $0x60] sm:$0xff] 0.0
          %377 = vst [vmem:[#allocation2 + $0x68] sm:$0xff] 0.0
          %378 = vst [vmem:[#allocation2 + $0x70] sm:$0xff] 0.0
          %379 = vst [vmem:[#allocation2 + $0x78] sm:$0xff] 0.0
          %380 = vst [vmem:[#allocation2 + $0x80] sm:$0xff] 0.0
          %381 = vst [vmem:[#allocation2 + $0x88] sm:$0xff] 0.0
          %382 = vst [vmem:[#allocation2 + $0x90] sm:$0xff] 0.0
          %383 = vst [vmem:[#allocation2 + $0x98] sm:$0xff] 0.0
          %384 = vst [vmem:[#allocation2 + $0xa0] sm:$0xff] 0.0
          %385 = vst [vmem:[#allocation2 + $0xa8] sm:$0xff] 0.0
          %386 = vst [vmem:[#allocation2 + $0xb0] sm:$0xff] 0.0
          %387 = vst [vmem:[#allocation2 + $0xb8] sm:$0xff] 0.0
          %388 = vst [vmem:[#allocation2 + $0xc0] sm:$0xff] 0.0
          %389 = vst [vmem:[#allocation2 + $0xc8] sm:$0xff] 0.0
        $region77: #{alexnet_forward.12} parent=68 // pred_fallthru
          _
        %v390 = vld [vmem:[#allocation2] sm:$0xff]
        %v391 = vld [vmem:[#allocation2 + $0x8] sm:$0xff]
        %v392 = vld [vmem:[#allocation2 + $0x10] sm:$0xff]
        %v393 = vld [vmem:[#allocation2 + $0x18] sm:$0xff]
        %v394 = vld [vmem:[#allocation2 + $0x20] sm:$0xff]
        %v395 = vld [vmem:[#allocation2 + $0x28] sm:$0xff]
        %v396 = vld [vmem:[#allocation2 + $0x30] sm:$0xff]
        %v397 = vld [vmem:[#allocation2 + $0x38] sm:$0xff]
        %v398 = vld [vmem:[#allocation2 + $0x40] sm:$0xff]
        %v399 = vld [vmem:[#allocation2 + $0x48] sm:$0xff]
        %v400 = vld [vmem:[#allocation2 + $0x50] sm:$0xff]
        %v401 = vld [vmem:[#allocation2 + $0x58] sm:$0xff]
        %v402 = vld [vmem:[#allocation2 + $0x60] sm:$0xff]
        %v403 = vld [vmem:[#allocation2 + $0x68] sm:$0xff]
        %v404 = vld [vmem:[#allocation2 + $0x70] sm:$0xff]
        %v405 = vld [vmem:[#allocation2 + $0x78] sm:$0xff]
        %v406 = vld [vmem:[#allocation2 + $0x80] sm:$0xff]
        %v407 = vld [vmem:[#allocation2 + $0x88] sm:$0xff]
        %v408 = vld [vmem:[#allocation2 + $0x90] sm:$0xff]
        %v409 = vld [vmem:[#allocation2 + $0x98] sm:$0xff]
        %v410 = vld [vmem:[#allocation2 + $0xa0] sm:$0xff]
        %v411 = vld [vmem:[#allocation2 + $0xa8] sm:$0xff]
        %v412 = vld [vmem:[#allocation2 + $0xb0] sm:$0xff]
        %v413 = vld [vmem:[#allocation2 + $0xb8] sm:$0xff]
        %v414 = vld [vmem:[#allocation2 + $0xc0] sm:$0xff]
        %v415 = vld [vmem:[#allocation2 + $0xc8] sm:$0xff]
        %v416 = vld [vmem:[%s289] sm:$0xf]
        %v417 = vld [vmem:[%s289 + $0x4] sm:$0xf]
        %v418 = vld [vmem:[%s289 + $0x8] sm:$0xf]
        %v419 = vld [vmem:[%s289 + $0xc] sm:$0xf]
        %v420 = vld [vmem:[%s289 + $0x10] sm:$0xf]
        %v421 = vld [vmem:[%s289 + $0x14] sm:$0xf]
        %v422 = vld [vmem:[%s289 + $0x18] sm:$0xf]
        %v423 = vld [vmem:[%s289 + $0x1c] sm:$0xf]
        %v424 = vld [vmem:[%s289 + $0x20] sm:$0xf]
        %v425 = vld [vmem:[%s289 + $0x24] sm:$0xf]
        %v426 = vld [vmem:[%s289 + $0x28] sm:$0xf]
        %v427 = vld [vmem:[%s289 + $0x2c] sm:$0xf]
        %v428 = vld [vmem:[%s289 + $0x30] sm:$0xf]
        %v429 = vld [vmem:[%s339] sm:$0xff]
        %v430 = vld [vmem:[%s339 + $0x8] sm:$0xff]
        %v431 = vld [vmem:[%s339 + $0x10] sm:$0xff]
        %v432 = vld [vmem:[%s339 + $0x18] sm:$0xff]
        %v433 = vld [vmem:[%s339 + $0x20] sm:$0xff]
        %v434 = vld [vmem:[%s339 + $0x28] sm:$0xff]
        %v435 = vld [vmem:[%s339 + $0x30] sm:$0xff]
        %v436 = vld [vmem:[%s339 + $0x38] sm:$0xff]
        %v437 = vld [vmem:[%s339 + $0x40] sm:$0xff]
        %v438 = vld [vmem:[%s339 + $0x48] sm:$0xff]
        %v439 = vld [vmem:[%s339 + $0x50] sm:$0xff]
        %v440 = vld [vmem:[%s339 + $0x58] sm:$0xff]
        %v441 = vld [vmem:[%s339 + $0x60] sm:$0xff]
        %v442 = vld [vmem:[%s339 + $0x68] sm:$0xff]
        %v443 = vld [vmem:[%s339 + $0x70] sm:$0xff]
        %v444 = vld [vmem:[%s339 + $0x78] sm:$0xff]
        %v458 = vunpack.c.l.b16 %v416
        %v459 = vunpack.c.l.b16 %v417
        %v460 = vunpack.c.l.b16 %v418
        %v461 = vunpack.c.l.b16 %v419
        %v462 = vunpack.c.l.b16 %v420
        %v463 = vunpack.c.l.b16 %v421
        %v464 = vunpack.c.l.b16 %v422
        %v465 = vunpack.c.l.b16 %v423
        %v466 = vunpack.c.l.b16 %v424
        %v467 = vunpack.c.l.b16 %v425
        %v468 = vunpack.c.l.b16 %v426
        %v469 = vunpack.c.l.b16 %v427
        %v470 = vunpack.c.l.b16 %v428
        %v471 = vpack.c.b16 %v459, %v458
        %v472 = vpack.c.b16 %v461, %v460
        %v473 = vpack.c.b16 %v463, %v462
        %v474 = vpack.c.b16 %v465, %v464
        %v475 = vpack.c.b16 %v467, %v466
        %v476 = vpack.c.b16 %v469, %v468
        %v477 = vpack.c.b16 %v470, %v470
        %v501 = vunpack.c.l.b16 %v429
        %v502 = vunpack.c.h.b16 %v429
        %v503 = vunpack.c.l.b16 %v430
        %v504 = vunpack.c.h.b16 %v430
        %v505 = vunpack.c.l.b16 %v431
        %v506 = vunpack.c.h.b16 %v431
        %v507 = vunpack.c.l.b16 %v432
        %v508 = vunpack.c.h.b16 %v432
        %v509 = vunpack.c.l.b16 %v433
        %v510 = vunpack.c.h.b16 %v433
        %v511 = vunpack.c.l.b16 %v434
        %v512 = vunpack.c.h.b16 %v434
        %v513 = vunpack.c.l.b16 %v435
        %v514 = vunpack.c.h.b16 %v435
        %v515 = vunpack.c.l.b16 %v436
        %v516 = vunpack.c.h.b16 %v436
        %v517 = vunpack.c.l.b16 %v437
        %v518 = vunpack.c.h.b16 %v437
        %v519 = vunpack.c.l.b16 %v438
        %v520 = vunpack.c.h.b16 %v438
        %v521 = vunpack.c.l.b16 %v439
        %v522 = vunpack.c.h.b16 %v439
        %v523 = vunpack.c.l.b16 %v440
        %v524 = vunpack.c.h.b16 %v440
        %v525 = vunpack.c.l.b16 %v441
        %v526 = vunpack.c.h.b16 %v441
        %v527 = vunpack.c.l.b16 %v442
        %v528 = vunpack.c.h.b16 %v442
        %v529 = vunpack.c.l.b16 %v443
        %v530 = vunpack.c.h.b16 %v443
        %v531 = vunpack.c.l.b16 %v444
        %v532 = vunpack.c.h.b16 %v444
        %v533 = vpack.c.b16 %v503, %v501
        %v534 = vpack.c.b16 %v504, %v502
        %v535 = vpack.c.b16 %v507, %v505
        %v536 = vpack.c.b16 %v508, %v506
        %v537 = vpack.c.b16 %v511, %v509
        %v538 = vpack.c.b16 %v512, %v510
        %v539 = vpack.c.b16 %v515, %v513
        %v540 = vpack.c.b16 %v516, %v514
        %v541 = vpack.c.b16 %v519, %v517
        %v542 = vpack.c.b16 %v520, %v518
        %v543 = vpack.c.b16 %v523, %v521
        %v544 = vpack.c.b16 %v524, %v522
        %v545 = vpack.c.b16 %v527, %v525
        %v546 = vpack.c.b16 %v528, %v526
        %v547 = vpack.c.b16 %v531, %v529
        %v548 = vpack.c.b16 %v532, %v530
        %565 = vmatprep.subr.bf16.mxu0 %v534
        %566 = vmatpush1.bf16.msra.mxu0 %v533
        %567 = vmatprep.subr.bf16.mxu0 %v536
        %568 = vmatpush1.bf16.msra.mxu0 %v535
        %569 = vmatprep.subr.bf16.mxu0 %v538
        %570 = vmatpush1.bf16.msra.mxu0 %v537
        %571 = vmatprep.subr.bf16.mxu0 %v540
        %572 = vmatpush1.bf16.msra.mxu0 %v539
        %573 = vmatprep.subr.bf16.mxu0 %v542
        %574 = vmatpush1.bf16.msra.mxu0 %v541
        %575 = vmatprep.subr.bf16.mxu0 %v544
        %576 = vmatpush1.bf16.msra.mxu0 %v543
        %577 = vmatprep.subr.bf16.mxu0 %v546
        %578 = vmatpush1.bf16.msra.mxu0 %v545
        %579 = vmatprep.subr.bf16.mxu0 %v548
        %580 = vmatpush1.bf16.msra.mxu0 %v547
        %581 = vmatprep.subr.bf16.mxu0 0
        %582 = vmatpush1.bf16.msra.mxu0 0
        %583 = vmatprep.subr.bf16.mxu0 0
        %584 = vmatpush1.bf16.msra.mxu0 0
        %585 = vmatprep.subr.bf16.mxu0 0
        %586 = vmatpush1.bf16.msra.mxu0 0
        %587 = vmatprep.subr.bf16.mxu0 0
        %588 = vmatpush1.bf16.msra.mxu0 0
        %589 = vmatprep.subr.bf16.mxu0 0
        %590 = vmatpush1.bf16.msra.mxu0 0
        %591 = vmatprep.subr.bf16.mxu0 0
        %592 = vmatpush1.bf16.msra.mxu0 0
        %593 = vmatprep.subr.bf16.mxu0 0
        %594 = vmatpush1.bf16.msra.mxu0 0
        %595 = vmatprep.subr.bf16.mxu0 0
        %596 = vmatpush1.bf16.msra.mxu0 0
        %597 = vmatprep.mubr.bf16.mxu0 0
        %598 = vmatmul.mubr.bf16.gmra.mrb[0].mxu0 %v471
        %v599 = vpop.f32.mrb[0].mxu0
        %v600 = vadd.f32 0.0, %v599
        %v601 = vpop.f32.mrb[0].mxu0
        %v602 = vadd.f32 0.0, %v601
        %v603 = vpop.f32.mrb[0].mxu0
        %v604 = vadd.f32 0.0, %v603
        %v605 = vpop.f32.mrb[0].mxu0
        %v606 = vadd.f32 0.0, %v605
        %607 = vmatprep.mubr.bf16.mxu0 0
        %608 = vmatmul.mubr.bf16.gmra.mrb[0].mxu0 %v472
        %v609 = vpop.f32.mrb[0].mxu0
        %v610 = vadd.f32 0.0, %v609
        %v611 = vpop.f32.mrb[0].mxu0
        %v612 = vadd.f32 0.0, %v611
        %v613 = vpop.f32.mrb[0].mxu0
        %v614 = vadd.f32 0.0, %v613
        %v615 = vpop.f32.mrb[0].mxu0
        %v616 = vadd.f32 0.0, %v615
        %617 = vmatprep.mubr.bf16.mxu0 0
        %618 = vmatmul.mubr.bf16.gmra.mrb[0].mxu0 %v473
        %v619 = vpop.f32.mrb[0].mxu0
        %v620 = vadd.f32 0.0, %v619
        %v621 = vpop.f32.mrb[0].mxu0
        %v622 = vadd.f32 0.0, %v621
        %v623 = vpop.f32.mrb[0].mxu0
        %v624 = vadd.f32 0.0, %v623
        %v625 = vpop.f32.mrb[0].mxu0
        %v626 = vadd.f32 0.0, %v625
        %627 = vmatprep.mubr.bf16.mxu0 0
        %628 = vmatmul.mubr.bf16.gmra.mrb[0].mxu0 %v474
        %v629 = vpop.f32.mrb[0].mxu0
        %v630 = vadd.f32 0.0, %v629
        %v631 = vpop.f32.mrb[0].mxu0
        %v632 = vadd.f32 0.0, %v631
        %v633 = vpop.f32.mrb[0].mxu0
        %v634 = vadd.f32 0.0, %v633
        %v635 = vpop.f32.mrb[0].mxu0
        %v636 = vadd.f32 0.0, %v635
        %637 = vmatprep.mubr.bf16.mxu0 0
        %638 = vmatmul.mubr.bf16.gmra.mrb[0].mxu0 %v475
        %v639 = vpop.f32.mrb[0].mxu0
        %v640 = vadd.f32 0.0, %v639
        %v641 = vpop.f32.mrb[0].mxu0
        %v642 = vadd.f32 0.0, %v641
        %v643 = vpop.f32.mrb[0].mxu0
        %v644 = vadd.f32 0.0, %v643
        %v645 = vpop.f32.mrb[0].mxu0
        %v646 = vadd.f32 0.0, %v645
        %647 = vmatprep.mubr.bf16.mxu0 0
        %648 = vmatmul.mubr.bf16.gmra.mrb[0].mxu0 %v476
        %v649 = vpop.f32.mrb[0].mxu0
        %v650 = vadd.f32 0.0, %v649
        %v651 = vpop.f32.mrb[0].mxu0
        %v652 = vadd.f32 0.0, %v651
        %v653 = vpop.f32.mrb[0].mxu0
        %v654 = vadd.f32 0.0, %v653
        %v655 = vpop.f32.mrb[0].mxu0
        %v656 = vadd.f32 0.0, %v655
        %657 = vmatprep.mubr.bf16.mxu0 0
        %658 = vmatmul.mubr.bf16.gmra.mrb[0].mxu0 %v477
        %v659 = vpop.f32.mrb[0].mxu0
        %v660 = vadd.f32 0.0, %v659
        %v661 = vpop.f32.mrb[0].mxu0
        %v662 = vadd.f32 0.0, %v661
        %v663 = vpop.f32.mrb[0].mxu0
        %v664 = vpop.f32.mrb[0].mxu0
        %665 = vdwg.mxu0
        %v666 = vadd.f32 %v390, %v600
        %v667 = vadd.f32 %v391, %v602
        %v668 = vadd.f32 %v392, %v604
        %v669 = vadd.f32 %v393, %v606
        %v670 = vadd.f32 %v394, %v610
        %v671 = vadd.f32 %v395, %v612
        %v672 = vadd.f32 %v396, %v614
        %v673 = vadd.f32 %v397, %v616
        %v674 = vadd.f32 %v398, %v620
        %v675 = vadd.f32 %v399, %v622
        %v676 = vadd.f32 %v400, %v624
        %v677 = vadd.f32 %v401, %v626
        %v678 = vadd.f32 %v402, %v630
        %v679 = vadd.f32 %v403, %v632
        %v680 = vadd.f32 %v404, %v634
        %v681 = vadd.f32 %v405, %v636
        %v682 = vadd.f32 %v406, %v640
        %v683 = vadd.f32 %v407, %v642
        %v684 = vadd.f32 %v408, %v644
        %v685 = vadd.f32 %v409, %v646
        %v686 = vadd.f32 %v410, %v650
        %v687 = vadd.f32 %v411, %v652
        %v688 = vadd.f32 %v412, %v654
        %v689 = vadd.f32 %v413, %v656
        %v690 = vadd.f32 %v414, %v660
        %v691 = vadd.f32 %v415, %v662
        %692 = vst [vmem:[#allocation2] sm:$0xff] %v666
        %693 = vst [vmem:[#allocation2 + $0x8] sm:$0xff] %v667
        %694 = vst [vmem:[#allocation2 + $0x10] sm:$0xff] %v668
        %695 = vst [vmem:[#allocation2 + $0x18] sm:$0xff] %v669
        %696 = vst [vmem:[#allocation2 + $0x20] sm:$0xff] %v670
        %697 = vst [vmem:[#allocation2 + $0x28] sm:$0xff] %v671
        %698 = vst [vmem:[#allocation2 + $0x30] sm:$0xff] %v672
        %699 = vst [vmem:[#allocation2 + $0x38] sm:$0xff] %v673
        %700 = vst [vmem:[#allocation2 + $0x40] sm:$0xff] %v674
        %701 = vst [vmem:[#allocation2 + $0x48] sm:$0xff] %v675
        %702 = vst [vmem:[#allocation2 + $0x50] sm:$0xff] %v676
        %703 = vst [vmem:[#allocation2 + $0x58] sm:$0xff] %v677
        %704 = vst [vmem:[#allocation2 + $0x60] sm:$0xff] %v678
        %705 = vst [vmem:[#allocation2 + $0x68] sm:$0xff] %v679
        %706 = vst [vmem:[#allocation2 + $0x70] sm:$0xff] %v680
        %707 = vst [vmem:[#allocation2 + $0x78] sm:$0xff] %v681
        %708 = vst [vmem:[#allocation2 + $0x80] sm:$0xff] %v682
        %709 = vst [vmem:[#allocation2 + $0x88] sm:$0xff] %v683
        %710 = vst [vmem:[#allocation2 + $0x90] sm:$0xff] %v684
        %711 = vst [vmem:[#allocation2 + $0x98] sm:$0xff] %v685
        %712 = vst [vmem:[#allocation2 + $0xa0] sm:$0xff] %v686
        %713 = vst [vmem:[#allocation2 + $0xa8] sm:$0xff] %v687
        %714 = vst [vmem:[#allocation2 + $0xb0] sm:$0xff] %v688
        %715 = vst [vmem:[#allocation2 + $0xb8] sm:$0xff] %v689
        %716 = vst [vmem:[#allocation2 + $0xc0] sm:$0xff] %v690
        %717 = vst [vmem:[#allocation2 + $0xc8] sm:$0xff] %v691
        %p718 = scmp.eq.s32.totalorder %s21, 12
        // Predicated region
        $region78: #{alexnet_forward.12} parent=68 // pred_check
          %p719 = pneg %p718
        $region79: #{alexnet_forward.12} parent=68 // pred_check_branch
          %721 = sbr.rel (%p719) target = $region81
        $region80: #{alexnet_forward.12} parent=68 // pred_region
          %v722 = vld [vmem:[#allocation2] sm:$0xff]
          %v723 = vld [vmem:[#allocation2 + $0x8] sm:$0xff]
          %v724 = vld [vmem:[#allocation2 + $0x10] sm:$0xff]
          %v725 = vld [vmem:[#allocation2 + $0x18] sm:$0xff]
          %v726 = vld [vmem:[#allocation2 + $0x20] sm:$0xff]
          %v727 = vld [vmem:[#allocation2 + $0x28] sm:$0xff]
          %v728 = vld [vmem:[#allocation2 + $0x30] sm:$0xff]
          %v729 = vld [vmem:[#allocation2 + $0x38] sm:$0xff]
          %v730 = vld [vmem:[#allocation2 + $0x40] sm:$0xff]
          %v731 = vld [vmem:[#allocation2 + $0x48] sm:$0xff]
          %v732 = vld [vmem:[#allocation2 + $0x50] sm:$0xff]
          %v733 = vld [vmem:[#allocation2 + $0x58] sm:$0xff]
          %v734 = vld [vmem:[#allocation2 + $0x60] sm:$0xff]
          %v735 = vld [vmem:[#allocation2 + $0x68] sm:$0xff]
          %v736 = vld [vmem:[#allocation2 + $0x70] sm:$0xff]
          %v737 = vld [vmem:[#allocation2 + $0x78] sm:$0xff]
          %v738 = vld [vmem:[#allocation2 + $0x80] sm:$0xff]
          %v739 = vld [vmem:[#allocation2 + $0x88] sm:$0xff]
          %v740 = vld [vmem:[#allocation2 + $0x90] sm:$0xff]
          %v741 = vld [vmem:[#allocation2 + $0x98] sm:$0xff]
          %v742 = vld [vmem:[#allocation2 + $0xa0] sm:$0xff]
          %v743 = vld [vmem:[#allocation2 + $0xa8] sm:$0xff]
          %v744 = vld [vmem:[#allocation2 + $0xb0] sm:$0xff]
          %v745 = vld [vmem:[#allocation2 + $0xb8] sm:$0xff]
          %v746 = vld [vmem:[#allocation2 + $0xc0] sm:$0xff]
          %v747 = vld [vmem:[#allocation2 + $0xc8] sm:$0xff]
          %v748 = vld [vmem:[%s345] sm:$0x3]
          %v750 = vlaneseq
          %v751 = vshrl.u32 %v750, 7
          %v752 = vsub.s32 0, %v751
          %v753 = vrot.slane %v748, %v752
          %v754 = vlaneseq
          %v755 = vshrl.u32 %v754, 7
          %v756 = vsub.s32 1, %v755
          %v757 = vrot.slane %v748, %v756
          %v760 = vadd.f32 %v722, %v753
          %v761 = vadd.f32 %v723, %v757
          %v762 = vadd.f32 %v724, %v753
          %v763 = vadd.f32 %v725, %v757
          %v764 = vadd.f32 %v726, %v753
          %v765 = vadd.f32 %v727, %v757
          %v766 = vadd.f32 %v728, %v753
          %v767 = vadd.f32 %v729, %v757
          %v768 = vadd.f32 %v730, %v753
          %v769 = vadd.f32 %v731, %v757
          %v770 = vadd.f32 %v732, %v753
          %v771 = vadd.f32 %v733, %v757
          %v772 = vadd.f32 %v734, %v753
          %v773 = vadd.f32 %v735, %v757
          %v774 = vadd.f32 %v736, %v753
          %v775 = vadd.f32 %v737, %v757
          %v776 = vadd.f32 %v738, %v753
          %v777 = vadd.f32 %v739, %v757
          %v778 = vadd.f32 %v740, %v753
          %v779 = vadd.f32 %v741, %v757
          %v780 = vadd.f32 %v742, %v753
          %v781 = vadd.f32 %v743, %v757
          %v782 = vadd.f32 %v744, %v753
          %v783 = vadd.f32 %v745, %v757
          %v784 = vadd.f32 %v746, %v753
          %v785 = vadd.f32 %v747, %v757
          %v786 = vmax.f32 %v760, 0.0
          %v787 = vmax.f32 %v761, 0.0
          %v788 = vmax.f32 %v762, 0.0
          %v789 = vmax.f32 %v763, 0.0
          %v790 = vmax.f32 %v764, 0.0
          %v791 = vmax.f32 %v765, 0.0
          %v792 = vmax.f32 %v766, 0.0
          %v793 = vmax.f32 %v767, 0.0
          %v794 = vmax.f32 %v768, 0.0
          %v795 = vmax.f32 %v769, 0.0
          %v796 = vmax.f32 %v770, 0.0
          %v797 = vmax.f32 %v771, 0.0
          %v798 = vmax.f32 %v772, 0.0
          %v799 = vmax.f32 %v773, 0.0
          %v800 = vmax.f32 %v774, 0.0
          %v801 = vmax.f32 %v775, 0.0
          %v802 = vmax.f32 %v776, 0.0
          %v803 = vmax.f32 %v777, 0.0
          %v804 = vmax.f32 %v778, 0.0
          %v805 = vmax.f32 %v779, 0.0
          %v806 = vmax.f32 %v780, 0.0
          %v807 = vmax.f32 %v781, 0.0
          %v808 = vmax.f32 %v782, 0.0
          %v809 = vmax.f32 %v783, 0.0
          %v810 = vmax.f32 %v784, 0.0
          %v811 = vmax.f32 %v785, 0.0
          %812 = vst [vmem:[%s356] sm:$0xff] %v786
          %813 = vst [vmem:[%s356 + $0x8] sm:$0xff] %v787
          %814 = vst [vmem:[%s356 + $0x10] sm:$0xff] %v788
          %815 = vst [vmem:[%s356 + $0x18] sm:$0xff] %v789
          %816 = vst [vmem:[%s356 + $0x20] sm:$0xff] %v790
          %817 = vst [vmem:[%s356 + $0x28] sm:$0xff] %v791
          %818 = vst [vmem:[%s356 + $0x30] sm:$0xff] %v792
          %819 = vst [vmem:[%s356 + $0x38] sm:$0xff] %v793
          %820 = vst [vmem:[%s356 + $0x40] sm:$0xff] %v794
          %821 = vst [vmem:[%s356 + $0x48] sm:$0xff] %v795
          %822 = vst [vmem:[%s356 + $0x50] sm:$0xff] %v796
          %823 = vst [vmem:[%s356 + $0x58] sm:$0xff] %v797
          %824 = vst [vmem:[%s356 + $0x60] sm:$0xff] %v798
          %825 = vst [vmem:[%s356 + $0x68] sm:$0xff] %v799
          %826 = vst [vmem:[%s356 + $0x70] sm:$0xff] %v800
          %827 = vst [vmem:[%s356 + $0x78] sm:$0xff] %v801
          %828 = vst [vmem:[%s356 + $0x80] sm:$0xff] %v802
          %829 = vst [vmem:[%s356 + $0x88] sm:$0xff] %v803
          %830 = vst [vmem:[%s356 + $0x90] sm:$0xff] %v804
          %831 = vst [vmem:[%s356 + $0x98] sm:$0xff] %v805
          %832 = vst [vmem:[%s356 + $0xa0] sm:$0xff] %v806
          %833 = vst [vmem:[%s356 + $0xa8] sm:$0xff] %v807
          %834 = vst [vmem:[%s356 + $0xb0] sm:$0xff] %v808
          %835 = vst [vmem:[%s356 + $0xb8] sm:$0xff] %v809
          %836 = vst [vmem:[%s356 + $0xc0] sm:$0xff] %v810
          %837 = vst [vmem:[%s356 + $0xc8] sm:$0xff] %v811
        $region81: #{alexnet_forward.12} parent=68 // pred_fallthru
          _
        %s838 = smul.u32 13, %s19
        %s839 = smul.u32 2, %s20
        %p840 = scmp.lt.s32.totalorder %s838, 12
        %s841 = scalar_select %p840, %s838, 12
        %p842 = scmp.lt.s32.totalorder %s839, 1
        %s843 = scalar_select %p842, %s839, 1
        %s844 = smul.addr %s841, 2
        %s845 = sadd.s32 %s843, %s844
        %s846 = smul.addr %s845, 8
        %s847 = scalar_lea.vmem %s3, %s846
        // Predicated region
        $region82: #{alexnet_forward.12} parent=68 // pred_check
          %p848 = pneg %p135
        $region83: #{alexnet_forward.12} parent=68 // pred_check_branch
          %850 = sbr.rel (%p848) target = $region85
        $region84: #{alexnet_forward.12} parent=68 // pred_region
          %s851 = smul.u32 13, %s19
          %s852 = smul.u32 2, %s20
        $region85: #{alexnet_forward.12} parent=68 // pred_fallthru
          _
        // Predicated region
        $region86: #{alexnet_forward.12} parent=68 // pred_check
          %p853 = pneg %p135
        $region87: #{alexnet_forward.12} parent=68 // pred_check_branch
          %855 = sbr.rel (%p853) target = $region89
        $region88: #{alexnet_forward.12} parent=68 // pred_region
          %s856 = smul.u32 13, %s19
          %s857 = smul.u32 2, %s20
          %p858 = scmp.lt.s32.totalorder %s856, 12
          %s859 = scalar_select %p858, %s856, 12
          %p860 = scmp.lt.s32.totalorder %s857, 1
          %s861 = scalar_select %p860, %s857, 1
          %s862 = smul.addr %s859, 2
          %s863 = sadd.s32 %s861, %s862
          %s864 = smul.addr %s863, 8
          %s865 = scalar_lea.vmem %s3, %s864
        $region89: #{alexnet_forward.12} parent=68 // pred_fallthru
          _
      $region69: #{alexnet_forward.12} parent=5 // pred_fallthru
        _
      %p866 = scmp.le.s32.totalorder 2, %s9
      // Predicated region
      $region90: #{alexnet_forward.12} parent=5 // pred_check
        %p867 = pneg %p866
      $region91: #{alexnet_forward.12} parent=5 // pred_check_branch
        %869 = sbr.rel (%p867) target = $region93
      $region92: #{alexnet_forward.12} parent=5 // pred_region
        %s870 = ssub.s32 %s9, 2
      $region93: #{alexnet_forward.12} parent=5 // pred_fallthru
        _
    $region6: #{alexnet_forward.12} parent=1 // loop_footer
      %s13 = sadd.s32 1, %s9
    $region7: #{alexnet_forward.12} parent=1 // loop_footer_branch
      %8 = sbr.rel target = $region3
    $region8: #{alexnet_forward.12} parent=1 // loop_exit
      _

// kernel: alexnet_forward.13
$region0: #{alexnet_forward.13}
  #allocation0 [shape = 'u32[]', space=smem, size = 0x4, offset = 0x4, fixed_abs, tag = 'smem constant byte address 0x4 - core index']
  #allocation1 [shape = 'u32[144,128]{1,0:T(1,128)}', space=vmem, size = 0x12000, scoped, tag = 'internal scratch']
  %s0 = inlined_call_operand.vmem [shape: f32[64,128], index: 0, kind: input, shape index: {}]
  %s1 = inlined_call_operand.vmem [shape: f32[64,128], index: 1, kind: input, shape index: {}]
  %s2 = inlined_call_operand.vmem [shape: f32[64,128], index: 2, kind: input, shape index: {}]
  %s3 = inlined_call_operand.vmem [shape: f32[64,128], index: 3, kind: output, shape index: {}]
  %s4 = sld [smem:[#allocation0]]
  $region22: #{alexnet_forward.13} parent=0
    _
  %s6 = ssub.s32 1, %s4
  %s7 = scalar_select 0, %s6, %s4
  // Predicated region
  $region2: #{alexnet_forward.13} parent=0 // pred_check
    _
  $region3: #{alexnet_forward.13} parent=0 // pred_check_branch
    %9 = sbr.rel (0) target = $region5
  $region4: #{alexnet_forward.13} parent=0 // pred_region
    _
  $region5: #{alexnet_forward.13} parent=0 // pred_fallthru
    _
  // Predicated region
  $region6: #{alexnet_forward.13} parent=0 // pred_check
    _
  $region7: #{alexnet_forward.13} parent=0 // pred_check_branch
    %11 = sbr.rel (0) target = $region9
  $region8: #{alexnet_forward.13} parent=0 // pred_region
    _
  $region9: #{alexnet_forward.13} parent=0 // pred_fallthru
    _
  // Predicated region
  $region10: #{alexnet_forward.13} parent=0 // pred_check
    _
  $region11: #{alexnet_forward.13} parent=0 // pred_check_branch
    %13 = sbr.rel (0) target = $region13
  $region12: #{alexnet_forward.13} parent=0 // pred_region
    _
  $region13: #{alexnet_forward.13} parent=0 // pred_fallthru
    _
  %v14 = vld [vmem:[%s0] sm:$0xff]
  %v15 = vld [vmem:[%s0 + $0x8] sm:$0xff]
  %v16 = vld [vmem:[%s0 + $0x10] sm:$0xff]
  %v17 = vld [vmem:[%s0 + $0x18] sm:$0xff]
  %v18 = vld [vmem:[%s0 + $0x20] sm:$0xff]
  %v19 = vld [vmem:[%s0 + $0x28] sm:$0xff]
  %v20 = vld [vmem:[%s0 + $0x30] sm:$0xff]
  %v21 = vld [vmem:[%s0 + $0x38] sm:$0xff]
  %v22 = vld [vmem:[%s1] sm:$0xff]
  %v23 = vld [vmem:[%s1 + $0x8] sm:$0xff]
  %v24 = vld [vmem:[%s1 + $0x10] sm:$0xff]
  %v25 = vld [vmem:[%s1 + $0x18] sm:$0xff]
  %v26 = vld [vmem:[%s1 + $0x20] sm:$0xff]
  %v27 = vld [vmem:[%s1 + $0x28] sm:$0xff]
  %v28 = vld [vmem:[%s1 + $0x30] sm:$0xff]
  %v29 = vld [vmem:[%s1 + $0x38] sm:$0xff]
  %v30 = vmax.f32 %v14, %v22
  %v31 = vmax.f32 %v15, %v23
  %v32 = vmax.f32 %v16, %v24
  %v33 = vmax.f32 %v17, %v25
  %v34 = vmax.f32 %v18, %v26
  %v35 = vmax.f32 %v19, %v27
  %v36 = vmax.f32 %v20, %v28
  %v37 = vmax.f32 %v21, %v29
  %v38 = vld [vmem:[%s2] sm:$0xff]
  %v39 = vld [vmem:[%s2 + $0x8] sm:$0xff]
  %v40 = vld [vmem:[%s2 + $0x10] sm:$0xff]
  %v41 = vld [vmem:[%s2 + $0x18] sm:$0xff]
  %v42 = vld [vmem:[%s2 + $0x20] sm:$0xff]
  %v43 = vld [vmem:[%s2 + $0x28] sm:$0xff]
  %v44 = vld [vmem:[%s2 + $0x30] sm:$0xff]
  %v45 = vld [vmem:[%s2 + $0x38] sm:$0xff]
  %v46 = vmax.f32 %v30, %v38
  %v47 = vmax.f32 %v31, %v39
  %v48 = vmax.f32 %v32, %v40
  %v49 = vmax.f32 %v33, %v41
  %v50 = vmax.f32 %v34, %v42
  %v51 = vmax.f32 %v35, %v43
  %v52 = vmax.f32 %v36, %v44
  %v53 = vmax.f32 %v37, %v45
  %54 = vst [vmem:[%s3] sm:$0xff] %v46
  %55 = vst [vmem:[%s3 + $0x8] sm:$0xff] %v47
  %56 = vst [vmem:[%s3 + $0x10] sm:$0xff] %v48
  %57 = vst [vmem:[%s3 + $0x18] sm:$0xff] %v49
  %58 = vst [vmem:[%s3 + $0x20] sm:$0xff] %v50
  %59 = vst [vmem:[%s3 + $0x28] sm:$0xff] %v51
  %60 = vst [vmem:[%s3 + $0x30] sm:$0xff] %v52
  %61 = vst [vmem:[%s3 + $0x38] sm:$0xff] %v53
  // Predicated region
  $region14: #{alexnet_forward.13} parent=0 // pred_check
    _
  $region15: #{alexnet_forward.13} parent=0 // pred_check_branch
    %63 = sbr.rel (0) target = $region17
  $region16: #{alexnet_forward.13} parent=0 // pred_region
    _
  $region17: #{alexnet_forward.13} parent=0 // pred_fallthru
    _
  // Predicated region
  $region18: #{alexnet_forward.13} parent=0 // pred_check
    _
  $region19: #{alexnet_forward.13} parent=0 // pred_check_branch
    %65 = sbr.rel (0) target = $region21
  $region20: #{alexnet_forward.13} parent=0 // pred_region
    _
  $region21: #{alexnet_forward.13} parent=0 // pred_fallthru
    _

// kernel: alexnet_forward.14
$region0: #{alexnet_forward.14}
  #allocation0 [shape = 'u32[]', space=smem, size = 0x4, offset = 0x4, fixed_abs, tag = 'smem constant byte address 0x4 - core index']
  #allocation1 [shape = 'u32[144,128]{1,0:T(1,128)}', space=vmem, size = 0x12000, scoped, tag = 'internal scratch']
  %s0 = inlined_call_operand.vmem [shape: f32[32,128], index: 0, kind: input, shape index: {}]
  %s1 = inlined_call_operand.vmem [shape: f32[32,128], index: 1, kind: input, shape index: {}]
  %s2 = inlined_call_operand.vmem [shape: f32[32,128], index: 2, kind: input, shape index: {}]
  %s3 = inlined_call_operand.vmem [shape: f32[32,128], index: 3, kind: output, shape index: {}]
  %s4 = sld [smem:[#allocation0]]
  $region22: #{alexnet_forward.14} parent=0
    _
  %s6 = ssub.s32 1, %s4
  %s7 = scalar_select 0, %s6, %s4
  // Predicated region
  $region2: #{alexnet_forward.14} parent=0 // pred_check
    _
  $region3: #{alexnet_forward.14} parent=0 // pred_check_branch
    %9 = sbr.rel (0) target = $region5
  $region4: #{alexnet_forward.14} parent=0 // pred_region
    _
  $region5: #{alexnet_forward.14} parent=0 // pred_fallthru
    _
  // Predicated region
  $region6: #{alexnet_forward.14} parent=0 // pred_check
    _
  $region7: #{alexnet_forward.14} parent=0 // pred_check_branch
    %11 = sbr.rel (0) target = $region9
  $region8: #{alexnet_forward.14} parent=0 // pred_region
    _
  $region9: #{alexnet_forward.14} parent=0 // pred_fallthru
    _
  // Predicated region
  $region10: #{alexnet_forward.14} parent=0 // pred_check
    _
  $region11: #{alexnet_forward.14} parent=0 // pred_check_branch
    %13 = sbr.rel (0) target = $region13
  $region12: #{alexnet_forward.14} parent=0 // pred_region
    _
  $region13: #{alexnet_forward.14} parent=0 // pred_fallthru
    _
  %v14 = vld [vmem:[%s0] sm:$0xff]
  %v15 = vld [vmem:[%s0 + $0x8] sm:$0xff]
  %v16 = vld [vmem:[%s0 + $0x10] sm:$0xff]
  %v17 = vld [vmem:[%s0 + $0x18] sm:$0xff]
  %v18 = vld [vmem:[%s1] sm:$0xff]
  %v19 = vld [vmem:[%s1 + $0x8] sm:$0xff]
  %v20 = vld [vmem:[%s1 + $0x10] sm:$0xff]
  %v21 = vld [vmem:[%s1 + $0x18] sm:$0xff]
  %v22 = vmax.f32 %v14, %v18
  %v23 = vmax.f32 %v15, %v19
  %v24 = vmax.f32 %v16, %v20
  %v25 = vmax.f32 %v17, %v21
  %v26 = vld [vmem:[%s2] sm:$0xff]
  %v27 = vld [vmem:[%s2 + $0x8] sm:$0xff]
  %v28 = vld [vmem:[%s2 + $0x10] sm:$0xff]
  %v29 = vld [vmem:[%s2 + $0x18] sm:$0xff]
  %v30 = vmax.f32 %v22, %v26
  %v31 = vmax.f32 %v23, %v27
  %v32 = vmax.f32 %v24, %v28
  %v33 = vmax.f32 %v25, %v29
  %34 = vst [vmem:[%s3] sm:$0xff] %v30
  %35 = vst [vmem:[%s3 + $0x8] sm:$0xff] %v31
  %36 = vst [vmem:[%s3 + $0x10] sm:$0xff] %v32
  %37 = vst [vmem:[%s3 + $0x18] sm:$0xff] %v33
  // Predicated region
  $region14: #{alexnet_forward.14} parent=0 // pred_check
    _
  $region15: #{alexnet_forward.14} parent=0 // pred_check_branch
    %39 = sbr.rel (0) target = $region17
  $region16: #{alexnet_forward.14} parent=0 // pred_region
    _
  $region17: #{alexnet_forward.14} parent=0 // pred_fallthru
    _
  // Predicated region
  $region18: #{alexnet_forward.14} parent=0 // pred_check
    _
  $region19: #{alexnet_forward.14} parent=0 // pred_check_branch
    %41 = sbr.rel (0) target = $region21
  $region20: #{alexnet_forward.14} parent=0 // pred_region
    _
  $region21: #{alexnet_forward.14} parent=0 // pred_fallthru
    _

// kernel: alexnet_forward.15
$region0: #{alexnet_forward.15}
  #allocation0 [shape = 'u32[]', space=smem, size = 0x4, offset = 0x4, fixed_abs, tag = 'smem constant byte address 0x4 - core index']
  #allocation1 [shape = 'u32[144,128]{1,0:T(1,128)}', space=vmem, size = 0x12000, scoped, tag = 'internal scratch']
  #allocation2 [shape = 'f32[24,128]{1,0:T(8,128)}', space=vmem, size = 0x3000, scoped, tag = 'scratch operand']
  %s0 = inlined_call_operand.vmem [shape: bf16[24,1792], index: 0, kind: input, shape index: {}]
  %s1 = inlined_call_operand.vmem [shape: bf16[1792,384], index: 1, kind: input, shape index: {}]
  %s2 = inlined_call_operand.vmem [shape: f32[1,384], index: 2, kind: input, shape index: {}]
  %s3 = inlined_call_operand.vmem [shape: f32[24,384], index: 3, kind: output, shape index: {}]
  %s4 = sld [smem:[#allocation0]]
  $region166: #{alexnet_forward.15} parent=0
    _
  %s6 = ssub.s32 1, %s4
  %s7 = scalar_select 0, %s6, %s4
  $region1: #{alexnet_forward.15} parent=0
    #allocation3 [shape = 'u8[24576]{0}', space=vmem, size = 0x6000, scoped, tag = 'input window, operand 0']
    #allocation4 [shape = 'u8[131072]{0}', space=vmem, size = 0x20000, scoped, tag = 'input window, operand 1']
    #allocation5 [shape = 'u8[24576]{0}', space=vmem, size = 0x6000, scoped, tag = 'output window, operand 0']
    loop: start=0, step=1, limit=23
    $region2: #{alexnet_forward.15} parent=1 // loop_pre_header
      _
    $region3: #{alexnet_forward.15} parent=1 // loop_header
      %s9 = sphi 0, %s13
      %p10 = scmp.ge.s32.totalorder %s9, 23
      %s16 = sphi 0, %s35
      %s17 = sphi 0, %s31
      %s18 = sphi 0, %s27
      %s19 = sphi 0, %s16
      %s20 = sphi 0, %s17
      %s21 = sphi 0, %s18
      %s22 = sphi 0, %s19
      %s23 = sphi 0, %s20
      %s24 = sphi 0, %s21
      %s40 = sphi 0, %s42
      %s43 = sphi 0, %s40
      %s44 = sphi 0, %s43
      %s60 = sphi 0, %s44
      %s68 = sphi 0, %s70
      %s71 = sphi 0, %s68
      %s72 = sphi 0, %s71
      %s88 = sphi 0, %s72
      %s94 = sphi 0, %s96
      %s97 = sphi 0, %s94
      %s98 = sphi 0, %s97
      %s114 = sphi 0, %s98
      %s122 = sphi 0, %s124
      %s125 = sphi 0, %s122
      %s126 = sphi 0, %s125
      %s142 = sphi 0, %s126
    $region4: #{alexnet_forward.15} parent=1 // loop_header_branch
      %12 = sbr.rel (%p10) target = $region8
    $region5: #{alexnet_forward.15} parent=1 // loop_body
      %s14 = ssub.s32 %s9, 1
      %s15 = ssub.s32 %s9, 2
      %s25 = sadd.s32 1, %s18
      %p26 = scmp.ge.s32.totalorder %s25, 7
      %s27 = scalar_select %p26, 0, %s25
      %s28 = sadd.s32 1, %s17
      %s29 = scalar_select %p26, %s28, %s17
      %p30 = scmp.ge.s32.totalorder %s29, 3
      %s31 = scalar_select %p30, 0, %s29
      %s32 = sadd.s32 1, %s16
      %s33 = scalar_select %p30, %s32, %s16
      %p34 = scmp.ge.s32.totalorder %s33, 1
      %s35 = scalar_select %p34, 0, %s33
      %s36 = ssub.s32 %s16, %s35
      %s37 = ssub.s32 %s18, %s27
      %s38 = sor.u32 %s36, %s37
      %p39 = scmp.eq.s32.totalorder %s38, 0
      %s41 = sadd.s32 %s40, 1
      %s42 = scalar_select %p39, %s40, %s41
      %p45 = pneg %p39
      %p46 = scmp.eq.s32.totalorder %s9, 20
      %p47 = por %p45, %p46
      %p48 = scmp.ne.s32.totalorder %s40, %s43
      %p49 = scmp.eq.s32.totalorder %s9, 0
      %p50 = por %p48, %p49
      %p51 = scmp.ne.s32.totalorder %s40, %s43
      %p52 = scmp.eq.s32.totalorder %s14, 20
      %p53 = por %p51, %p52
      %p54 = scmp.ne.s32.totalorder %s43, %s44
      %p55 = scmp.eq.s32.totalorder %s14, 0
      %p56 = por %p54, %p55
      %p57 = scmp.ne.s32.totalorder %s43, %s44
      %p58 = scmp.eq.s32.totalorder %s15, 20
      %p59 = por %p57, %p58
      %p61 = scmp.ne.s32.totalorder %s44, %s60
      %p62 = scmp.eq.s32.totalorder %s15, 0
      %p63 = por %p61, %p62
      %s64 = ssub.s32 %s18, %s27
      %s65 = ssub.s32 %s17, %s31
      %s66 = sor.u32 %s64, %s65
      %p67 = scmp.eq.s32.totalorder %s66, 0
      %s69 = sadd.s32 %s68, 1
      %s70 = scalar_select %p67, %s68, %s69
      %p73 = pneg %p67
      %p74 = scmp.eq.s32.totalorder %s9, 20
      %p75 = por %p73, %p74
      %p76 = scmp.ne.s32.totalorder %s68, %s71
      %p77 = scmp.eq.s32.totalorder %s9, 0
      %p78 = por %p76, %p77
      %p79 = scmp.ne.s32.totalorder %s68, %s71
      %p80 = scmp.eq.s32.totalorder %s14, 20
      %p81 = por %p79, %p80
      %p82 = scmp.ne.s32.totalorder %s71, %s72
      %p83 = scmp.eq.s32.totalorder %s14, 0
      %p84 = por %p82, %p83
      %p85 = scmp.ne.s32.totalorder %s71, %s72
      %p86 = scmp.eq.s32.totalorder %s15, 20
      %p87 = por %p85, %p86
      %p89 = scmp.ne.s32.totalorder %s72, %s88
      %p90 = scmp.eq.s32.totalorder %s15, 0
      %p91 = por %p89, %p90
      %s92 = ssub.s32 %s17, %s31
      %p93 = scmp.eq.s32.totalorder %s92, 0
      %s95 = sadd.s32 %s94, 1
      %s96 = scalar_select %p93, %s94, %s95
      %p99 = pneg %p93
      %p100 = scmp.eq.s32.totalorder %s9, 20
      %p101 = por %p99, %p100
      %p102 = scmp.ne.s32.totalorder %s94, %s97
      %p103 = scmp.eq.s32.totalorder %s9, 0
      %p104 = por %p102, %p103
      %p105 = scmp.ne.s32.totalorder %s94, %s97
      %p106 = scmp.eq.s32.totalorder %s14, 20
      %p107 = por %p105, %p106
      %p108 = scmp.ne.s32.totalorder %s97, %s98
      %p109 = scmp.eq.s32.totalorder %s14, 0
      %p110 = por %p108, %p109
      %p111 = scmp.ne.s32.totalorder %s97, %s98
      %p112 = scmp.eq.s32.totalorder %s15, 20
      %p113 = por %p111, %p112
      %p115 = scmp.ne.s32.totalorder %s98, %s114
      %p116 = scmp.eq.s32.totalorder %s15, 0
      %p117 = por %p115, %p116
      %s118 = ssub.s32 %s16, %s35
      %s119 = ssub.s32 %s17, %s31
      %s120 = sor.u32 %s118, %s119
      %p121 = scmp.eq.s32.totalorder %s120, 0
      %s123 = sadd.s32 %s122, 1
      %s124 = scalar_select %p121, %s122, %s123
      %p127 = pneg %p121
      %p128 = scmp.eq.s32.totalorder %s9, 20
      %p129 = por %p127, %p128
      %p130 = scmp.ne.s32.totalorder %s122, %s125
      %p131 = scmp.eq.s32.totalorder %s9, 0
      %p132 = por %p130, %p131
      %p133 = scmp.ne.s32.totalorder %s122, %s125
      %p134 = scmp.eq.s32.totalorder %s14, 20
      %p135 = por %p133, %p134
      %p136 = scmp.ne.s32.totalorder %s125, %s126
      %p137 = scmp.eq.s32.totalorder %s14, 0
      %p138 = por %p136, %p137
      %p139 = scmp.ne.s32.totalorder %s125, %s126
      %p140 = scmp.eq.s32.totalorder %s15, 20
      %p141 = por %p139, %p140
      %p143 = scmp.ne.s32.totalorder %s126, %s142
      %p144 = scmp.eq.s32.totalorder %s15, 0
      %p145 = por %p143, %p144
      %p146 = scmp.le.s32.totalorder 1, %s9
      %p147 = scmp.lt.s32.totalorder %s9, 22
      %p148 = pnand %p146, %p147
      %p149 = pneg %p148
      // Predicated region
      $region9: #{alexnet_forward.15} parent=5 // pred_check
        _
      $region10: #{alexnet_forward.15} parent=5 // pred_check_branch
        %151 = sbr.rel (%p148) target = $region12
      $region11: #{alexnet_forward.15} parent=5 // pred_region
        %s152 = ssub.s32 %s9, 1
      $region12: #{alexnet_forward.15} parent=5 // pred_fallthru
        _
      %p153 = scmp.lt.s32.totalorder %s9, 21
      // Predicated region
      $region13: #{alexnet_forward.15} parent=5 // pred_check
        %p154 = pneg %p153
      $region14: #{alexnet_forward.15} parent=5 // pred_check_branch
        %156 = sbr.rel (%p154) target = $region16
      $region15: #{alexnet_forward.15} parent=5 // pred_region
        // Predicated region
        $region17: #{alexnet_forward.15} parent=15 // pred_check
          %p157 = pneg %p50
        $region18: #{alexnet_forward.15} parent=15 // pred_check_branch
          %159 = sbr.rel (%p157) target = $region20
        $region19: #{alexnet_forward.15} parent=15 // pred_region
          %s160 = sand.u32 %s40, 1
          %s161 = sand.u32 %s40, 1
          %s162 = smul.addr %s161, 24
          %s163 = scalar_lea.vmem [#allocation3], %s162
          %s164 = smul.u32 3, %s16
          %s165 = smul.u32 2, %s18
          %s166 = smul.addr %s164, 14
          %s167 = sadd.s32 %s165, %s166
          %s168 = smul.addr %s167, 4
          %s169 = scalar_lea.vmem %s0, %s168
          // Predicated region
          $region21: #{alexnet_forward.15} parent=19 // pred_check
            _
          $region22: #{alexnet_forward.15} parent=19 // pred_check_branch
            %171 = sbr.rel (0) target = $region24
          $region23: #{alexnet_forward.15} parent=19 // pred_region
            // Predicated region
            $region25: #{alexnet_forward.15} parent=23 // pred_check
              _
            $region26: #{alexnet_forward.15} parent=23 // pred_check_branch
              %173 = sbr.rel (0) target = $region28
            $region27: #{alexnet_forward.15} parent=23 // pred_region
              // Predicated region
              $region40: #{alexnet_forward.15} parent=27 // pred_check
                _
              $region41: #{alexnet_forward.15} parent=27 // pred_check_branch
                %192 = sbr.rel (0) target = $region43
              $region42: #{alexnet_forward.15} parent=27 // pred_region
                loop: start=0, step=1, limit=1
                $region44: #{alexnet_forward.15} parent=42 // loop_pre_header
                  _
                $region45: #{alexnet_forward.15} parent=42 // loop_header
                  %s194 = sphi 0, %s198
                  %p195 = scmp.ge.s32.totalorder %s194, 1
                  %s199 = sphi %s169, %s169
                  %s200 = sphi %s163, %s163
                $region46: #{alexnet_forward.15} parent=42 // loop_header_branch
                  %197 = sbr.rel (%p195) target = $region50
                $region47: #{alexnet_forward.15} parent=42 // loop_body
                  %v201 = vld [vmem:[%s199] sm:$0xff]
                  %202 = vst [vmem:[%s200] sm:$0xff] %v201
                  %v203 = vld [vmem:[%s199 + $0x38] sm:$0xff]
                  %204 = vst [vmem:[%s200 + $0x8] sm:$0xff] %v203
                  %v205 = vld [vmem:[%s199 + $0x70] sm:$0xff]
                  %206 = vst [vmem:[%s200 + $0x10] sm:$0xff] %v205
                $region48: #{alexnet_forward.15} parent=42 // loop_footer
                  %s198 = sadd.s32 1, %s194
                $region49: #{alexnet_forward.15} parent=42 // loop_footer_branch
                  %193 = sbr.rel target = $region45
                $region50: #{alexnet_forward.15} parent=42 // loop_exit
                  _
              $region43: #{alexnet_forward.15} parent=27 // pred_fallthru
                _
              // Predicated region
              $region51: #{alexnet_forward.15} parent=27 // pred_check
                _
              $region52: #{alexnet_forward.15} parent=27 // pred_check_branch
                %208 = sbr.rel target = $region54
              $region53: #{alexnet_forward.15} parent=27 // pred_region
                _
              $region54: #{alexnet_forward.15} parent=27 // pred_fallthru
                _
            $region28: #{alexnet_forward.15} parent=23 // pred_fallthru
              _
            // Predicated region
            $region29: #{alexnet_forward.15} parent=23 // pred_check
              _
            $region30: #{alexnet_forward.15} parent=23 // pred_check_branch
              %175 = sbr.rel target = $region32
            $region31: #{alexnet_forward.15} parent=23 // pred_region
              loop: start=0, step=1, limit=1
              $region33: #{alexnet_forward.15} parent=31 // loop_pre_header
                _
              $region34: #{alexnet_forward.15} parent=31 // loop_header
                %s178 = sphi 0, %s182
                %p179 = scmp.ge.s32.totalorder %s178, 1
                %s183 = sphi %s169, %s169
                %s184 = sphi %s163, %s163
              $region35: #{alexnet_forward.15} parent=31 // loop_header_branch
                %181 = sbr.rel (%p179) target = $region39
              $region36: #{alexnet_forward.15} parent=31 // loop_body
                %v185 = vld [vmem:[%s183] sm:$0xff]
                %186 = vst [vmem:[%s184] sm:$0xff] %v185
                %v187 = vld [vmem:[%s183 + $0x38] sm:$0xff]
                %188 = vst [vmem:[%s184 + $0x8] sm:$0xff] %v187
                %v189 = vld [vmem:[%s183 + $0x70] sm:$0xff]
                %190 = vst [vmem:[%s184 + $0x10] sm:$0xff] %v189
              $region37: #{alexnet_forward.15} parent=31 // loop_footer
                %s182 = sadd.s32 1, %s178
              $region38: #{alexnet_forward.15} parent=31 // loop_footer_branch
                %177 = sbr.rel target = $region34
              $region39: #{alexnet_forward.15} parent=31 // loop_exit
                _
            $region32: #{alexnet_forward.15} parent=23 // pred_fallthru
              _
          $region24: #{alexnet_forward.15} parent=19 // pred_fallthru
            _
          %209 = vnop
        $region20: #{alexnet_forward.15} parent=15 // pred_fallthru
          _
        // Predicated region
        $region55: #{alexnet_forward.15} parent=15 // pred_check
          %p210 = pneg %p78
        $region56: #{alexnet_forward.15} parent=15 // pred_check_branch
          %212 = sbr.rel (%p210) target = $region58
        $region57: #{alexnet_forward.15} parent=15 // pred_region
          %s213 = sand.u32 %s68, 1
          %s214 = sand.u32 %s68, 1
          %s215 = smul.addr %s214, 128
          %s216 = scalar_lea.vmem [#allocation4], %s215
          %s217 = smul.u32 32, %s18
          %s218 = smul.addr %s217, 3
          %s219 = sadd.s32 %s17, %s218
          %s220 = smul.addr %s219, 4
          %s221 = scalar_lea.vmem %s1, %s220
          // Predicated region
          $region59: #{alexnet_forward.15} parent=57 // pred_check
            _
          $region60: #{alexnet_forward.15} parent=57 // pred_check_branch
            %223 = sbr.rel (0) target = $region62
          $region61: #{alexnet_forward.15} parent=57 // pred_region
            // Predicated region
            $region63: #{alexnet_forward.15} parent=61 // pred_check
              _
            $region64: #{alexnet_forward.15} parent=61 // pred_check_branch
              %225 = sbr.rel target = $region66
            $region65: #{alexnet_forward.15} parent=61 // pred_region
              // Predicated region
              $region78: #{alexnet_forward.15} parent=65 // pred_check
                _
              $region79: #{alexnet_forward.15} parent=65 // pred_check_branch
                %302 = sbr.rel (0) target = $region81
              $region80: #{alexnet_forward.15} parent=65 // pred_region
                loop: start=0, step=1, limit=1
                $region82: #{alexnet_forward.15} parent=80 // loop_pre_header
                  _
                $region83: #{alexnet_forward.15} parent=80 // loop_header
                  %s304 = sphi 0, %s308
                  %p305 = scmp.ge.s32.totalorder %s304, 1
                  %s309 = sphi %s221, %s221
                  %s310 = sphi %s216, %s216
                $region84: #{alexnet_forward.15} parent=80 // loop_header_branch
                  %307 = sbr.rel (%p305) target = $region88
                $region85: #{alexnet_forward.15} parent=80 // loop_body
                  _
                $region86: #{alexnet_forward.15} parent=80 // loop_footer
                  %s308 = sadd.s32 1, %s304
                $region87: #{alexnet_forward.15} parent=80 // loop_footer_branch
                  %303 = sbr.rel target = $region83
                $region88: #{alexnet_forward.15} parent=80 // loop_exit
                  _
                loop: start=0, step=1, limit=1
                $region89: #{alexnet_forward.15} parent=80 // loop_pre_header
                  _
                $region90: #{alexnet_forward.15} parent=80 // loop_header
                  %s313 = sphi 0, %s317
                  %p314 = scmp.ge.s32.totalorder %s313, 1
                  %s318 = sphi %s221, %s221
                  %s319 = sphi %s216, %s216
                $region91: #{alexnet_forward.15} parent=80 // loop_header_branch
                  %316 = sbr.rel (%p314) target = $region95
                $region92: #{alexnet_forward.15} parent=80 // loop_body
                  %v320 = vld [vmem:[%s318] sm:$0xf]
                  %321 = vst [vmem:[%s319] sm:$0xf] %v320
                  %v322 = vld [vmem:[%s318 + $0xc] sm:$0xf]
                  %323 = vst [vmem:[%s319 + $0x4] sm:$0xf] %v322
                  %v324 = vld [vmem:[%s318 + $0x18] sm:$0xf]
                  %325 = vst [vmem:[%s319 + $0x8] sm:$0xf] %v324
                  %v326 = vld [vmem:[%s318 + $0x24] sm:$0xf]
                  %327 = vst [vmem:[%s319 + $0xc] sm:$0xf] %v326
                  %v328 = vld [vmem:[%s318 + $0x30] sm:$0xf]
                  %329 = vst [vmem:[%s319 + $0x10] sm:$0xf] %v328
                  %v330 = vld [vmem:[%s318 + $0x3c] sm:$0xf]
                  %331 = vst [vmem:[%s319 + $0x14] sm:$0xf] %v330
                  %v332 = vld [vmem:[%s318 + $0x48] sm:$0xf]
                  %333 = vst [vmem:[%s319 + $0x18] sm:$0xf] %v332
                  %v334 = vld [vmem:[%s318 + $0x54] sm:$0xf]
                  %335 = vst [vmem:[%s319 + $0x1c] sm:$0xf] %v334
                  %v336 = vld [vmem:[%s318 + $0x60] sm:$0xf]
                  %337 = vst [vmem:[%s319 + $0x20] sm:$0xf] %v336
                  %v338 = vld [vmem:[%s318 + $0x6c] sm:$0xf]
                  %339 = vst [vmem:[%s319 + $0x24] sm:$0xf] %v338
                  %v340 = vld [vmem:[%s318 + $0x78] sm:$0xf]
                  %341 = vst [vmem:[%s319 + $0x28] sm:$0xf] %v340
                  %v342 = vld [vmem:[%s318 + $0x84] sm:$0xf]
                  %343 = vst [vmem:[%s319 + $0x2c] sm:$0xf] %v342
                  %v344 = vld [vmem:[%s318 + $0x90] sm:$0xf]
                  %345 = vst [vmem:[%s319 + $0x30] sm:$0xf] %v344
                  %v346 = vld [vmem:[%s318 + $0x9c] sm:$0xf]
                  %347 = vst [vmem:[%s319 + $0x34] sm:$0xf] %v346
                  %v348 = vld [vmem:[%s318 + $0xa8] sm:$0xf]
                  %349 = vst [vmem:[%s319 + $0x38] sm:$0xf] %v348
                  %v350 = vld [vmem:[%s318 + $0xb4] sm:$0xf]
                  %351 = vst [vmem:[%s319 + $0x3c] sm:$0xf] %v350
                  %v352 = vld [vmem:[%s318 + $0xc0] sm:$0xf]
                  %353 = vst [vmem:[%s319 + $0x40] sm:$0xf] %v352
                  %v354 = vld [vmem:[%s318 + $0xcc] sm:$0xf]
                  %355 = vst [vmem:[%s319 + $0x44] sm:$0xf] %v354
                  %v356 = vld [vmem:[%s318 + $0xd8] sm:$0xf]
                  %357 = vst [vmem:[%s319 + $0x48] sm:$0xf] %v356
                  %v358 = vld [vmem:[%s318 + $0xe4] sm:$0xf]
                  %359 = vst [vmem:[%s319 + $0x4c] sm:$0xf] %v358
                  %v360 = vld [vmem:[%s318 + $0xf0] sm:$0xf]
                  %361 = vst [vmem:[%s319 + $0x50] sm:$0xf] %v360
                  %v362 = vld [vmem:[%s318 + $0xfc] sm:$0xf]
                  %363 = vst [vmem:[%s319 + $0x54] sm:$0xf] %v362
                  %v364 = vld [vmem:[%s318 + $0x108] sm:$0xf]
                  %365 = vst [vmem:[%s319 + $0x58] sm:$0xf] %v364
                  %v366 = vld [vmem:[%s318 + $0x114] sm:$0xf]
                  %367 = vst [vmem:[%s319 + $0x5c] sm:$0xf] %v366
                  %v368 = vld [vmem:[%s318 + $0x120] sm:$0xf]
                  %369 = vst [vmem:[%s319 + $0x60] sm:$0xf] %v368
                  %v370 = vld [vmem:[%s318 + $0x12c] sm:$0xf]
                  %371 = vst [vmem:[%s319 + $0x64] sm:$0xf] %v370
                  %v372 = vld [vmem:[%s318 + $0x138] sm:$0xf]
                  %373 = vst [vmem:[%s319 + $0x68] sm:$0xf] %v372
                  %v374 = vld [vmem:[%s318 + $0x144] sm:$0xf]
                  %375 = vst [vmem:[%s319 + $0x6c] sm:$0xf] %v374
                  %v376 = vld [vmem:[%s318 + $0x150] sm:$0xf]
                  %377 = vst [vmem:[%s319 + $0x70] sm:$0xf] %v376
                  %v378 = vld [vmem:[%s318 + $0x15c] sm:$0xf]
                  %379 = vst [vmem:[%s319 + $0x74] sm:$0xf] %v378
                  %v380 = vld [vmem:[%s318 + $0x168] sm:$0xf]
                  %381 = vst [vmem:[%s319 + $0x78] sm:$0xf] %v380
                  %v382 = vld [vmem:[%s318 + $0x174] sm:$0xf]
                  %383 = vst [vmem:[%s319 + $0x7c] sm:$0xf] %v382
                $region93: #{alexnet_forward.15} parent=80 // loop_footer
                  %s317 = sadd.s32 1, %s313
                $region94: #{alexnet_forward.15} parent=80 // loop_footer_branch
                  %312 = sbr.rel target = $region90
                $region95: #{alexnet_forward.15} parent=80 // loop_exit
                  _
              $region81: #{alexnet_forward.15} parent=65 // pred_fallthru
                _
            $region66: #{alexnet_forward.15} parent=61 // pred_fallthru
              _
            // Predicated region
            $region67: #{alexnet_forward.15} parent=61 // pred_check
              _
            $region68: #{alexnet_forward.15} parent=61 // pred_check_branch
              %227 = sbr.rel (0) target = $region70
            $region69: #{alexnet_forward.15} parent=61 // pred_region
              loop: start=0, step=1, limit=1
              $region71: #{alexnet_forward.15} parent=69 // loop_pre_header
                _
              $region72: #{alexnet_forward.15} parent=69 // loop_header
                %s230 = sphi 0, %s234
                %p231 = scmp.ge.s32.totalorder %s230, 1
                %s235 = sphi %s221, %s221
                %s236 = sphi %s216, %s216
              $region73: #{alexnet_forward.15} parent=69 // loop_header_branch
                %233 = sbr.rel (%p231) target = $region77
              $region74: #{alexnet_forward.15} parent=69 // loop_body
                %v237 = vld [vmem:[%s235] sm:$0xf]
                %238 = vst [vmem:[%s236] sm:$0xf] %v237
                %v239 = vld [vmem:[%s235 + $0xc] sm:$0xf]
                %240 = vst [vmem:[%s236 + $0x4] sm:$0xf] %v239
                %v241 = vld [vmem:[%s235 + $0x18] sm:$0xf]
                %242 = vst [vmem:[%s236 + $0x8] sm:$0xf] %v241
                %v243 = vld [vmem:[%s235 + $0x24] sm:$0xf]
                %244 = vst [vmem:[%s236 + $0xc] sm:$0xf] %v243
                %v245 = vld [vmem:[%s235 + $0x30] sm:$0xf]
                %246 = vst [vmem:[%s236 + $0x10] sm:$0xf] %v245
                %v247 = vld [vmem:[%s235 + $0x3c] sm:$0xf]
                %248 = vst [vmem:[%s236 + $0x14] sm:$0xf] %v247
                %v249 = vld [vmem:[%s235 + $0x48] sm:$0xf]
                %250 = vst [vmem:[%s236 + $0x18] sm:$0xf] %v249
                %v251 = vld [vmem:[%s235 + $0x54] sm:$0xf]
                %252 = vst [vmem:[%s236 + $0x1c] sm:$0xf] %v251
                %v253 = vld [vmem:[%s235 + $0x60] sm:$0xf]
                %254 = vst [vmem:[%s236 + $0x20] sm:$0xf] %v253
                %v255 = vld [vmem:[%s235 + $0x6c] sm:$0xf]
                %256 = vst [vmem:[%s236 + $0x24] sm:$0xf] %v255
                %v257 = vld [vmem:[%s235 + $0x78] sm:$0xf]
                %258 = vst [vmem:[%s236 + $0x28] sm:$0xf] %v257
                %v259 = vld [vmem:[%s235 + $0x84] sm:$0xf]
                %260 = vst [vmem:[%s236 + $0x2c] sm:$0xf] %v259
                %v261 = vld [vmem:[%s235 + $0x90] sm:$0xf]
                %262 = vst [vmem:[%s236 + $0x30] sm:$0xf] %v261
                %v263 = vld [vmem:[%s235 + $0x9c] sm:$0xf]
                %264 = vst [vmem:[%s236 + $0x34] sm:$0xf] %v263
                %v265 = vld [vmem:[%s235 + $0xa8] sm:$0xf]
                %266 = vst [vmem:[%s236 + $0x38] sm:$0xf] %v265
                %v267 = vld [vmem:[%s235 + $0xb4] sm:$0xf]
                %268 = vst [vmem:[%s236 + $0x3c] sm:$0xf] %v267
                %v269 = vld [vmem:[%s235 + $0xc0] sm:$0xf]
                %270 = vst [vmem:[%s236 + $0x40] sm:$0xf] %v269
                %v271 = vld [vmem:[%s235 + $0xcc] sm:$0xf]
                %272 = vst [vmem:[%s236 + $0x44] sm:$0xf] %v271
                %v273 = vld [vmem:[%s235 + $0xd8] sm:$0xf]
                %274 = vst [vmem:[%s236 + $0x48] sm:$0xf] %v273
                %v275 = vld [vmem:[%s235 + $0xe4] sm:$0xf]
                %276 = vst [vmem:[%s236 + $0x4c] sm:$0xf] %v275
                %v277 = vld [vmem:[%s235 + $0xf0] sm:$0xf]
                %278 = vst [vmem:[%s236 + $0x50] sm:$0xf] %v277
                %v279 = vld [vmem:[%s235 + $0xfc] sm:$0xf]
                %280 = vst [vmem:[%s236 + $0x54] sm:$0xf] %v279
                %v281 = vld [vmem:[%s235 + $0x108] sm:$0xf]
                %282 = vst [vmem:[%s236 + $0x58] sm:$0xf] %v281
                %v283 = vld [vmem:[%s235 + $0x114] sm:$0xf]
                %284 = vst [vmem:[%s236 + $0x5c] sm:$0xf] %v283
                %v285 = vld [vmem:[%s235 + $0x120] sm:$0xf]
                %286 = vst [vmem:[%s236 + $0x60] sm:$0xf] %v285
                %v287 = vld [vmem:[%s235 + $0x12c] sm:$0xf]
                %288 = vst [vmem:[%s236 + $0x64] sm:$0xf] %v287
                %v289 = vld [vmem:[%s235 + $0x138] sm:$0xf]
                %290 = vst [vmem:[%s236 + $0x68] sm:$0xf] %v289
                %v291 = vld [vmem:[%s235 + $0x144] sm:$0xf]
                %292 = vst [vmem:[%s236 + $0x6c] sm:$0xf] %v291
                %v293 = vld [vmem:[%s235 + $0x150] sm:$0xf]
                %294 = vst [vmem:[%s236 + $0x70] sm:$0xf] %v293
                %v295 = vld [vmem:[%s235 + $0x15c] sm:$0xf]
                %296 = vst [vmem:[%s236 + $0x74] sm:$0xf] %v295
                %v297 = vld [vmem:[%s235 + $0x168] sm:$0xf]
                %298 = vst [vmem:[%s236 + $0x78] sm:$0xf] %v297
                %v299 = vld [vmem:[%s235 + $0x174] sm:$0xf]
                %300 = vst [vmem:[%s236 + $0x7c] sm:$0xf] %v299
              $region75: #{alexnet_forward.15} parent=69 // loop_footer
                %s234 = sadd.s32 1, %s230
              $region76: #{alexnet_forward.15} parent=69 // loop_footer_branch
                %229 = sbr.rel target = $region72
              $region77: #{alexnet_forward.15} parent=69 // loop_exit
                _
            $region70: #{alexnet_forward.15} parent=61 // pred_fallthru
              _
          $region62: #{alexnet_forward.15} parent=57 // pred_fallthru
            _
          %384 = vnop
        $region58: #{alexnet_forward.15} parent=15 // pred_fallthru
          _
        // Predicated region
        $region96: #{alexnet_forward.15} parent=15 // pred_check
          %p385 = pneg %p104
        $region97: #{alexnet_forward.15} parent=15 // pred_check_branch
          %387 = sbr.rel (%p385) target = $region99
        $region98: #{alexnet_forward.15} parent=15 // pred_region
          %p388 = scmp.lt.s32.totalorder %s17, 2
          %s389 = scalar_select %p388, %s17, 2
          %s390 = scalar_lea.vmem %s2, %s389
        $region99: #{alexnet_forward.15} parent=15 // pred_fallthru
          _
      $region16: #{alexnet_forward.15} parent=5 // pred_fallthru
        _
      %p391 = scmp.le.s32.totalorder 1, %s9
      %p392 = scmp.lt.s32.totalorder %s9, 22
      %p393 = pnand %p391, %p392
      %p394 = pneg %p393
      // Predicated region
      $region100: #{alexnet_forward.15} parent=5 // pred_check
        _
      $region101: #{alexnet_forward.15} parent=5 // pred_check_branch
        %396 = sbr.rel (%p393) target = $region103
      $region102: #{alexnet_forward.15} parent=5 // pred_region
        %s397 = ssub.s32 %s9, 1
        %s398 = sand.u32 %s43, 1
        %s399 = sand.u32 %s43, 1
        %s400 = smul.addr %s399, 24
        %s401 = scalar_lea.vmem [#allocation3], %s400
        // Predicated region
        $region104: #{alexnet_forward.15} parent=102 // pred_check
          %p402 = pneg %p56
        $region105: #{alexnet_forward.15} parent=102 // pred_check_branch
          %404 = sbr.rel (%p402) target = $region107
        $region106: #{alexnet_forward.15} parent=102 // pred_region
          _
        $region107: #{alexnet_forward.15} parent=102 // pred_fallthru
          _
        %s405 = sand.u32 %s71, 1
        %s406 = sand.u32 %s71, 1
        %s407 = smul.addr %s406, 128
        %s408 = scalar_lea.vmem [#allocation4], %s407
        // Predicated region
        $region108: #{alexnet_forward.15} parent=102 // pred_check
          %p409 = pneg %p84
        $region109: #{alexnet_forward.15} parent=102 // pred_check_branch
          %411 = sbr.rel (%p409) target = $region111
        $region110: #{alexnet_forward.15} parent=102 // pred_region
          _
        $region111: #{alexnet_forward.15} parent=102 // pred_fallthru
          _
        %s412 = sand.u32 %s43, 1
        %s413 = sand.u32 %s43, 1
        %s414 = smul.addr %s413, 24
        %s415 = scalar_lea.vmem [#allocation3], %s414
        %p416 = pneg %p56
        %p417 = pneg %p53
        %s418 = sand.u32 %s71, 1
        %s419 = sand.u32 %s71, 1
        %s420 = smul.addr %s419, 128
        %s421 = scalar_lea.vmem [#allocation4], %s420
        %p422 = pneg %p84
        %p423 = pneg %p81
        %p424 = scmp.lt.s32.totalorder %s20, 2
        %s425 = scalar_select %p424, %s20, 2
        %s426 = scalar_lea.vmem %s2, %s425
        %p427 = pneg %p110
        %p428 = pneg %p107
        %p429 = pneg %p138
        %p430 = pneg %p135
        %s431 = sand.u32 %s125, 1
        %s432 = sand.u32 %s125, 1
        %s433 = smul.addr %s432, 24
        %s434 = scalar_lea.vmem [#allocation5], %s433
        %s435 = smul.u32 3, %s19
        %s436 = smul.u32 2, %s21
        %s437 = smul.u32 32, %s21
        %p438 = scmp.lt.s32.totalorder %s20, 2
        %s439 = scalar_select %p438, %s20, 2
        %s440 = scalar_lea.vmem %s2, %s439
        %s441 = smul.u32 3, %s19
        %p443 = scmp.eq.s32.totalorder %s21, 0
        // Predicated region
        $region112: #{alexnet_forward.15} parent=102 // pred_check
          %p444 = pneg %p443
        $region113: #{alexnet_forward.15} parent=102 // pred_check_branch
          %446 = sbr.rel (%p444) target = $region115
        $region114: #{alexnet_forward.15} parent=102 // pred_region
          %447 = vst [vmem:[#allocation2] sm:$0xff] 0.0
          %448 = vst [vmem:[#allocation2 + $0x8] sm:$0xff] 0.0
          %449 = vst [vmem:[#allocation2 + $0x10] sm:$0xff] 0.0
        $region115: #{alexnet_forward.15} parent=102 // pred_fallthru
          _
        %v450 = vld [vmem:[#allocation2] sm:$0xff]
        %v451 = vld [vmem:[#allocation2 + $0x8] sm:$0xff]
        %v452 = vld [vmem:[#allocation2 + $0x10] sm:$0xff]
        %v453 = vld [vmem:[%s401] sm:$0xff]
        %v454 = vld [vmem:[%s401 + $0x8] sm:$0xff]
        %v455 = vld [vmem:[%s401 + $0x10] sm:$0xff]
        %v456 = vld [vmem:[%s408] sm:$0xf]
        %v457 = vld [vmem:[%s408 + $0x4] sm:$0xf]
        %v458 = vld [vmem:[%s408 + $0x8] sm:$0xf]
        %v459 = vld [vmem:[%s408 + $0xc] sm:$0xf]
        %v460 = vld [vmem:[%s408 + $0x10] sm:$0xf]
        %v461 = vld [vmem:[%s408 + $0x14] sm:$0xf]
        %v462 = vld [vmem:[%s408 + $0x18] sm:$0xf]
        %v463 = vld [vmem:[%s408 + $0x1c] sm:$0xf]
        %v464 = vld [vmem:[%s408 + $0x20] sm:$0xf]
        %v465 = vld [vmem:[%s408 + $0x24] sm:$0xf]
        %v466 = vld [vmem:[%s408 + $0x28] sm:$0xf]
        %v467 = vld [vmem:[%s408 + $0x2c] sm:$0xf]
        %v468 = vld [vmem:[%s408 + $0x30] sm:$0xf]
        %v469 = vld [vmem:[%s408 + $0x34] sm:$0xf]
        %v470 = vld [vmem:[%s408 + $0x38] sm:$0xf]
        %v471 = vld [vmem:[%s408 + $0x3c] sm:$0xf]
        %v472 = vld [vmem:[%s408 + $0x40] sm:$0xf]
        %v473 = vld [vmem:[%s408 + $0x44] sm:$0xf]
        %v474 = vld [vmem:[%s408 + $0x48] sm:$0xf]
        %v475 = vld [vmem:[%s408 + $0x4c] sm:$0xf]
        %v476 = vld [vmem:[%s408 + $0x50] sm:$0xf]
        %v477 = vld [vmem:[%s408 + $0x54] sm:$0xf]
        %v478 = vld [vmem:[%s408 + $0x58] sm:$0xf]
        %v479 = vld [vmem:[%s408 + $0x5c] sm:$0xf]
        %v480 = vld [vmem:[%s408 + $0x60] sm:$0xf]
        %v481 = vld [vmem:[%s408 + $0x64] sm:$0xf]
        %v482 = vld [vmem:[%s408 + $0x68] sm:$0xf]
        %v483 = vld [vmem:[%s408 + $0x6c] sm:$0xf]
        %v484 = vld [vmem:[%s408 + $0x70] sm:$0xf]
        %v485 = vld [vmem:[%s408 + $0x74] sm:$0xf]
        %v486 = vld [vmem:[%s408 + $0x78] sm:$0xf]
        %v487 = vld [vmem:[%s408 + $0x7c] sm:$0xf]
        %v491 = vunpack.c.l.b16 %v453
        %v492 = vunpack.c.h.b16 %v453
        %v493 = vunpack.c.l.b16 %v454
        %v494 = vunpack.c.h.b16 %v454
        %v495 = vunpack.c.l.b16 %v455
        %v496 = vunpack.c.h.b16 %v455
        %v497 = vpack.c.b16 %v493, %v491
        %v498 = vpack.c.b16 %v494, %v492
        %v499 = vpack.c.b16 %v495, %v495
        %v500 = vpack.c.b16 %v496, %v496
        %v537 = vunpack.c.l.b16 %v456
        %v538 = vunpack.c.l.b16 %v457
        %v539 = vunpack.c.l.b16 %v458
        %v540 = vunpack.c.l.b16 %v459
        %v541 = vunpack.c.l.b16 %v460
        %v542 = vunpack.c.l.b16 %v461
        %v543 = vunpack.c.l.b16 %v462
        %v544 = vunpack.c.l.b16 %v463
        %v545 = vunpack.c.l.b16 %v464
        %v546 = vunpack.c.l.b16 %v465
        %v547 = vunpack.c.l.b16 %v466
        %v548 = vunpack.c.l.b16 %v467
        %v549 = vunpack.c.l.b16 %v468
        %v550 = vunpack.c.l.b16 %v469
        %v551 = vunpack.c.l.b16 %v470
        %v552 = vunpack.c.l.b16 %v471
        %v553 = vunpack.c.l.b16 %v472
        %v554 = vunpack.c.l.b16 %v473
        %v555 = vunpack.c.l.b16 %v474
        %v556 = vunpack.c.l.b16 %v475
        %v557 = vunpack.c.l.b16 %v476
        %v558 = vunpack.c.l.b16 %v477
        %v559 = vunpack.c.l.b16 %v478
        %v560 = vunpack.c.l.b16 %v479
        %v561 = vunpack.c.l.b16 %v480
        %v562 = vunpack.c.l.b16 %v481
        %v563 = vunpack.c.l.b16 %v482
        %v564 = vunpack.c.l.b16 %v483
        %v565 = vunpack.c.l.b16 %v484
        %v566 = vunpack.c.l.b16 %v485
        %v567 = vunpack.c.l.b16 %v486
        %v568 = vunpack.c.l.b16 %v487
        %v569 = vpack.c.b16 %v538, %v537
        %v570 = vpack.c.b16 %v540, %v539
        %v571 = vpack.c.b16 %v542, %v541
        %v572 = vpack.c.b16 %v544, %v543
        %v573 = vpack.c.b16 %v546, %v545
        %v574 = vpack.c.b16 %v548, %v547
        %v575 = vpack.c.b16 %v550, %v549
        %v576 = vpack.c.b16 %v552, %v551
        %v577 = vpack.c.b16 %v554, %v553
        %v578 = vpack.c.b16 %v556, %v555
        %v579 = vpack.c.b16 %v558, %v557
        %v580 = vpack.c.b16 %v560, %v559
        %v581 = vpack.c.b16 %v562, %v561
        %v582 = vpack.c.b16 %v564, %v563
        %v583 = vpack.c.b16 %v566, %v565
        %v584 = vpack.c.b16 %v568, %v567
        %601 = vmatprep.subr.bf16.mxu0 0
        %602 = vmatpush1.bf16.msra.mxu0 %v569
        %603 = vmatprep.subr.bf16.mxu0 0
        %604 = vmatpush1.bf16.msra.mxu0 %v570
        %605 = vmatprep.subr.bf16.mxu0 0
        %606 = vmatpush1.bf16.msra.mxu0 %v571
        %607 = vmatprep.subr.bf16.mxu0 0
        %608 = vmatpush1.bf16.msra.mxu0 %v572
        %609 = vmatprep.subr.bf16.mxu0 0
        %610 = vmatpush1.bf16.msra.mxu0 %v573
        %611 = vmatprep.subr.bf16.mxu0 0
        %612 = vmatpush1.bf16.msra.mxu0 %v574
        %613 = vmatprep.subr.bf16.mxu0 0
        %614 = vmatpush1.bf16.msra.mxu0 %v575
        %615 = vmatprep.subr.bf16.mxu0 0
        %616 = vmatpush1.bf16.msra.mxu0 %v576
        %617 = vmatprep.subr.bf16.mxu0 0
        %618 = vmatpush1.bf16.msra.mxu0 %v577
        %619 = vmatprep.subr.bf16.mxu0 0
        %620 = vmatpush1.bf16.msra.mxu0 %v578
        %621 = vmatprep.subr.bf16.mxu0 0
        %622 = vmatpush1.bf16.msra.mxu0 %v579
        %623 = vmatprep.subr.bf16.mxu0 0
        %624 = vmatpush1.bf16.msra.mxu0 %v580
        %625 = vmatprep.subr.bf16.mxu0 0
        %626 = vmatpush1.bf16.msra.mxu0 %v581
        %627 = vmatprep.subr.bf16.mxu0 0
        %628 = vmatpush1.bf16.msra.mxu0 %v582
        %629 = vmatprep.subr.bf16.mxu0 0
        %630 = vmatpush1.bf16.msra.mxu0 %v583
        %631 = vmatprep.subr.bf16.mxu0 0
        %632 = vmatpush1.bf16.msra.mxu0 %v584
        %633 = vmatprep.mubr.bf16.mxu0 %v498
        %634 = vmatmul.mubr.bf16.gmra.mrb[0].mxu0 %v497
        %v635 = vpop.f32.mrb[0].mxu0
        %v636 = vadd.f32 0.0, %v635
        %v637 = vpop.f32.mrb[0].mxu0
        %v638 = vpop.f32.mrb[0].mxu0
        %v639 = vadd.f32 0.0, %v638
        %v640 = vpop.f32.mrb[0].mxu0
        %641 = vmatprep.mubr.bf16.mxu0 %v500
        %642 = vmatmul.mubr.bf16.gmra.mrb[0].mxu0 %v499
        %v643 = vpop.f32.mrb[0].mxu0
        %v644 = vadd.f32 0.0, %v643
        %v645 = vpop.f32.mrb[0].mxu0
        %v646 = vpop.f32.mrb[0].mxu0
        %v647 = vpop.f32.mrb[0].mxu0
        %648 = vdwg.mxu0
        %v649 = vadd.f32 %v450, %v636
        %v650 = vadd.f32 %v451, %v639
        %v651 = vadd.f32 %v452, %v644
        %652 = vst [vmem:[#allocation2] sm:$0xff] %v649
        %653 = vst [vmem:[#allocation2 + $0x8] sm:$0xff] %v650
        %654 = vst [vmem:[#allocation2 + $0x10] sm:$0xff] %v651
        %p655 = scmp.eq.s32.totalorder %s21, 6
        // Predicated region
        $region116: #{alexnet_forward.15} parent=102 // pred_check
          %p656 = pneg %p655
        $region117: #{alexnet_forward.15} parent=102 // pred_check_branch
          %658 = sbr.rel (%p656) target = $region119
        $region118: #{alexnet_forward.15} parent=102 // pred_region
          %v659 = vld [vmem:[#allocation2] sm:$0xff]
          %v660 = vld [vmem:[#allocation2 + $0x8] sm:$0xff]
          %v661 = vld [vmem:[#allocation2 + $0x10] sm:$0xff]
          %v662 = vld [vmem:[%s440] sm:$0x1]
          %v664 = vlaneseq
          %v665 = vshrl.u32 %v664, 7
          %v666 = vsub.s32 0, %v665
          %v667 = vrot.slane %v662, %v666
          %v669 = vadd.f32 %v659, %v667
          %v670 = vadd.f32 %v660, %v667
          %v671 = vadd.f32 %v661, %v667
          %v672 = vmax.f32 %v669, 0.0
          %v673 = vmax.f32 %v670, 0.0
          %v674 = vmax.f32 %v671, 0.0
          %675 = vst [vmem:[%s434] sm:$0xff] %v672
          %676 = vst [vmem:[%s434 + $0x8] sm:$0xff] %v673
          %677 = vst [vmem:[%s434 + $0x10] sm:$0xff] %v674
        $region119: #{alexnet_forward.15} parent=102 // pred_fallthru
          _
        %s678 = sand.u32 %s125, 1
        %s679 = sand.u32 %s125, 1
        %s680 = smul.addr %s679, 24
        %s681 = scalar_lea.vmem [#allocation5], %s680
        // Predicated region
        $region120: #{alexnet_forward.15} parent=102 // pred_check
          %p682 = pneg %p135
        $region121: #{alexnet_forward.15} parent=102 // pred_check_branch
          %684 = sbr.rel (%p682) target = $region123
        $region122: #{alexnet_forward.15} parent=102 // pred_region
          %s685 = smul.u32 3, %s19
          %s686 = smul.addr %s685, 3
          %s687 = sadd.s32 %s20, %s686
          %s688 = smul.addr %s687, 8
          %s689 = scalar_lea.vmem %s3, %s688
          // Predicated region
          $region124: #{alexnet_forward.15} parent=122 // pred_check
            _
          $region125: #{alexnet_forward.15} parent=122 // pred_check_branch
            %691 = sbr.rel (0) target = $region127
          $region126: #{alexnet_forward.15} parent=122 // pred_region
            // Predicated region
            $region128: #{alexnet_forward.15} parent=126 // pred_check
              _
            $region129: #{alexnet_forward.15} parent=126 // pred_check_branch
              %693 = sbr.rel (0) target = $region131
            $region130: #{alexnet_forward.15} parent=126 // pred_region
              // Predicated region
              $region143: #{alexnet_forward.15} parent=130 // pred_check
                _
              $region144: #{alexnet_forward.15} parent=130 // pred_check_branch
                %712 = sbr.rel (0) target = $region146
              $region145: #{alexnet_forward.15} parent=130 // pred_region
                loop: start=0, step=1, limit=1
                $region147: #{alexnet_forward.15} parent=145 // loop_pre_header
                  _
                $region148: #{alexnet_forward.15} parent=145 // loop_header
                  %s714 = sphi 0, %s718
                  %p715 = scmp.ge.s32.totalorder %s714, 1
                  %s719 = sphi %s681, %s681
                  %s720 = sphi %s689, %s689
                $region149: #{alexnet_forward.15} parent=145 // loop_header_branch
                  %717 = sbr.rel (%p715) target = $region153
                $region150: #{alexnet_forward.15} parent=145 // loop_body
                  %v721 = vld [vmem:[%s719] sm:$0xff]
                  %722 = vst [vmem:[%s720] sm:$0xff] %v721
                  %v723 = vld [vmem:[%s719 + $0x8] sm:$0xff]
                  %724 = vst [vmem:[%s720 + $0x18] sm:$0xff] %v723
                  %v725 = vld [vmem:[%s719 + $0x10] sm:$0xff]
                  %726 = vst [vmem:[%s720 + $0x30] sm:$0xff] %v725
                $region151: #{alexnet_forward.15} parent=145 // loop_footer
                  %s718 = sadd.s32 1, %s714
                $region152: #{alexnet_forward.15} parent=145 // loop_footer_branch
                  %713 = sbr.rel target = $region148
                $region153: #{alexnet_forward.15} parent=145 // loop_exit
                  _
              $region146: #{alexnet_forward.15} parent=130 // pred_fallthru
                _
              // Predicated region
              $region154: #{alexnet_forward.15} parent=130 // pred_check
                _
              $region155: #{alexnet_forward.15} parent=130 // pred_check_branch
                %728 = sbr.rel target = $region157
              $region156: #{alexnet_forward.15} parent=130 // pred_region
                _
              $region157: #{alexnet_forward.15} parent=130 // pred_fallthru
                _
            $region131: #{alexnet_forward.15} parent=126 // pred_fallthru
              _
            // Predicated region
            $region132: #{alexnet_forward.15} parent=126 // pred_check
              _
            $region133: #{alexnet_forward.15} parent=126 // pred_check_branch
              %695 = sbr.rel target = $region135
            $region134: #{alexnet_forward.15} parent=126 // pred_region
              loop: start=0, step=1, limit=1
              $region136: #{alexnet_forward.15} parent=134 // loop_pre_header
                _
              $region137: #{alexnet_forward.15} parent=134 // loop_header
                %s698 = sphi 0, %s702
                %p699 = scmp.ge.s32.totalorder %s698, 1
                %s703 = sphi %s681, %s681
                %s704 = sphi %s689, %s689
              $region138: #{alexnet_forward.15} parent=134 // loop_header_branch
                %701 = sbr.rel (%p699) target = $region142
              $region139: #{alexnet_forward.15} parent=134 // loop_body
                %v705 = vld [vmem:[%s703] sm:$0xff]
                %706 = vst [vmem:[%s704] sm:$0xff] %v705
                %v707 = vld [vmem:[%s703 + $0x8] sm:$0xff]
                %708 = vst [vmem:[%s704 + $0x18] sm:$0xff] %v707
                %v709 = vld [vmem:[%s703 + $0x10] sm:$0xff]
                %710 = vst [vmem:[%s704 + $0x30] sm:$0xff] %v709
              $region140: #{alexnet_forward.15} parent=134 // loop_footer
                %s702 = sadd.s32 1, %s698
              $region141: #{alexnet_forward.15} parent=134 // loop_footer_branch
                %697 = sbr.rel target = $region137
              $region142: #{alexnet_forward.15} parent=134 // loop_exit
                _
            $region135: #{alexnet_forward.15} parent=126 // pred_fallthru
              _
          $region127: #{alexnet_forward.15} parent=122 // pred_fallthru
            _
          %729 = vnop
        $region123: #{alexnet_forward.15} parent=102 // pred_fallthru
          _
      $region103: #{alexnet_forward.15} parent=5 // pred_fallthru
        _
      %p730 = scmp.le.s32.totalorder 2, %s9
      // Predicated region
      $region158: #{alexnet_forward.15} parent=5 // pred_check
        %p731 = pneg %p730
      $region159: #{alexnet_forward.15} parent=5 // pred_check_branch
        %733 = sbr.rel (%p731) target = $region161
      $region160: #{alexnet_forward.15} parent=5 // pred_region
        %s734 = ssub.s32 %s9, 2
        // Predicated region
        $region162: #{alexnet_forward.15} parent=160 // pred_check
          %p735 = pneg %p141
        $region163: #{alexnet_forward.15} parent=160 // pred_check_branch
          %737 = sbr.rel (%p735) target = $region165
        $region164: #{alexnet_forward.15} parent=160 // pred_region
          %s738 = sand.u32 %s126, 1
          %s739 = sand.u32 %s126, 1
          %s740 = smul.addr %s739, 24
          %s741 = scalar_lea.vmem [#allocation5], %s740
        $region165: #{alexnet_forward.15} parent=160 // pred_fallthru
          _
      $region161: #{alexnet_forward.15} parent=5 // pred_fallthru
        _
    $region6: #{alexnet_forward.15} parent=1 // loop_footer
      %s13 = sadd.s32 1, %s9
    $region7: #{alexnet_forward.15} parent=1 // loop_footer_branch
      %8 = sbr.rel target = $region3
    $region8: #{alexnet_forward.15} parent=1 // loop_exit
      _

// kernel: alexnet_forward.16
$region0: #{alexnet_forward.16}
  #allocation0 [shape = 'u32[]', space=smem, size = 0x4, offset = 0x4, fixed_abs, tag = 'smem constant byte address 0x4 - core index']
  #allocation1 [shape = 'u32[144,128]{1,0:T(1,128)}', space=vmem, size = 0x12000, scoped, tag = 'internal scratch']
  #allocation2 [shape = 'f32[24,256]{1,0:T(8,128)}', space=vmem, size = 0x6000, scoped, tag = 'scratch operand']
  %s0 = inlined_call_operand.vmem [shape: bf16[24,3456], index: 0, kind: input, shape index: {}]
  %s1 = inlined_call_operand.vmem [shape: bf16[3456,256], index: 1, kind: input, shape index: {}]
  %s2 = inlined_call_operand.vmem [shape: f32[1,256], index: 2, kind: input, shape index: {}]
  %s3 = inlined_call_operand.vmem [shape: f32[24,256], index: 3, kind: output, shape index: {}]
  %s4 = sld [smem:[#allocation0]]
  $region94: #{alexnet_forward.16} parent=0
    _
  %s6 = ssub.s32 1, %s4
  %s7 = scalar_select 0, %s6, %s4
  $region1: #{alexnet_forward.16} parent=0
    #allocation3 [shape = 'u8[12288]{0}', space=vmem, size = 0x3000, scoped, tag = 'input window, operand 0']
    loop: start=0, step=1, limit=29
    $region2: #{alexnet_forward.16} parent=1 // loop_pre_header
      _
    $region3: #{alexnet_forward.16} parent=1 // loop_header
      %s9 = sphi 0, %s13
      %p10 = scmp.ge.s32.totalorder %s9, 29
      %s16 = sphi 0, %s35
      %s17 = sphi 0, %s31
      %s18 = sphi 0, %s27
      %s19 = sphi 0, %s16
      %s20 = sphi 0, %s17
      %s21 = sphi 0, %s18
      %s22 = sphi 0, %s19
      %s23 = sphi 0, %s20
      %s24 = sphi 0, %s21
      %s40 = sphi 0, %s42
      %s43 = sphi 0, %s40
      %s44 = sphi 0, %s43
      %s60 = sphi 0, %s44
      %s68 = sphi 0, %s70
      %s71 = sphi 0, %s68
      %s72 = sphi 0, %s71
      %s88 = sphi 0, %s72
      %s94 = sphi 0, %s96
      %s97 = sphi 0, %s94
      %s98 = sphi 0, %s97
      %s114 = sphi 0, %s98
      %s122 = sphi 0, %s124
      %s125 = sphi 0, %s122
      %s126 = sphi 0, %s125
      %s142 = sphi 0, %s126
    $region4: #{alexnet_forward.16} parent=1 // loop_header_branch
      %12 = sbr.rel (%p10) target = $region8
    $region5: #{alexnet_forward.16} parent=1 // loop_body
      %s14 = ssub.s32 %s9, 1
      %s15 = ssub.s32 %s9, 2
      %s25 = sadd.s32 1, %s18
      %p26 = scmp.ge.s32.totalorder %s25, 27
      %s27 = scalar_select %p26, 0, %s25
      %s28 = sadd.s32 1, %s17
      %s29 = scalar_select %p26, %s28, %s17
      %p30 = scmp.ge.s32.totalorder %s29, 1
      %s31 = scalar_select %p30, 0, %s29
      %s32 = sadd.s32 1, %s16
      %s33 = scalar_select %p30, %s32, %s16
      %p34 = scmp.ge.s32.totalorder %s33, 1
      %s35 = scalar_select %p34, 0, %s33
      %s36 = ssub.s32 %s16, %s35
      %s37 = ssub.s32 %s18, %s27
      %s38 = sor.u32 %s36, %s37
      %p39 = scmp.eq.s32.totalorder %s38, 0
      %s41 = sadd.s32 %s40, 1
      %s42 = scalar_select %p39, %s40, %s41
      %p45 = pneg %p39
      %p46 = scmp.eq.s32.totalorder %s9, 26
      %p47 = por %p45, %p46
      %p48 = scmp.ne.s32.totalorder %s40, %s43
      %p49 = scmp.eq.s32.totalorder %s9, 0
      %p50 = por %p48, %p49
      %p51 = scmp.ne.s32.totalorder %s40, %s43
      %p52 = scmp.eq.s32.totalorder %s14, 26
      %p53 = por %p51, %p52
      %p54 = scmp.ne.s32.totalorder %s43, %s44
      %p55 = scmp.eq.s32.totalorder %s14, 0
      %p56 = por %p54, %p55
      %p57 = scmp.ne.s32.totalorder %s43, %s44
      %p58 = scmp.eq.s32.totalorder %s15, 26
      %p59 = por %p57, %p58
      %p61 = scmp.ne.s32.totalorder %s44, %s60
      %p62 = scmp.eq.s32.totalorder %s15, 0
      %p63 = por %p61, %p62
      %s64 = ssub.s32 %s18, %s27
      %s65 = ssub.s32 %s17, %s31
      %s66 = sor.u32 %s64, %s65
      %p67 = scmp.eq.s32.totalorder %s66, 0
      %s69 = sadd.s32 %s68, 1
      %s70 = scalar_select %p67, %s68, %s69
      %p73 = pneg %p67
      %p74 = scmp.eq.s32.totalorder %s9, 26
      %p75 = por %p73, %p74
      %p76 = scmp.ne.s32.totalorder %s68, %s71
      %p77 = scmp.eq.s32.totalorder %s9, 0
      %p78 = por %p76, %p77
      %p79 = scmp.ne.s32.totalorder %s68, %s71
      %p80 = scmp.eq.s32.totalorder %s14, 26
      %p81 = por %p79, %p80
      %p82 = scmp.ne.s32.totalorder %s71, %s72
      %p83 = scmp.eq.s32.totalorder %s14, 0
      %p84 = por %p82, %p83
      %p85 = scmp.ne.s32.totalorder %s71, %s72
      %p86 = scmp.eq.s32.totalorder %s15, 26
      %p87 = por %p85, %p86
      %p89 = scmp.ne.s32.totalorder %s72, %s88
      %p90 = scmp.eq.s32.totalorder %s15, 0
      %p91 = por %p89, %p90
      %s92 = ssub.s32 %s17, %s31
      %p93 = scmp.eq.s32.totalorder %s92, 0
      %s95 = sadd.s32 %s94, 1
      %s96 = scalar_select %p93, %s94, %s95
      %p99 = pneg %p93
      %p100 = scmp.eq.s32.totalorder %s9, 26
      %p101 = por %p99, %p100
      %p102 = scmp.ne.s32.totalorder %s94, %s97
      %p103 = scmp.eq.s32.totalorder %s9, 0
      %p104 = por %p102, %p103
      %p105 = scmp.ne.s32.totalorder %s94, %s97
      %p106 = scmp.eq.s32.totalorder %s14, 26
      %p107 = por %p105, %p106
      %p108 = scmp.ne.s32.totalorder %s97, %s98
      %p109 = scmp.eq.s32.totalorder %s14, 0
      %p110 = por %p108, %p109
      %p111 = scmp.ne.s32.totalorder %s97, %s98
      %p112 = scmp.eq.s32.totalorder %s15, 26
      %p113 = por %p111, %p112
      %p115 = scmp.ne.s32.totalorder %s98, %s114
      %p116 = scmp.eq.s32.totalorder %s15, 0
      %p117 = por %p115, %p116
      %s118 = ssub.s32 %s16, %s35
      %s119 = ssub.s32 %s17, %s31
      %s120 = sor.u32 %s118, %s119
      %p121 = scmp.eq.s32.totalorder %s120, 0
      %s123 = sadd.s32 %s122, 1
      %s124 = scalar_select %p121, %s122, %s123
      %p127 = pneg %p121
      %p128 = scmp.eq.s32.totalorder %s9, 26
      %p129 = por %p127, %p128
      %p130 = scmp.ne.s32.totalorder %s122, %s125
      %p131 = scmp.eq.s32.totalorder %s9, 0
      %p132 = por %p130, %p131
      %p133 = scmp.ne.s32.totalorder %s122, %s125
      %p134 = scmp.eq.s32.totalorder %s14, 26
      %p135 = por %p133, %p134
      %p136 = scmp.ne.s32.totalorder %s125, %s126
      %p137 = scmp.eq.s32.totalorder %s14, 0
      %p138 = por %p136, %p137
      %p139 = scmp.ne.s32.totalorder %s125, %s126
      %p140 = scmp.eq.s32.totalorder %s15, 26
      %p141 = por %p139, %p140
      %p143 = scmp.ne.s32.totalorder %s126, %s142
      %p144 = scmp.eq.s32.totalorder %s15, 0
      %p145 = por %p143, %p144
      %p146 = scmp.le.s32.totalorder 1, %s9
      %p147 = scmp.lt.s32.totalorder %s9, 28
      %p148 = pnand %p146, %p147
      %p149 = pneg %p148
      // Predicated region
      $region9: #{alexnet_forward.16} parent=5 // pred_check
        _
      $region10: #{alexnet_forward.16} parent=5 // pred_check_branch
        %151 = sbr.rel (%p148) target = $region12
      $region11: #{alexnet_forward.16} parent=5 // pred_region
        %s152 = ssub.s32 %s9, 1
        // Predicated region
        $region13: #{alexnet_forward.16} parent=11 // pred_check
          %p153 = pneg %p110
        $region14: #{alexnet_forward.16} parent=11 // pred_check_branch
          %155 = sbr.rel (%p153) target = $region16
        $region15: #{alexnet_forward.16} parent=11 // pred_region
          %s156 = smul.u32 2, %s20
          %p157 = scmp.lt.s32.totalorder %s156, 1
          %s158 = scalar_select %p157, %s156, 1
          %s159 = scalar_lea.vmem %s2, %s158
          %s160 = smul.u32 2, %s20
        $region16: #{alexnet_forward.16} parent=11 // pred_fallthru
          _
      $region12: #{alexnet_forward.16} parent=5 // pred_fallthru
        _
      %p161 = scmp.lt.s32.totalorder %s9, 27
      // Predicated region
      $region17: #{alexnet_forward.16} parent=5 // pred_check
        %p162 = pneg %p161
      $region18: #{alexnet_forward.16} parent=5 // pred_check_branch
        %164 = sbr.rel (%p162) target = $region20
      $region19: #{alexnet_forward.16} parent=5 // pred_region
        // Predicated region
        $region21: #{alexnet_forward.16} parent=19 // pred_check
          %p165 = pneg %p50
        $region22: #{alexnet_forward.16} parent=19 // pred_check_branch
          %167 = sbr.rel (%p165) target = $region24
        $region23: #{alexnet_forward.16} parent=19 // pred_region
          %s168 = sand.u32 %s40, 1
          %s169 = sand.u32 %s40, 1
          %s170 = smul.addr %s169, 12
          %s171 = scalar_lea.vmem [#allocation3], %s170
          %s172 = smul.u32 3, %s16
          %s173 = smul.addr %s172, 27
          %s174 = sadd.s32 %s18, %s173
          %s175 = smul.addr %s174, 4
          %s176 = scalar_lea.vmem %s0, %s175
          // Predicated region
          $region25: #{alexnet_forward.16} parent=23 // pred_check
            _
          $region26: #{alexnet_forward.16} parent=23 // pred_check_branch
            %178 = sbr.rel (0) target = $region28
          $region27: #{alexnet_forward.16} parent=23 // pred_region
            // Predicated region
            $region29: #{alexnet_forward.16} parent=27 // pred_check
              _
            $region30: #{alexnet_forward.16} parent=27 // pred_check_branch
              %180 = sbr.rel target = $region32
            $region31: #{alexnet_forward.16} parent=27 // pred_region
              // Predicated region
              $region44: #{alexnet_forward.16} parent=31 // pred_check
                _
              $region45: #{alexnet_forward.16} parent=31 // pred_check_branch
                %199 = sbr.rel (0) target = $region47
              $region46: #{alexnet_forward.16} parent=31 // pred_region
                loop: start=0, step=1, limit=1
                $region48: #{alexnet_forward.16} parent=46 // loop_pre_header
                  _
                $region49: #{alexnet_forward.16} parent=46 // loop_header
                  %s201 = sphi 0, %s205
                  %p202 = scmp.ge.s32.totalorder %s201, 1
                  %s206 = sphi %s176, %s176
                  %s207 = sphi %s171, %s171
                $region50: #{alexnet_forward.16} parent=46 // loop_header_branch
                  %204 = sbr.rel (%p202) target = $region54
                $region51: #{alexnet_forward.16} parent=46 // loop_body
                  _
                $region52: #{alexnet_forward.16} parent=46 // loop_footer
                  %s205 = sadd.s32 1, %s201
                $region53: #{alexnet_forward.16} parent=46 // loop_footer_branch
                  %200 = sbr.rel target = $region49
                $region54: #{alexnet_forward.16} parent=46 // loop_exit
                  _
                loop: start=0, step=1, limit=1
                $region55: #{alexnet_forward.16} parent=46 // loop_pre_header
                  _
                $region56: #{alexnet_forward.16} parent=46 // loop_header
                  %s210 = sphi 0, %s214
                  %p211 = scmp.ge.s32.totalorder %s210, 1
                  %s215 = sphi %s176, %s176
                  %s216 = sphi %s171, %s171
                $region57: #{alexnet_forward.16} parent=46 // loop_header_branch
                  %213 = sbr.rel (%p211) target = $region61
                $region58: #{alexnet_forward.16} parent=46 // loop_body
                  %v217 = vld [vmem:[%s215] sm:$0xf]
                  %218 = vst [vmem:[%s216] sm:$0xf] %v217
                  %v219 = vld [vmem:[%s215 + $0x6c] sm:$0xf]
                  %220 = vst [vmem:[%s216 + $0x4] sm:$0xf] %v219
                  %v221 = vld [vmem:[%s215 + $0xd8] sm:$0xf]
                  %222 = vst [vmem:[%s216 + $0x8] sm:$0xf] %v221
                $region59: #{alexnet_forward.16} parent=46 // loop_footer
                  %s214 = sadd.s32 1, %s210
                $region60: #{alexnet_forward.16} parent=46 // loop_footer_branch
                  %209 = sbr.rel target = $region56
                $region61: #{alexnet_forward.16} parent=46 // loop_exit
                  _
              $region47: #{alexnet_forward.16} parent=31 // pred_fallthru
                _
            $region32: #{alexnet_forward.16} parent=27 // pred_fallthru
              _
            // Predicated region
            $region33: #{alexnet_forward.16} parent=27 // pred_check
              _
            $region34: #{alexnet_forward.16} parent=27 // pred_check_branch
              %182 = sbr.rel (0) target = $region36
            $region35: #{alexnet_forward.16} parent=27 // pred_region
              loop: start=0, step=1, limit=1
              $region37: #{alexnet_forward.16} parent=35 // loop_pre_header
                _
              $region38: #{alexnet_forward.16} parent=35 // loop_header
                %s185 = sphi 0, %s189
                %p186 = scmp.ge.s32.totalorder %s185, 1
                %s190 = sphi %s176, %s176
                %s191 = sphi %s171, %s171
              $region39: #{alexnet_forward.16} parent=35 // loop_header_branch
                %188 = sbr.rel (%p186) target = $region43
              $region40: #{alexnet_forward.16} parent=35 // loop_body
                %v192 = vld [vmem:[%s190] sm:$0xf]
                %193 = vst [vmem:[%s191] sm:$0xf] %v192
                %v194 = vld [vmem:[%s190 + $0x6c] sm:$0xf]
                %195 = vst [vmem:[%s191 + $0x4] sm:$0xf] %v194
                %v196 = vld [vmem:[%s190 + $0xd8] sm:$0xf]
                %197 = vst [vmem:[%s191 + $0x8] sm:$0xf] %v196
              $region41: #{alexnet_forward.16} parent=35 // loop_footer
                %s189 = sadd.s32 1, %s185
              $region42: #{alexnet_forward.16} parent=35 // loop_footer_branch
                %184 = sbr.rel target = $region38
              $region43: #{alexnet_forward.16} parent=35 // loop_exit
                _
            $region36: #{alexnet_forward.16} parent=27 // pred_fallthru
              _
          $region28: #{alexnet_forward.16} parent=23 // pred_fallthru
            _
          %223 = vnop
        $region24: #{alexnet_forward.16} parent=19 // pred_fallthru
          _
        // Predicated region
        $region62: #{alexnet_forward.16} parent=19 // pred_check
          %p224 = pneg %p78
        $region63: #{alexnet_forward.16} parent=19 // pred_check_branch
          %226 = sbr.rel (%p224) target = $region65
        $region64: #{alexnet_forward.16} parent=19 // pred_region
          %s227 = smul.u32 16, %s18
          %s228 = smul.u32 2, %s17
          %p229 = scmp.lt.s32.totalorder %s227, 431
          %s230 = scalar_select %p229, %s227, 431
          %p231 = scmp.lt.s32.totalorder %s228, 1
          %s232 = scalar_select %p231, %s228, 1
          %s233 = smul.addr %s230, 2
          %s234 = sadd.s32 %s232, %s233
          %s235 = smul.addr %s234, 4
          %s236 = scalar_lea.vmem %s1, %s235
          %s237 = smul.u32 16, %s18
          %s238 = smul.u32 2, %s17
        $region65: #{alexnet_forward.16} parent=19 // pred_fallthru
          _
      $region20: #{alexnet_forward.16} parent=5 // pred_fallthru
        _
      %p239 = scmp.le.s32.totalorder 1, %s9
      %p240 = scmp.lt.s32.totalorder %s9, 28
      %p241 = pnand %p239, %p240
      %p242 = pneg %p241
      // Predicated region
      $region66: #{alexnet_forward.16} parent=5 // pred_check
        _
      $region67: #{alexnet_forward.16} parent=5 // pred_check_branch
        %244 = sbr.rel (%p241) target = $region69
      $region68: #{alexnet_forward.16} parent=5 // pred_region
        %s245 = ssub.s32 %s9, 1
        %s246 = sand.u32 %s43, 1
        %s247 = sand.u32 %s43, 1
        %s248 = smul.addr %s247, 12
        %s249 = scalar_lea.vmem [#allocation3], %s248
        // Predicated region
        $region70: #{alexnet_forward.16} parent=68 // pred_check
          %p250 = pneg %p56
        $region71: #{alexnet_forward.16} parent=68 // pred_check_branch
          %252 = sbr.rel (%p250) target = $region73
        $region72: #{alexnet_forward.16} parent=68 // pred_region
          _
        $region73: #{alexnet_forward.16} parent=68 // pred_fallthru
          _
        %s253 = sand.u32 %s43, 1
        %s254 = sand.u32 %s43, 1
        %s255 = smul.addr %s254, 12
        %s256 = scalar_lea.vmem [#allocation3], %s255
        %p257 = pneg %p56
        %p258 = pneg %p53
        %s259 = smul.u32 16, %s21
        %s260 = smul.u32 2, %s20
        %p261 = scmp.lt.s32.totalorder %s259, 431
        %s262 = scalar_select %p261, %s259, 431
        %p263 = scmp.lt.s32.totalorder %s260, 1
        %s264 = scalar_select %p263, %s260, 1
        %s265 = smul.addr %s262, 2
        %s266 = sadd.s32 %s264, %s265
        %s267 = smul.addr %s266, 4
        %s268 = scalar_lea.vmem %s1, %s267
        %p269 = pneg %p84
        %p270 = pneg %p81
        %s271 = smul.u32 2, %s20
        %p272 = scmp.lt.s32.totalorder %s271, 1
        %s273 = scalar_select %p272, %s271, 1
        %s274 = scalar_lea.vmem %s2, %s273
        %p275 = pneg %p110
        %p276 = pneg %p107
        %p277 = pneg %p138
        %p278 = pneg %p135
        %s279 = smul.u32 3, %s19
        %s280 = smul.u32 2, %s20
        %p281 = scmp.lt.s32.totalorder %s279, 2
        %s282 = scalar_select %p281, %s279, 2
        %p283 = scmp.lt.s32.totalorder %s280, 1
        %s284 = scalar_select %p283, %s280, 1
        %s285 = smul.addr %s282, 2
        %s286 = sadd.s32 %s284, %s285
        %s287 = smul.addr %s286, 8
        %s288 = scalar_lea.vmem %s3, %s287
        %s289 = smul.u32 3, %s19
        %s290 = smul.u32 16, %s21
        %s291 = smul.u32 2, %s20
        %p292 = scmp.lt.s32.totalorder %s290, 431
        %s293 = scalar_select %p292, %s290, 431
        %p294 = scmp.lt.s32.totalorder %s291, 1
        %s295 = scalar_select %p294, %s291, 1
        %s296 = smul.addr %s293, 2
        %s297 = sadd.s32 %s295, %s296
        %s298 = smul.addr %s297, 4
        %s299 = scalar_lea.vmem %s1, %s298
        %s300 = smul.u32 16, %s21
        %s301 = smul.u32 2, %s20
        %s302 = smul.u32 2, %s20
        %p303 = scmp.lt.s32.totalorder %s302, 1
        %s304 = scalar_select %p303, %s302, 1
        %s305 = scalar_lea.vmem %s2, %s304
        %s306 = smul.u32 2, %s20
        %s307 = smul.u32 3, %s19
        %s308 = smul.u32 2, %s20
        %p309 = scmp.lt.s32.totalorder %s307, 2
        %s310 = scalar_select %p309, %s307, 2
        %p311 = scmp.lt.s32.totalorder %s308, 1
        %s312 = scalar_select %p311, %s308, 1
        %s313 = smul.addr %s310, 2
        %s314 = sadd.s32 %s312, %s313
        %s315 = smul.addr %s314, 8
        %s316 = scalar_lea.vmem %s3, %s315
        %s317 = smul.u32 3, %s19
        %s318 = smul.u32 2, %s20
        %p320 = scmp.eq.s32.totalorder %s21, 0
        // Predicated region
        $region74: #{alexnet_forward.16} parent=68 // pred_check
          %p321 = pneg %p320
        $region75: #{alexnet_forward.16} parent=68 // pred_check_branch
          %323 = sbr.rel (%p321) target = $region77
        $region76: #{alexnet_forward.16} parent=68 // pred_region
          %324 = vst [vmem:[#allocation2] sm:$0xff] 0.0
          %325 = vst [vmem:[#allocation2 + $0x8] sm:$0xff] 0.0
          %326 = vst [vmem:[#allocation2 + $0x10] sm:$0xff] 0.0
          %327 = vst [vmem:[#allocation2 + $0x18] sm:$0xff] 0.0
          %328 = vst [vmem:[#allocation2 + $0x20] sm:$0xff] 0.0
          %329 = vst [vmem:[#allocation2 + $0x28] sm:$0xff] 0.0
        $region77: #{alexnet_forward.16} parent=68 // pred_fallthru
          _
        %v330 = vld [vmem:[#allocation2] sm:$0xff]
        %v331 = vld [vmem:[#allocation2 + $0x8] sm:$0xff]
        %v332 = vld [vmem:[#allocation2 + $0x10] sm:$0xff]
        %v333 = vld [vmem:[#allocation2 + $0x18] sm:$0xff]
        %v334 = vld [vmem:[#allocation2 + $0x20] sm:$0xff]
        %v335 = vld [vmem:[#allocation2 + $0x28] sm:$0xff]
        %v336 = vld [vmem:[%s249] sm:$0xf]
        %v337 = vld [vmem:[%s249 + $0x4] sm:$0xf]
        %v338 = vld [vmem:[%s249 + $0x8] sm:$0xf]
        %v339 = vld [vmem:[%s299] sm:$0xff]
        %v340 = vld [vmem:[%s299 + $0x8] sm:$0xff]
        %v341 = vld [vmem:[%s299 + $0x10] sm:$0xff]
        %v342 = vld [vmem:[%s299 + $0x18] sm:$0xff]
        %v343 = vld [vmem:[%s299 + $0x20] sm:$0xff]
        %v344 = vld [vmem:[%s299 + $0x28] sm:$0xff]
        %v345 = vld [vmem:[%s299 + $0x30] sm:$0xff]
        %v346 = vld [vmem:[%s299 + $0x38] sm:$0xff]
        %v347 = vld [vmem:[%s299 + $0x40] sm:$0xff]
        %v348 = vld [vmem:[%s299 + $0x48] sm:$0xff]
        %v349 = vld [vmem:[%s299 + $0x50] sm:$0xff]
        %v350 = vld [vmem:[%s299 + $0x58] sm:$0xff]
        %v351 = vld [vmem:[%s299 + $0x60] sm:$0xff]
        %v352 = vld [vmem:[%s299 + $0x68] sm:$0xff]
        %v353 = vld [vmem:[%s299 + $0x70] sm:$0xff]
        %v354 = vld [vmem:[%s299 + $0x78] sm:$0xff]
        %v358 = vunpack.c.l.b16 %v336
        %v359 = vunpack.c.l.b16 %v337
        %v360 = vunpack.c.l.b16 %v338
        %v361 = vpack.c.b16 %v359, %v358
        %v362 = vpack.c.b16 %v360, %v360
        %v381 = vunpack.c.l.b16 %v339
        %v382 = vunpack.c.h.b16 %v339
        %v383 = vunpack.c.l.b16 %v340
        %v384 = vunpack.c.h.b16 %v340
        %v385 = vunpack.c.l.b16 %v341
        %v386 = vunpack.c.h.b16 %v341
        %v387 = vunpack.c.l.b16 %v342
        %v388 = vunpack.c.h.b16 %v342
        %v389 = vunpack.c.l.b16 %v343
        %v390 = vunpack.c.h.b16 %v343
        %v391 = vunpack.c.l.b16 %v344
        %v392 = vunpack.c.h.b16 %v344
        %v393 = vunpack.c.l.b16 %v345
        %v394 = vunpack.c.h.b16 %v345
        %v395 = vunpack.c.l.b16 %v346
        %v396 = vunpack.c.h.b16 %v346
        %v397 = vunpack.c.l.b16 %v347
        %v398 = vunpack.c.h.b16 %v347
        %v399 = vunpack.c.l.b16 %v348
        %v400 = vunpack.c.h.b16 %v348
        %v401 = vunpack.c.l.b16 %v349
        %v402 = vunpack.c.h.b16 %v349
        %v403 = vunpack.c.l.b16 %v350
        %v404 = vunpack.c.h.b16 %v350
        %v405 = vunpack.c.l.b16 %v351
        %v406 = vunpack.c.h.b16 %v351
        %v407 = vunpack.c.l.b16 %v352
        %v408 = vunpack.c.h.b16 %v352
        %v409 = vunpack.c.l.b16 %v353
        %v410 = vunpack.c.h.b16 %v353
        %v411 = vunpack.c.l.b16 %v354
        %v412 = vunpack.c.h.b16 %v354
        %v413 = vpack.c.b16 %v383, %v381
        %v414 = vpack.c.b16 %v384, %v382
        %v415 = vpack.c.b16 %v387, %v385
        %v416 = vpack.c.b16 %v388, %v386
        %v417 = vpack.c.b16 %v391, %v389
        %v418 = vpack.c.b16 %v392, %v390
        %v419 = vpack.c.b16 %v395, %v393
        %v420 = vpack.c.b16 %v396, %v394
        %v421 = vpack.c.b16 %v399, %v397
        %v422 = vpack.c.b16 %v400, %v398
        %v423 = vpack.c.b16 %v403, %v401
        %v424 = vpack.c.b16 %v404, %v402
        %v425 = vpack.c.b16 %v407, %v405
        %v426 = vpack.c.b16 %v408, %v406
        %v427 = vpack.c.b16 %v411, %v409
        %v428 = vpack.c.b16 %v412, %v410
        %445 = vmatprep.subr.bf16.mxu0 %v414
        %446 = vmatpush1.bf16.msra.mxu0 %v413
        %447 = vmatprep.subr.bf16.mxu0 %v416
        %448 = vmatpush1.bf16.msra.mxu0 %v415
        %449 = vmatprep.subr.bf16.mxu0 %v418
        %450 = vmatpush1.bf16.msra.mxu0 %v417
        %451 = vmatprep.subr.bf16.mxu0 %v420
        %452 = vmatpush1.bf16.msra.mxu0 %v419
        %453 = vmatprep.subr.bf16.mxu0 %v422
        %454 = vmatpush1.bf16.msra.mxu0 %v421
        %455 = vmatprep.subr.bf16.mxu0 %v424
        %456 = vmatpush1.bf16.msra.mxu0 %v423
        %457 = vmatprep.subr.bf16.mxu0 %v426
        %458 = vmatpush1.bf16.msra.mxu0 %v425
        %459 = vmatprep.subr.bf16.mxu0 %v428
        %460 = vmatpush1.bf16.msra.mxu0 %v427
        %461 = vmatprep.subr.bf16.mxu0 0
        %462 = vmatpush1.bf16.msra.mxu0 0
        %463 = vmatprep.subr.bf16.mxu0 0
        %464 = vmatpush1.bf16.msra.mxu0 0
        %465 = vmatprep.subr.bf16.mxu0 0
        %466 = vmatpush1.bf16.msra.mxu0 0
        %467 = vmatprep.subr.bf16.mxu0 0
        %468 = vmatpush1.bf16.msra.mxu0 0
        %469 = vmatprep.subr.bf16.mxu0 0
        %470 = vmatpush1.bf16.msra.mxu0 0
        %471 = vmatprep.subr.bf16.mxu0 0
        %472 = vmatpush1.bf16.msra.mxu0 0
        %473 = vmatprep.subr.bf16.mxu0 0
        %474 = vmatpush1.bf16.msra.mxu0 0
        %475 = vmatprep.subr.bf16.mxu0 0
        %476 = vmatpush1.bf16.msra.mxu0 0
        %477 = vmatprep.mubr.bf16.mxu0 0
        %478 = vmatmul.mubr.bf16.gmra.mrb[0].mxu0 %v361
        %v479 = vpop.f32.mrb[0].mxu0
        %v480 = vadd.f32 0.0, %v479
        %v481 = vpop.f32.mrb[0].mxu0
        %v482 = vadd.f32 0.0, %v481
        %v483 = vpop.f32.mrb[0].mxu0
        %v484 = vadd.f32 0.0, %v483
        %v485 = vpop.f32.mrb[0].mxu0
        %v486 = vadd.f32 0.0, %v485
        %487 = vmatprep.mubr.bf16.mxu0 0
        %488 = vmatmul.mubr.bf16.gmra.mrb[0].mxu0 %v362
        %v489 = vpop.f32.mrb[0].mxu0
        %v490 = vadd.f32 0.0, %v489
        %v491 = vpop.f32.mrb[0].mxu0
        %v492 = vadd.f32 0.0, %v491
        %v493 = vpop.f32.mrb[0].mxu0
        %v494 = vpop.f32.mrb[0].mxu0
        %495 = vdwg.mxu0
        %v496 = vadd.f32 %v330, %v480
        %v497 = vadd.f32 %v331, %v482
        %v498 = vadd.f32 %v332, %v484
        %v499 = vadd.f32 %v333, %v486
        %v500 = vadd.f32 %v334, %v490
        %v501 = vadd.f32 %v335, %v492
        %502 = vst [vmem:[#allocation2] sm:$0xff] %v496
        %503 = vst [vmem:[#allocation2 + $0x8] sm:$0xff] %v497
        %504 = vst [vmem:[#allocation2 + $0x10] sm:$0xff] %v498
        %505 = vst [vmem:[#allocation2 + $0x18] sm:$0xff] %v499
        %506 = vst [vmem:[#allocation2 + $0x20] sm:$0xff] %v500
        %507 = vst [vmem:[#allocation2 + $0x28] sm:$0xff] %v501
        %p508 = scmp.eq.s32.totalorder %s21, 26
        // Predicated region
        $region78: #{alexnet_forward.16} parent=68 // pred_check
          %p509 = pneg %p508
        $region79: #{alexnet_forward.16} parent=68 // pred_check_branch
          %511 = sbr.rel (%p509) target = $region81
        $region80: #{alexnet_forward.16} parent=68 // pred_region
          %v512 = vld [vmem:[#allocation2] sm:$0xff]
          %v513 = vld [vmem:[#allocation2 + $0x8] sm:$0xff]
          %v514 = vld [vmem:[#allocation2 + $0x10] sm:$0xff]
          %v515 = vld [vmem:[#allocation2 + $0x18] sm:$0xff]
          %v516 = vld [vmem:[#allocation2 + $0x20] sm:$0xff]
          %v517 = vld [vmem:[#allocation2 + $0x28] sm:$0xff]
          %v518 = vld [vmem:[%s305] sm:$0x3]
          %v520 = vlaneseq
          %v521 = vshrl.u32 %v520, 7
          %v522 = vsub.s32 0, %v521
          %v523 = vrot.slane %v518, %v522
          %v524 = vlaneseq
          %v525 = vshrl.u32 %v524, 7
          %v526 = vsub.s32 1, %v525
          %v527 = vrot.slane %v518, %v526
          %v530 = vadd.f32 %v512, %v523
          %v531 = vadd.f32 %v513, %v527
          %v532 = vadd.f32 %v514, %v523
          %v533 = vadd.f32 %v515, %v527
          %v534 = vadd.f32 %v516, %v523
          %v535 = vadd.f32 %v517, %v527
          %v536 = vmax.f32 %v530, 0.0
          %v537 = vmax.f32 %v531, 0.0
          %v538 = vmax.f32 %v532, 0.0
          %v539 = vmax.f32 %v533, 0.0
          %v540 = vmax.f32 %v534, 0.0
          %v541 = vmax.f32 %v535, 0.0
          %542 = vst [vmem:[%s316] sm:$0xff] %v536
          %543 = vst [vmem:[%s316 + $0x8] sm:$0xff] %v537
          %544 = vst [vmem:[%s316 + $0x10] sm:$0xff] %v538
          %545 = vst [vmem:[%s316 + $0x18] sm:$0xff] %v539
          %546 = vst [vmem:[%s316 + $0x20] sm:$0xff] %v540
          %547 = vst [vmem:[%s316 + $0x28] sm:$0xff] %v541
        $region81: #{alexnet_forward.16} parent=68 // pred_fallthru
          _
        %s548 = smul.u32 3, %s19
        %s549 = smul.u32 2, %s20
        %p550 = scmp.lt.s32.totalorder %s548, 2
        %s551 = scalar_select %p550, %s548, 2
        %p552 = scmp.lt.s32.totalorder %s549, 1
        %s553 = scalar_select %p552, %s549, 1
        %s554 = smul.addr %s551, 2
        %s555 = sadd.s32 %s553, %s554
        %s556 = smul.addr %s555, 8
        %s557 = scalar_lea.vmem %s3, %s556
        // Predicated region
        $region82: #{alexnet_forward.16} parent=68 // pred_check
          %p558 = pneg %p135
        $region83: #{alexnet_forward.16} parent=68 // pred_check_branch
          %560 = sbr.rel (%p558) target = $region85
        $region84: #{alexnet_forward.16} parent=68 // pred_region
          %s561 = smul.u32 3, %s19
          %s562 = smul.u32 2, %s20
        $region85: #{alexnet_forward.16} parent=68 // pred_fallthru
          _
        // Predicated region
        $region86: #{alexnet_forward.16} parent=68 // pred_check
          %p563 = pneg %p135
        $region87: #{alexnet_forward.16} parent=68 // pred_check_branch
          %565 = sbr.rel (%p563) target = $region89
        $region88: #{alexnet_forward.16} parent=68 // pred_region
          %s566 = smul.u32 3, %s19
          %s567 = smul.u32 2, %s20
          %p568 = scmp.lt.s32.totalorder %s566, 2
          %s569 = scalar_select %p568, %s566, 2
          %p570 = scmp.lt.s32.totalorder %s567, 1
          %s571 = scalar_select %p570, %s567, 1
          %s572 = smul.addr %s569, 2
          %s573 = sadd.s32 %s571, %s572
          %s574 = smul.addr %s573, 8
          %s575 = scalar_lea.vmem %s3, %s574
        $region89: #{alexnet_forward.16} parent=68 // pred_fallthru
          _
      $region69: #{alexnet_forward.16} parent=5 // pred_fallthru
        _
      %p576 = scmp.le.s32.totalorder 2, %s9
      // Predicated region
      $region90: #{alexnet_forward.16} parent=5 // pred_check
        %p577 = pneg %p576
      $region91: #{alexnet_forward.16} parent=5 // pred_check_branch
        %579 = sbr.rel (%p577) target = $region93
      $region92: #{alexnet_forward.16} parent=5 // pred_region
        %s580 = ssub.s32 %s9, 2
      $region93: #{alexnet_forward.16} parent=5 // pred_fallthru
        _
    $region6: #{alexnet_forward.16} parent=1 // loop_footer
      %s13 = sadd.s32 1, %s9
    $region7: #{alexnet_forward.16} parent=1 // loop_footer_branch
      %8 = sbr.rel target = $region3
    $region8: #{alexnet_forward.16} parent=1 // loop_exit
      _

// kernel: alexnet_forward.17
$region0: #{alexnet_forward.17}
  #allocation0 [shape = 'u32[]', space=smem, size = 0x4, offset = 0x4, fixed_abs, tag = 'smem constant byte address 0x4 - core index']
  #allocation1 [shape = 'u32[144,128]{1,0:T(1,128)}', space=vmem, size = 0x12000, scoped, tag = 'internal scratch']
  #allocation2 [shape = 'f32[24,256]{1,0:T(8,128)}', space=vmem, size = 0x6000, scoped, tag = 'scratch operand']
  %s0 = inlined_call_operand.vmem [shape: bf16[24,2304], index: 0, kind: input, shape index: {}]
  %s1 = inlined_call_operand.vmem [shape: bf16[2304,256], index: 1, kind: input, shape index: {}]
  %s2 = inlined_call_operand.vmem [shape: f32[1,256], index: 2, kind: input, shape index: {}]
  %s3 = inlined_call_operand.vmem [shape: f32[24,256], index: 3, kind: output, shape index: {}]
  %s4 = sld [smem:[#allocation0]]
  $region91: #{alexnet_forward.17} parent=0
    _
  %s6 = ssub.s32 1, %s4
  %s7 = scalar_select 0, %s6, %s4
  $region1: #{alexnet_forward.17} parent=0
    #allocation3 [shape = 'u8[24576]{0}', space=vmem, size = 0x6000, scoped, tag = 'input window, operand 0']
    loop: start=0, step=1, limit=11
    $region2: #{alexnet_forward.17} parent=1 // loop_pre_header
      _
    $region3: #{alexnet_forward.17} parent=1 // loop_header
      %s9 = sphi 0, %s13
      %p10 = scmp.ge.s32.totalorder %s9, 11
      %s16 = sphi 0, %s35
      %s17 = sphi 0, %s31
      %s18 = sphi 0, %s27
      %s19 = sphi 0, %s16
      %s20 = sphi 0, %s17
      %s21 = sphi 0, %s18
      %s22 = sphi 0, %s19
      %s23 = sphi 0, %s20
      %s24 = sphi 0, %s21
      %s40 = sphi 0, %s42
      %s43 = sphi 0, %s40
      %s44 = sphi 0, %s43
      %s60 = sphi 0, %s44
      %s68 = sphi 0, %s70
      %s71 = sphi 0, %s68
      %s72 = sphi 0, %s71
      %s88 = sphi 0, %s72
      %s94 = sphi 0, %s96
      %s97 = sphi 0, %s94
      %s98 = sphi 0, %s97
      %s114 = sphi 0, %s98
      %s122 = sphi 0, %s124
      %s125 = sphi 0, %s122
      %s126 = sphi 0, %s125
      %s142 = sphi 0, %s126
    $region4: #{alexnet_forward.17} parent=1 // loop_header_branch
      %12 = sbr.rel (%p10) target = $region8
    $region5: #{alexnet_forward.17} parent=1 // loop_body
      %s14 = ssub.s32 %s9, 1
      %s15 = ssub.s32 %s9, 2
      %s25 = sadd.s32 1, %s18
      %p26 = scmp.ge.s32.totalorder %s25, 9
      %s27 = scalar_select %p26, 0, %s25
      %s28 = sadd.s32 1, %s17
      %s29 = scalar_select %p26, %s28, %s17
      %p30 = scmp.ge.s32.totalorder %s29, 1
      %s31 = scalar_select %p30, 0, %s29
      %s32 = sadd.s32 1, %s16
      %s33 = scalar_select %p30, %s32, %s16
      %p34 = scmp.ge.s32.totalorder %s33, 1
      %s35 = scalar_select %p34, 0, %s33
      %s36 = ssub.s32 %s16, %s35
      %s37 = ssub.s32 %s18, %s27
      %s38 = sor.u32 %s36, %s37
      %p39 = scmp.eq.s32.totalorder %s38, 0
      %s41 = sadd.s32 %s40, 1
      %s42 = scalar_select %p39, %s40, %s41
      %p45 = pneg %p39
      %p46 = scmp.eq.s32.totalorder %s9, 8
      %p47 = por %p45, %p46
      %p48 = scmp.ne.s32.totalorder %s40, %s43
      %p49 = scmp.eq.s32.totalorder %s9, 0
      %p50 = por %p48, %p49
      %p51 = scmp.ne.s32.totalorder %s40, %s43
      %p52 = scmp.eq.s32.totalorder %s14, 8
      %p53 = por %p51, %p52
      %p54 = scmp.ne.s32.totalorder %s43, %s44
      %p55 = scmp.eq.s32.totalorder %s14, 0
      %p56 = por %p54, %p55
      %p57 = scmp.ne.s32.totalorder %s43, %s44
      %p58 = scmp.eq.s32.totalorder %s15, 8
      %p59 = por %p57, %p58
      %p61 = scmp.ne.s32.totalorder %s44, %s60
      %p62 = scmp.eq.s32.totalorder %s15, 0
      %p63 = por %p61, %p62
      %s64 = ssub.s32 %s18, %s27
      %s65 = ssub.s32 %s17, %s31
      %s66 = sor.u32 %s64, %s65
      %p67 = scmp.eq.s32.totalorder %s66, 0
      %s69 = sadd.s32 %s68, 1
      %s70 = scalar_select %p67, %s68, %s69
      %p73 = pneg %p67
      %p74 = scmp.eq.s32.totalorder %s9, 8
      %p75 = por %p73, %p74
      %p76 = scmp.ne.s32.totalorder %s68, %s71
      %p77 = scmp.eq.s32.totalorder %s9, 0
      %p78 = por %p76, %p77
      %p79 = scmp.ne.s32.totalorder %s68, %s71
      %p80 = scmp.eq.s32.totalorder %s14, 8
      %p81 = por %p79, %p80
      %p82 = scmp.ne.s32.totalorder %s71, %s72
      %p83 = scmp.eq.s32.totalorder %s14, 0
      %p84 = por %p82, %p83
      %p85 = scmp.ne.s32.totalorder %s71, %s72
      %p86 = scmp.eq.s32.totalorder %s15, 8
      %p87 = por %p85, %p86
      %p89 = scmp.ne.s32.totalorder %s72, %s88
      %p90 = scmp.eq.s32.totalorder %s15, 0
      %p91 = por %p89, %p90
      %s92 = ssub.s32 %s17, %s31
      %p93 = scmp.eq.s32.totalorder %s92, 0
      %s95 = sadd.s32 %s94, 1
      %s96 = scalar_select %p93, %s94, %s95
      %p99 = pneg %p93
      %p100 = scmp.eq.s32.totalorder %s9, 8
      %p101 = por %p99, %p100
      %p102 = scmp.ne.s32.totalorder %s94, %s97
      %p103 = scmp.eq.s32.totalorder %s9, 0
      %p104 = por %p102, %p103
      %p105 = scmp.ne.s32.totalorder %s94, %s97
      %p106 = scmp.eq.s32.totalorder %s14, 8
      %p107 = por %p105, %p106
      %p108 = scmp.ne.s32.totalorder %s97, %s98
      %p109 = scmp.eq.s32.totalorder %s14, 0
      %p110 = por %p108, %p109
      %p111 = scmp.ne.s32.totalorder %s97, %s98
      %p112 = scmp.eq.s32.totalorder %s15, 8
      %p113 = por %p111, %p112
      %p115 = scmp.ne.s32.totalorder %s98, %s114
      %p116 = scmp.eq.s32.totalorder %s15, 0
      %p117 = por %p115, %p116
      %s118 = ssub.s32 %s16, %s35
      %s119 = ssub.s32 %s17, %s31
      %s120 = sor.u32 %s118, %s119
      %p121 = scmp.eq.s32.totalorder %s120, 0
      %s123 = sadd.s32 %s122, 1
      %s124 = scalar_select %p121, %s122, %s123
      %p127 = pneg %p121
      %p128 = scmp.eq.s32.totalorder %s9, 8
      %p129 = por %p127, %p128
      %p130 = scmp.ne.s32.totalorder %s122, %s125
      %p131 = scmp.eq.s32.totalorder %s9, 0
      %p132 = por %p130, %p131
      %p133 = scmp.ne.s32.totalorder %s122, %s125
      %p134 = scmp.eq.s32.totalorder %s14, 8
      %p135 = por %p133, %p134
      %p136 = scmp.ne.s32.totalorder %s125, %s126
      %p137 = scmp.eq.s32.totalorder %s14, 0
      %p138 = por %p136, %p137
      %p139 = scmp.ne.s32.totalorder %s125, %s126
      %p140 = scmp.eq.s32.totalorder %s15, 8
      %p141 = por %p139, %p140
      %p143 = scmp.ne.s32.totalorder %s126, %s142
      %p144 = scmp.eq.s32.totalorder %s15, 0
      %p145 = por %p143, %p144
      %p146 = scmp.le.s32.totalorder 1, %s9
      %p147 = scmp.lt.s32.totalorder %s9, 10
      %p148 = pnand %p146, %p147
      %p149 = pneg %p148
      // Predicated region
      $region9: #{alexnet_forward.17} parent=5 // pred_check
        _
      $region10: #{alexnet_forward.17} parent=5 // pred_check_branch
        %151 = sbr.rel (%p148) target = $region12
      $region11: #{alexnet_forward.17} parent=5 // pred_region
        %s152 = ssub.s32 %s9, 1
        // Predicated region
        $region13: #{alexnet_forward.17} parent=11 // pred_check
          %p153 = pneg %p110
        $region14: #{alexnet_forward.17} parent=11 // pred_check_branch
          %155 = sbr.rel (%p153) target = $region16
        $region15: #{alexnet_forward.17} parent=11 // pred_region
          %s156 = smul.u32 2, %s20
          %p157 = scmp.lt.s32.totalorder %s156, 1
          %s158 = scalar_select %p157, %s156, 1
          %s159 = scalar_lea.vmem %s2, %s158
          %s160 = smul.u32 2, %s20
        $region16: #{alexnet_forward.17} parent=11 // pred_fallthru
          _
      $region12: #{alexnet_forward.17} parent=5 // pred_fallthru
        _
      %p161 = scmp.lt.s32.totalorder %s9, 9
      // Predicated region
      $region17: #{alexnet_forward.17} parent=5 // pred_check
        %p162 = pneg %p161
      $region18: #{alexnet_forward.17} parent=5 // pred_check_branch
        %164 = sbr.rel (%p162) target = $region20
      $region19: #{alexnet_forward.17} parent=5 // pred_region
        // Predicated region
        $region21: #{alexnet_forward.17} parent=19 // pred_check
          %p165 = pneg %p50
        $region22: #{alexnet_forward.17} parent=19 // pred_check_branch
          %167 = sbr.rel (%p165) target = $region24
        $region23: #{alexnet_forward.17} parent=19 // pred_region
          %s168 = sand.u32 %s40, 1
          %s169 = sand.u32 %s40, 1
          %s170 = smul.addr %s169, 24
          %s171 = scalar_lea.vmem [#allocation3], %s170
          %s172 = smul.u32 3, %s16
          %s173 = smul.u32 2, %s18
          %s174 = smul.addr %s172, 18
          %s175 = sadd.s32 %s173, %s174
          %s176 = smul.addr %s175, 4
          %s177 = scalar_lea.vmem %s0, %s176
          // Predicated region
          $region25: #{alexnet_forward.17} parent=23 // pred_check
            _
          $region26: #{alexnet_forward.17} parent=23 // pred_check_branch
            %179 = sbr.rel (0) target = $region28
          $region27: #{alexnet_forward.17} parent=23 // pred_region
            // Predicated region
            $region29: #{alexnet_forward.17} parent=27 // pred_check
              _
            $region30: #{alexnet_forward.17} parent=27 // pred_check_branch
              %181 = sbr.rel (0) target = $region32
            $region31: #{alexnet_forward.17} parent=27 // pred_region
              // Predicated region
              $region44: #{alexnet_forward.17} parent=31 // pred_check
                _
              $region45: #{alexnet_forward.17} parent=31 // pred_check_branch
                %200 = sbr.rel (0) target = $region47
              $region46: #{alexnet_forward.17} parent=31 // pred_region
                loop: start=0, step=1, limit=1
                $region48: #{alexnet_forward.17} parent=46 // loop_pre_header
                  _
                $region49: #{alexnet_forward.17} parent=46 // loop_header
                  %s202 = sphi 0, %s206
                  %p203 = scmp.ge.s32.totalorder %s202, 1
                  %s207 = sphi %s177, %s177
                  %s208 = sphi %s171, %s171
                $region50: #{alexnet_forward.17} parent=46 // loop_header_branch
                  %205 = sbr.rel (%p203) target = $region54
                $region51: #{alexnet_forward.17} parent=46 // loop_body
                  %v209 = vld [vmem:[%s207] sm:$0xff]
                  %210 = vst [vmem:[%s208] sm:$0xff] %v209
                  %v211 = vld [vmem:[%s207 + $0x48] sm:$0xff]
                  %212 = vst [vmem:[%s208 + $0x8] sm:$0xff] %v211
                  %v213 = vld [vmem:[%s207 + $0x90] sm:$0xff]
                  %214 = vst [vmem:[%s208 + $0x10] sm:$0xff] %v213
                $region52: #{alexnet_forward.17} parent=46 // loop_footer
                  %s206 = sadd.s32 1, %s202
                $region53: #{alexnet_forward.17} parent=46 // loop_footer_branch
                  %201 = sbr.rel target = $region49
                $region54: #{alexnet_forward.17} parent=46 // loop_exit
                  _
              $region47: #{alexnet_forward.17} parent=31 // pred_fallthru
                _
              // Predicated region
              $region55: #{alexnet_forward.17} parent=31 // pred_check
                _
              $region56: #{alexnet_forward.17} parent=31 // pred_check_branch
                %216 = sbr.rel target = $region58
              $region57: #{alexnet_forward.17} parent=31 // pred_region
                _
              $region58: #{alexnet_forward.17} parent=31 // pred_fallthru
                _
            $region32: #{alexnet_forward.17} parent=27 // pred_fallthru
              _
            // Predicated region
            $region33: #{alexnet_forward.17} parent=27 // pred_check
              _
            $region34: #{alexnet_forward.17} parent=27 // pred_check_branch
              %183 = sbr.rel target = $region36
            $region35: #{alexnet_forward.17} parent=27 // pred_region
              loop: start=0, step=1, limit=1
              $region37: #{alexnet_forward.17} parent=35 // loop_pre_header
                _
              $region38: #{alexnet_forward.17} parent=35 // loop_header
                %s186 = sphi 0, %s190
                %p187 = scmp.ge.s32.totalorder %s186, 1
                %s191 = sphi %s177, %s177
                %s192 = sphi %s171, %s171
              $region39: #{alexnet_forward.17} parent=35 // loop_header_branch
                %189 = sbr.rel (%p187) target = $region43
              $region40: #{alexnet_forward.17} parent=35 // loop_body
                %v193 = vld [vmem:[%s191] sm:$0xff]
                %194 = vst [vmem:[%s192] sm:$0xff] %v193
                %v195 = vld [vmem:[%s191 + $0x48] sm:$0xff]
                %196 = vst [vmem:[%s192 + $0x8] sm:$0xff] %v195
                %v197 = vld [vmem:[%s191 + $0x90] sm:$0xff]
                %198 = vst [vmem:[%s192 + $0x10] sm:$0xff] %v197
              $region41: #{alexnet_forward.17} parent=35 // loop_footer
                %s190 = sadd.s32 1, %s186
              $region42: #{alexnet_forward.17} parent=35 // loop_footer_branch
                %185 = sbr.rel target = $region38
              $region43: #{alexnet_forward.17} parent=35 // loop_exit
                _
            $region36: #{alexnet_forward.17} parent=27 // pred_fallthru
              _
          $region28: #{alexnet_forward.17} parent=23 // pred_fallthru
            _
          %217 = vnop
        $region24: #{alexnet_forward.17} parent=19 // pred_fallthru
          _
        // Predicated region
        $region59: #{alexnet_forward.17} parent=19 // pred_check
          %p218 = pneg %p78
        $region60: #{alexnet_forward.17} parent=19 // pred_check_branch
          %220 = sbr.rel (%p218) target = $region62
        $region61: #{alexnet_forward.17} parent=19 // pred_region
          %s221 = smul.u32 32, %s18
          %s222 = smul.u32 2, %s17
          %p223 = scmp.lt.s32.totalorder %s221, 287
          %s224 = scalar_select %p223, %s221, 287
          %p225 = scmp.lt.s32.totalorder %s222, 1
          %s226 = scalar_select %p225, %s222, 1
          %s227 = smul.addr %s224, 2
          %s228 = sadd.s32 %s226, %s227
          %s229 = smul.addr %s228, 4
          %s230 = scalar_lea.vmem %s1, %s229
          %s231 = smul.u32 32, %s18
          %s232 = smul.u32 2, %s17
        $region62: #{alexnet_forward.17} parent=19 // pred_fallthru
          _
      $region20: #{alexnet_forward.17} parent=5 // pred_fallthru
        _
      %p233 = scmp.le.s32.totalorder 1, %s9
      %p234 = scmp.lt.s32.totalorder %s9, 10
      %p235 = pnand %p233, %p234
      %p236 = pneg %p235
      // Predicated region
      $region63: #{alexnet_forward.17} parent=5 // pred_check
        _
      $region64: #{alexnet_forward.17} parent=5 // pred_check_branch
        %238 = sbr.rel (%p235) target = $region66
      $region65: #{alexnet_forward.17} parent=5 // pred_region
        %s239 = ssub.s32 %s9, 1
        %s240 = sand.u32 %s43, 1
        %s241 = sand.u32 %s43, 1
        %s242 = smul.addr %s241, 24
        %s243 = scalar_lea.vmem [#allocation3], %s242
        // Predicated region
        $region67: #{alexnet_forward.17} parent=65 // pred_check
          %p244 = pneg %p56
        $region68: #{alexnet_forward.17} parent=65 // pred_check_branch
          %246 = sbr.rel (%p244) target = $region70
        $region69: #{alexnet_forward.17} parent=65 // pred_region
          _
        $region70: #{alexnet_forward.17} parent=65 // pred_fallthru
          _
        %s247 = sand.u32 %s43, 1
        %s248 = sand.u32 %s43, 1
        %s249 = smul.addr %s248, 24
        %s250 = scalar_lea.vmem [#allocation3], %s249
        %p251 = pneg %p56
        %p252 = pneg %p53
        %s253 = smul.u32 32, %s21
        %s254 = smul.u32 2, %s20
        %p255 = scmp.lt.s32.totalorder %s253, 287
        %s256 = scalar_select %p255, %s253, 287
        %p257 = scmp.lt.s32.totalorder %s254, 1
        %s258 = scalar_select %p257, %s254, 1
        %s259 = smul.addr %s256, 2
        %s260 = sadd.s32 %s258, %s259
        %s261 = smul.addr %s260, 4
        %s262 = scalar_lea.vmem %s1, %s261
        %p263 = pneg %p84
        %p264 = pneg %p81
        %s265 = smul.u32 2, %s20
        %p266 = scmp.lt.s32.totalorder %s265, 1
        %s267 = scalar_select %p266, %s265, 1
        %s268 = scalar_lea.vmem %s2, %s267
        %p269 = pneg %p110
        %p270 = pneg %p107
        %p271 = pneg %p138
        %p272 = pneg %p135
        %s273 = smul.u32 3, %s19
        %s274 = smul.u32 2, %s20
        %p275 = scmp.lt.s32.totalorder %s273, 2
        %s276 = scalar_select %p275, %s273, 2
        %p277 = scmp.lt.s32.totalorder %s274, 1
        %s278 = scalar_select %p277, %s274, 1
        %s279 = smul.addr %s276, 2
        %s280 = sadd.s32 %s278, %s279
        %s281 = smul.addr %s280, 8
        %s282 = scalar_lea.vmem %s3, %s281
        %s283 = smul.u32 3, %s19
        %s284 = smul.u32 2, %s21
        %s285 = smul.u32 32, %s21
        %s286 = smul.u32 2, %s20
        %p287 = scmp.lt.s32.totalorder %s285, 287
        %s288 = scalar_select %p287, %s285, 287
        %p289 = scmp.lt.s32.totalorder %s286, 1
        %s290 = scalar_select %p289, %s286, 1
        %s291 = smul.addr %s288, 2
        %s292 = sadd.s32 %s290, %s291
        %s293 = smul.addr %s292, 4
        %s294 = scalar_lea.vmem %s1, %s293
        %s295 = smul.u32 32, %s21
        %s296 = smul.u32 2, %s20
        %s297 = smul.u32 2, %s20
        %p298 = scmp.lt.s32.totalorder %s297, 1
        %s299 = scalar_select %p298, %s297, 1
        %s300 = scalar_lea.vmem %s2, %s299
        %s301 = smul.u32 2, %s20
        %s302 = smul.u32 3, %s19
        %s303 = smul.u32 2, %s20
        %p304 = scmp.lt.s32.totalorder %s302, 2
        %s305 = scalar_select %p304, %s302, 2
        %p306 = scmp.lt.s32.totalorder %s303, 1
        %s307 = scalar_select %p306, %s303, 1
        %s308 = smul.addr %s305, 2
        %s309 = sadd.s32 %s307, %s308
        %s310 = smul.addr %s309, 8
        %s311 = scalar_lea.vmem %s3, %s310
        %s312 = smul.u32 3, %s19
        %s313 = smul.u32 2, %s20
        %p314 = scmp.eq.s32.totalorder %s21, 0
        // Predicated region
        $region71: #{alexnet_forward.17} parent=65 // pred_check
          %p315 = pneg %p314
        $region72: #{alexnet_forward.17} parent=65 // pred_check_branch
          %317 = sbr.rel (%p315) target = $region74
        $region73: #{alexnet_forward.17} parent=65 // pred_region
          %318 = vst [vmem:[#allocation2] sm:$0xff] 0.0
          %319 = vst [vmem:[#allocation2 + $0x8] sm:$0xff] 0.0
          %320 = vst [vmem:[#allocation2 + $0x10] sm:$0xff] 0.0
          %321 = vst [vmem:[#allocation2 + $0x18] sm:$0xff] 0.0
          %322 = vst [vmem:[#allocation2 + $0x20] sm:$0xff] 0.0
          %323 = vst [vmem:[#allocation2 + $0x28] sm:$0xff] 0.0
        $region74: #{alexnet_forward.17} parent=65 // pred_fallthru
          _
        %v324 = vld [vmem:[#allocation2] sm:$0xff]
        %v325 = vld [vmem:[#allocation2 + $0x8] sm:$0xff]
        %v326 = vld [vmem:[#allocation2 + $0x10] sm:$0xff]
        %v327 = vld [vmem:[#allocation2 + $0x18] sm:$0xff]
        %v328 = vld [vmem:[#allocation2 + $0x20] sm:$0xff]
        %v329 = vld [vmem:[#allocation2 + $0x28] sm:$0xff]
        %v330 = vld [vmem:[%s243] sm:$0xff]
        %v331 = vld [vmem:[%s243 + $0x8] sm:$0xff]
        %v332 = vld [vmem:[%s243 + $0x10] sm:$0xff]
        %v333 = vld [vmem:[%s294] sm:$0xff]
        %v334 = vld [vmem:[%s294 + $0x8] sm:$0xff]
        %v335 = vld [vmem:[%s294 + $0x10] sm:$0xff]
        %v336 = vld [vmem:[%s294 + $0x18] sm:$0xff]
        %v337 = vld [vmem:[%s294 + $0x20] sm:$0xff]
        %v338 = vld [vmem:[%s294 + $0x28] sm:$0xff]
        %v339 = vld [vmem:[%s294 + $0x30] sm:$0xff]
        %v340 = vld [vmem:[%s294 + $0x38] sm:$0xff]
        %v341 = vld [vmem:[%s294 + $0x40] sm:$0xff]
        %v342 = vld [vmem:[%s294 + $0x48] sm:$0xff]
        %v343 = vld [vmem:[%s294 + $0x50] sm:$0xff]
        %v344 = vld [vmem:[%s294 + $0x58] sm:$0xff]
        %v345 = vld [vmem:[%s294 + $0x60] sm:$0xff]
        %v346 = vld [vmem:[%s294 + $0x68] sm:$0xff]
        %v347 = vld [vmem:[%s294 + $0x70] sm:$0xff]
        %v348 = vld [vmem:[%s294 + $0x78] sm:$0xff]
        %v349 = vld [vmem:[%s294 + $0x80] sm:$0xff]
        %v350 = vld [vmem:[%s294 + $0x88] sm:$0xff]
        %v351 = vld [vmem:[%s294 + $0x90] sm:$0xff]
        %v352 = vld [vmem:[%s294 + $0x98] sm:$0xff]
        %v353 = vld [vmem:[%s294 + $0xa0] sm:$0xff]
        %v354 = vld [vmem:[%s294 + $0xa8] sm:$0xff]
        %v355 = vld [vmem:[%s294 + $0xb0] sm:$0xff]
        %v356 = vld [vmem:[%s294 + $0xb8] sm:$0xff]
        %v357 = vld [vmem:[%s294 + $0xc0] sm:$0xff]
        %v358 = vld [vmem:[%s294 + $0xc8] sm:$0xff]
        %v359 = vld [vmem:[%s294 + $0xd0] sm:$0xff]
        %v360 = vld [vmem:[%s294 + $0xd8] sm:$0xff]
        %v361 = vld [vmem:[%s294 + $0xe0] sm:$0xff]
        %v362 = vld [vmem:[%s294 + $0xe8] sm:$0xff]
        %v363 = vld [vmem:[%s294 + $0xf0] sm:$0xff]
        %v364 = vld [vmem:[%s294 + $0xf8] sm:$0xff]
        %v368 = vunpack.c.l.b16 %v330
        %v369 = vunpack.c.h.b16 %v330
        %v370 = vunpack.c.l.b16 %v331
        %v371 = vunpack.c.h.b16 %v331
        %v372 = vunpack.c.l.b16 %v332
        %v373 = vunpack.c.h.b16 %v332
        %v374 = vpack.c.b16 %v370, %v368
        %v375 = vpack.c.b16 %v371, %v369
        %v376 = vpack.c.b16 %v372, %v372
        %v377 = vpack.c.b16 %v373, %v373
        %v414 = vunpack.c.l.b16 %v333
        %v415 = vunpack.c.h.b16 %v333
        %v416 = vunpack.c.l.b16 %v334
        %v417 = vunpack.c.h.b16 %v334
        %v418 = vunpack.c.l.b16 %v335
        %v419 = vunpack.c.h.b16 %v335
        %v420 = vunpack.c.l.b16 %v336
        %v421 = vunpack.c.h.b16 %v336
        %v422 = vunpack.c.l.b16 %v337
        %v423 = vunpack.c.h.b16 %v337
        %v424 = vunpack.c.l.b16 %v338
        %v425 = vunpack.c.h.b16 %v338
        %v426 = vunpack.c.l.b16 %v339
        %v427 = vunpack.c.h.b16 %v339
        %v428 = vunpack.c.l.b16 %v340
        %v429 = vunpack.c.h.b16 %v340
        %v430 = vunpack.c.l.b16 %v341
        %v431 = vunpack.c.h.b16 %v341
        %v432 = vunpack.c.l.b16 %v342
        %v433 = vunpack.c.h.b16 %v342
        %v434 = vunpack.c.l.b16 %v343
        %v435 = vunpack.c.h.b16 %v343
        %v436 = vunpack.c.l.b16 %v344
        %v437 = vunpack.c.h.b16 %v344
        %v438 = vunpack.c.l.b16 %v345
        %v439 = vunpack.c.h.b16 %v345
        %v440 = vunpack.c.l.b16 %v346
        %v441 = vunpack.c.h.b16 %v346
        %v442 = vunpack.c.l.b16 %v347
        %v443 = vunpack.c.h.b16 %v347
        %v444 = vunpack.c.l.b16 %v348
        %v445 = vunpack.c.h.b16 %v348
        %v446 = vunpack.c.l.b16 %v349
        %v447 = vunpack.c.h.b16 %v349
        %v448 = vunpack.c.l.b16 %v350
        %v449 = vunpack.c.h.b16 %v350
        %v450 = vunpack.c.l.b16 %v351
        %v451 = vunpack.c.h.b16 %v351
        %v452 = vunpack.c.l.b16 %v352
        %v453 = vunpack.c.h.b16 %v352
        %v454 = vunpack.c.l.b16 %v353
        %v455 = vunpack.c.h.b16 %v353
        %v456 = vunpack.c.l.b16 %v354
        %v457 = vunpack.c.h.b16 %v354
        %v458 = vunpack.c.l.b16 %v355
        %v459 = vunpack.c.h.b16 %v355
        %v460 = vunpack.c.l.b16 %v356
        %v461 = vunpack.c.h.b16 %v356
        %v462 = vunpack.c.l.b16 %v357
        %v463 = vunpack.c.h.b16 %v357
        %v464 = vunpack.c.l.b16 %v358
        %v465 = vunpack.c.h.b16 %v358
        %v466 = vunpack.c.l.b16 %v359
        %v467 = vunpack.c.h.b16 %v359
        %v468 = vunpack.c.l.b16 %v360
        %v469 = vunpack.c.h.b16 %v360
        %v470 = vunpack.c.l.b16 %v361
        %v471 = vunpack.c.h.b16 %v361
        %v472 = vunpack.c.l.b16 %v362
        %v473 = vunpack.c.h.b16 %v362
        %v474 = vunpack.c.l.b16 %v363
        %v475 = vunpack.c.h.b16 %v363
        %v476 = vunpack.c.l.b16 %v364
        %v477 = vunpack.c.h.b16 %v364
        %v478 = vpack.c.b16 %v416, %v414
        %v479 = vpack.c.b16 %v417, %v415
        %v480 = vpack.c.b16 %v420, %v418
        %v481 = vpack.c.b16 %v421, %v419
        %v482 = vpack.c.b16 %v424, %v422
        %v483 = vpack.c.b16 %v425, %v423
        %v484 = vpack.c.b16 %v428, %v426
        %v485 = vpack.c.b16 %v429, %v427
        %v486 = vpack.c.b16 %v432, %v430
        %v487 = vpack.c.b16 %v433, %v431
        %v488 = vpack.c.b16 %v436, %v434
        %v489 = vpack.c.b16 %v437, %v435
        %v490 = vpack.c.b16 %v440, %v438
        %v491 = vpack.c.b16 %v441, %v439
        %v492 = vpack.c.b16 %v444, %v442
        %v493 = vpack.c.b16 %v445, %v443
        %v494 = vpack.c.b16 %v448, %v446
        %v495 = vpack.c.b16 %v449, %v447
        %v496 = vpack.c.b16 %v452, %v450
        %v497 = vpack.c.b16 %v453, %v451
        %v498 = vpack.c.b16 %v456, %v454
        %v499 = vpack.c.b16 %v457, %v455
        %v500 = vpack.c.b16 %v460, %v458
        %v501 = vpack.c.b16 %v461, %v459
        %v502 = vpack.c.b16 %v464, %v462
        %v503 = vpack.c.b16 %v465, %v463
        %v504 = vpack.c.b16 %v468, %v466
        %v505 = vpack.c.b16 %v469, %v467
        %v506 = vpack.c.b16 %v472, %v470
        %v507 = vpack.c.b16 %v473, %v471
        %v508 = vpack.c.b16 %v476, %v474
        %v509 = vpack.c.b16 %v477, %v475
        %542 = vmatprep.subr.bf16.mxu0 %v479
        %543 = vmatpush1.bf16.msra.mxu0 %v478
        %544 = vmatprep.subr.bf16.mxu0 %v481
        %545 = vmatpush1.bf16.msra.mxu0 %v480
        %546 = vmatprep.subr.bf16.mxu0 %v483
        %547 = vmatpush1.bf16.msra.mxu0 %v482
        %548 = vmatprep.subr.bf16.mxu0 %v485
        %549 = vmatpush1.bf16.msra.mxu0 %v484
        %550 = vmatprep.subr.bf16.mxu0 %v487
        %551 = vmatpush1.bf16.msra.mxu0 %v486
        %552 = vmatprep.subr.bf16.mxu0 %v489
        %553 = vmatpush1.bf16.msra.mxu0 %v488
        %554 = vmatprep.subr.bf16.mxu0 %v491
        %555 = vmatpush1.bf16.msra.mxu0 %v490
        %556 = vmatprep.subr.bf16.mxu0 %v493
        %557 = vmatpush1.bf16.msra.mxu0 %v492
        %558 = vmatprep.subr.bf16.mxu0 %v495
        %559 = vmatpush1.bf16.msra.mxu0 %v494
        %560 = vmatprep.subr.bf16.mxu0 %v497
        %561 = vmatpush1.bf16.msra.mxu0 %v496
        %562 = vmatprep.subr.bf16.mxu0 %v499
        %563 = vmatpush1.bf16.msra.mxu0 %v498
        %564 = vmatprep.subr.bf16.mxu0 %v501
        %565 = vmatpush1.bf16.msra.mxu0 %v500
        %566 = vmatprep.subr.bf16.mxu0 %v503
        %567 = vmatpush1.bf16.msra.mxu0 %v502
        %568 = vmatprep.subr.bf16.mxu0 %v505
        %569 = vmatpush1.bf16.msra.mxu0 %v504
        %570 = vmatprep.subr.bf16.mxu0 %v507
        %571 = vmatpush1.bf16.msra.mxu0 %v506
        %572 = vmatprep.subr.bf16.mxu0 %v509
        %573 = vmatpush1.bf16.msra.mxu0 %v508
        %574 = vmatprep.mubr.bf16.mxu0 %v375
        %575 = vmatmul.mubr.bf16.gmra.mrb[0].mxu0 %v374
        %v576 = vpop.f32.mrb[0].mxu0
        %v577 = vadd.f32 0.0, %v576
        %v578 = vpop.f32.mrb[0].mxu0
        %v579 = vadd.f32 0.0, %v578
        %v580 = vpop.f32.mrb[0].mxu0
        %v581 = vadd.f32 0.0, %v580
        %v582 = vpop.f32.mrb[0].mxu0
        %v583 = vadd.f32 0.0, %v582
        %584 = vmatprep.mubr.bf16.mxu0 %v377
        %585 = vmatmul.mubr.bf16.gmra.mrb[0].mxu0 %v376
        %v586 = vpop.f32.mrb[0].mxu0
        %v587 = vadd.f32 0.0, %v586
        %v588 = vpop.f32.mrb[0].mxu0
        %v589 = vadd.f32 0.0, %v588
        %v590 = vpop.f32.mrb[0].mxu0
        %v591 = vpop.f32.mrb[0].mxu0
        %592 = vdwg.mxu0
        %v593 = vadd.f32 %v324, %v577
        %v594 = vadd.f32 %v325, %v579
        %v595 = vadd.f32 %v326, %v581
        %v596 = vadd.f32 %v327, %v583
        %v597 = vadd.f32 %v328, %v587
        %v598 = vadd.f32 %v329, %v589
        %599 = vst [vmem:[#allocation2] sm:$0xff] %v593
        %600 = vst [vmem:[#allocation2 + $0x8] sm:$0xff] %v594
        %601 = vst [vmem:[#allocation2 + $0x10] sm:$0xff] %v595
        %602 = vst [vmem:[#allocation2 + $0x18] sm:$0xff] %v596
        %603 = vst [vmem:[#allocation2 + $0x20] sm:$0xff] %v597
        %604 = vst [vmem:[#allocation2 + $0x28] sm:$0xff] %v598
        %p605 = scmp.eq.s32.totalorder %s21, 8
        // Predicated region
        $region75: #{alexnet_forward.17} parent=65 // pred_check
          %p606 = pneg %p605
        $region76: #{alexnet_forward.17} parent=65 // pred_check_branch
          %608 = sbr.rel (%p606) target = $region78
        $region77: #{alexnet_forward.17} parent=65 // pred_region
          %v609 = vld [vmem:[#allocation2] sm:$0xff]
          %v610 = vld [vmem:[#allocation2 + $0x8] sm:$0xff]
          %v611 = vld [vmem:[#allocation2 + $0x10] sm:$0xff]
          %v612 = vld [vmem:[#allocation2 + $0x18] sm:$0xff]
          %v613 = vld [vmem:[#allocation2 + $0x20] sm:$0xff]
          %v614 = vld [vmem:[#allocation2 + $0x28] sm:$0xff]
          %v615 = vld [vmem:[%s300] sm:$0x3]
          %v617 = vlaneseq
          %v618 = vshrl.u32 %v617, 7
          %v619 = vsub.s32 0, %v618
          %v620 = vrot.slane %v615, %v619
          %v621 = vlaneseq
          %v622 = vshrl.u32 %v621, 7
          %v623 = vsub.s32 1, %v622
          %v624 = vrot.slane %v615, %v623
          %v627 = vadd.f32 %v609, %v620
          %v628 = vadd.f32 %v610, %v624
          %v629 = vadd.f32 %v611, %v620
          %v630 = vadd.f32 %v612, %v624
          %v631 = vadd.f32 %v613, %v620
          %v632 = vadd.f32 %v614, %v624
          %v633 = vmax.f32 %v627, 0.0
          %v634 = vmax.f32 %v628, 0.0
          %v635 = vmax.f32 %v629, 0.0
          %v636 = vmax.f32 %v630, 0.0
          %v637 = vmax.f32 %v631, 0.0
          %v638 = vmax.f32 %v632, 0.0
          %639 = vst [vmem:[%s311] sm:$0xff] %v633
          %640 = vst [vmem:[%s311 + $0x8] sm:$0xff] %v634
          %641 = vst [vmem:[%s311 + $0x10] sm:$0xff] %v635
          %642 = vst [vmem:[%s311 + $0x18] sm:$0xff] %v636
          %643 = vst [vmem:[%s311 + $0x20] sm:$0xff] %v637
          %644 = vst [vmem:[%s311 + $0x28] sm:$0xff] %v638
        $region78: #{alexnet_forward.17} parent=65 // pred_fallthru
          _
        %s645 = smul.u32 3, %s19
        %s646 = smul.u32 2, %s20
        %p647 = scmp.lt.s32.totalorder %s645, 2
        %s648 = scalar_select %p647, %s645, 2
        %p649 = scmp.lt.s32.totalorder %s646, 1
        %s650 = scalar_select %p649, %s646, 1
        %s651 = smul.addr %s648, 2
        %s652 = sadd.s32 %s650, %s651
        %s653 = smul.addr %s652, 8
        %s654 = scalar_lea.vmem %s3, %s653
        // Predicated region
        $region79: #{alexnet_forward.17} parent=65 // pred_check
          %p655 = pneg %p135
        $region80: #{alexnet_forward.17} parent=65 // pred_check_branch
          %657 = sbr.rel (%p655) target = $region82
        $region81: #{alexnet_forward.17} parent=65 // pred_region
          %s658 = smul.u32 3, %s19
          %s659 = smul.u32 2, %s20
        $region82: #{alexnet_forward.17} parent=65 // pred_fallthru
          _
        // Predicated region
        $region83: #{alexnet_forward.17} parent=65 // pred_check
          %p660 = pneg %p135
        $region84: #{alexnet_forward.17} parent=65 // pred_check_branch
          %662 = sbr.rel (%p660) target = $region86
        $region85: #{alexnet_forward.17} parent=65 // pred_region
          %s663 = smul.u32 3, %s19
          %s664 = smul.u32 2, %s20
          %p665 = scmp.lt.s32.totalorder %s663, 2
          %s666 = scalar_select %p665, %s663, 2
          %p667 = scmp.lt.s32.totalorder %s664, 1
          %s668 = scalar_select %p667, %s664, 1
          %s669 = smul.addr %s666, 2
          %s670 = sadd.s32 %s668, %s669
          %s671 = smul.addr %s670, 8
          %s672 = scalar_lea.vmem %s3, %s671
        $region86: #{alexnet_forward.17} parent=65 // pred_fallthru
          _
      $region66: #{alexnet_forward.17} parent=5 // pred_fallthru
        _
      %p673 = scmp.le.s32.totalorder 2, %s9
      // Predicated region
      $region87: #{alexnet_forward.17} parent=5 // pred_check
        %p674 = pneg %p673
      $region88: #{alexnet_forward.17} parent=5 // pred_check_branch
        %676 = sbr.rel (%p674) target = $region90
      $region89: #{alexnet_forward.17} parent=5 // pred_region
        %s677 = ssub.s32 %s9, 2
      $region90: #{alexnet_forward.17} parent=5 // pred_fallthru
        _
    $region6: #{alexnet_forward.17} parent=1 // loop_footer
      %s13 = sadd.s32 1, %s9
    $region7: #{alexnet_forward.17} parent=1 // loop_footer_branch
      %8 = sbr.rel target = $region3
    $region8: #{alexnet_forward.17} parent=1 // loop_exit
      _

</llo_original>
